<compile_context>
chip_gen: v5e
topology: v5e:2x2
jax: 0.10.0
libtpu: 0.0.40
codegen_flags: <defaults>
</compile_context>

<pallas_src>
import jax
import jax.numpy as jnp
from jax import lax
from jax.experimental import pallas as pl
from jax.experimental.pallas import tpu as pltpu

EPS = 1e-5  # PyTorch InstanceNorm2d default (affine=False, biased variance)


# ------------------------------ kernel helpers ------------------------------ #

def _reflect_pad_into(pad_ref, img):
    """Write ReflectionPad2d(1) of img (H, W, C) into pad_ref (H+2, W+2, C)."""
    H, W, _ = img.shape
    pad_ref[1:H + 1, 1:W + 1, :] = img                          # interior
    pad_ref[0:1, 1:W + 1, :] = img[1:2, :, :]                   # top    <- row 1
    pad_ref[H + 1:H + 2, 1:W + 1, :] = img[H - 2:H - 1, :, :]   # bottom <- row H-2
    pad_ref[:, 0:1, :] = pad_ref[:, 2:3, :]                     # left col  (incl. corners)
    pad_ref[:, W + 1:W + 2, :] = pad_ref[:, W - 1:W, :]         # right col (incl. corners)


def _conv3x3_from_pad(pad_ref, w_ref, H, W):
    """3x3 'valid' conv on the padded (H+2, W+2, C_in) scratch.

    9 shifted-window matmuls: (H*W, C_in) @ (C_in, C_out), f32 accumulation.
    Output (H*W, C_out) with C_out on lanes.
    """
    C_in = pad_ref.shape[-1]
    C_out = w_ref.shape[-1]
    acc = jnp.zeros((H * W, C_out), jnp.float32)
    for dy in range(3):
        for dx in range(3):
            slab = pad_ref[dy:dy + H, dx:dx + W, :].reshape(H * W, C_in)
            acc = acc + jnp.dot(slab, w_ref[dy * 3 + dx],
                                preferred_element_type=jnp.float32)
    return acc


def _instance_norm(y):
    # y: (H*W, C) f32; per-channel mean / biased variance over all spatial positions.
    m = jnp.mean(y, axis=0, keepdims=True)
    c = y - m
    v = jnp.mean(c * c, axis=0, keepdims=True)
    return c * lax.rsqrt(v + EPS)


# --------------------------------- kernel ----------------------------------- #

def _resblock_kernel(x_ref, w1_ref, w2_ref, o_ref, pad_ref):
    # x_ref/o_ref: (1, H, W, C)   w*_ref: (9, C_in, C_out)
    # pad_ref: VMEM scratch (H+2, W+2, C), reused by both conv stages.
    _, H, W, C = x_ref.shape
    cdt = pad_ref.dtype                              # MXU input dtype (f32 or bf16)

    x = x_ref[0]                                     # (H, W, C)

    # ---- stage 1: reflect-pad -> conv3x3 -> instance norm -> ReLU
    _reflect_pad_into(pad_ref, x.astype(cdt))
    h = jnp.maximum(_instance_norm(_conv3x3_from_pad(pad_ref, w1_ref, H, W)), 0.0)

    # ---- stage 2: reflect-pad the VMEM-resident intermediate (no HBM round trip)
    _reflect_pad_into(pad_ref, h.reshape(H, W, C).astype(cdt))
    y2 = _instance_norm(_conv3x3_from_pad(pad_ref, w2_ref, H, W))

    # ---- residual add, store
    out = x.reshape(H * W, C).astype(jnp.float32) + y2
    o_ref[0] = out.reshape(H, W, C).astype(o_ref.dtype)


# --------------------------------- wrapper ----------------------------------- #

def resblock_pallas(x_nchw, w1_oihw, b1, w2_oihw, b2, *, matmul_dtype=None):
    """x + block(x); x is NCHW, weights are PyTorch OIHW.

    b1/b2 are accepted for API parity with nn.Conv2d but intentionally unused:
    a per-channel bias before affine=False InstanceNorm2d is exactly cancelled by
    the mean subtraction.  matmul_dtype: dtype fed to the MXU (e.g. jnp.bfloat16
    on v6e/v7x); all norm / ReLU / residual math stays f32.
    """
    del b1, b2
    N, C, H, W = x_nchw.shape
    if matmul_dtype is None:
        matmul_dtype = x_nchw.dtype

    # NCHW -> NHWC (XLA transpose in HBM); OIHW -> (tap = ky*3+kx, C_in, C_out).
    x_nhwc = jnp.transpose(x_nchw, (0, 2, 3, 1))
    w1t = jnp.transpose(w1_oihw, (2, 3, 1, 0)).reshape(9, C, C).astype(matmul_dtype)
    w2t = jnp.transpose(w2_oihw, (2, 3, 1, 0)).reshape(9, C, C).astype(matmul_dtype)

    out_nhwc = pl.pallas_call(
        _resblock_kernel,
        out_shape=jax.ShapeDtypeStruct((N, H, W, C), x_nchw.dtype),
        grid=(N,),
        in_specs=[
            pl.BlockSpec((1, H, W, C), lambda n: (n, 0, 0, 0)),  # one image per step
            pl.BlockSpec((9, C, C), lambda n: (0, 0, 0)),        # conv1 taps (resident)
            pl.BlockSpec((9, C, C), lambda n: (0, 0, 0)),        # conv2 taps (resident)
        ],
        out_specs=pl.BlockSpec((1, H, W, C), lambda n: (n, 0, 0, 0)),
        scratch_shapes=[pltpu.VMEM((H + 2, W + 2, C), matmul_dtype)],
        compiler_params=pltpu.CompilerParams(
            dimension_semantics=("parallel",)),
    )(x_nhwc, w1t, w2t)

    return jnp.transpose(out_nhwc, (0, 3, 1, 2))                 # back to NCHW


# ------------------------- pure-JAX reference (NCHW) ------------------------- #

def _resblock_ref(x, w1, b1, w2, b2):
    def conv(inp, w, b):
        xp = jnp.pad(inp, ((0, 0), (0, 0), (1, 1), (1, 1)), mode="reflect")
        y = lax.conv_general_dilated(xp, w, (1, 1), "VALID",
                                     dimension_numbers=("NCHW", "OIHW", "NCHW"))
        return y + b[None, :, None, None]

    def inorm(y):
        m = jnp.mean(y, axis=(2, 3), keepdims=True)
        v = jnp.mean((y - m) ** 2, axis=(2, 3), keepdims=True)
        return (y - m) / jnp.sqrt(v + EPS)

    h = jax.nn.relu(inorm(conv(x, w1, b1)))
    return x + inorm(conv(h, w2, b2))


# ----------------------------------- main ------------------------------------ #

if __name__ == "__main__":
    N, C, H, W = 2, 4, 16, 16
    key = jax.random.PRNGKey(0)
    kx, k1, k2, k3, k4 = jax.random.split(key, 5)

    x = jax.random.normal(kx, (N, C, H, W), jnp.float32)
    w1 = jax.random.normal(k1, (C, C, 3, 3), jnp.float32) * 0.2
    b1 = jax.random.normal(k2, (C,), jnp.float32) * 0.1
    w2 = jax.random.normal(k3, (C, C, 3, 3), jnp.float32) * 0.2
    b2 = jax.random.normal(k4, (C,), jnp.float32) * 0.1

    ref = jax.block_until_ready(_resblock_ref(x, w1, b1, w2, b2))

    # f32 path (strict check)
    out = jax.block_until_ready(resblock_pallas(x, w1, b1, w2, b2))
    assert out.shape == (N, C, H, W) and out.dtype == jnp.float32
    err = float(jnp.max(jnp.abs(out - ref)))
    assert err < 2e-4, f"f32 path max|err|={err}"

    # bf16-MXU path: matmuls in bf16, norm/ReLU/residual in f32.
    out_bf16 = jax.block_until_ready(
        resblock_pallas(x, w1, b1, w2, b2, matmul_dtype=jnp.bfloat16))
    err_bf16 = float(jnp.max(jnp.abs(out_bf16 - ref)))
    assert err_bf16 < 0.25, f"bf16-MXU path max|err|={err_bf16}"

    print("KERNEL_OK")
</pallas_src>

<mosaic_0001>
module attributes {stable_mosaic.version = 11 : i64} {
  func.func @_resblock_kernel(%arg0: i32, %arg1: memref<1x16x16x4xf32, #tpu.memory_space<vmem>>, %arg2: memref<9x4x4xf32, #tpu.memory_space<vmem>>, %arg3: memref<9x4x4xf32, #tpu.memory_space<vmem>>, %arg4: memref<1x16x16x4xf32, #tpu.memory_space<vmem>>, %arg5: memref<18x18x4xf32, #tpu.memory_space<vmem>>) attributes {dimension_semantics = [#tpu.dimension_semantics<parallel>], iteration_bounds = array<i64: 2>, scalar_prefetch = 0 : i64, scratch_operands = 1 : i64, tpu.core_type = #tpu.core_type<tc>, window_params = [{transform_indices = @transform_0, window_bounds = array<i64: 1, 16, 16, 4>}, {pipeline_mode = #tpu.pipeline_mode<synchronous>, transform_indices = @transform_1, window_bounds = array<i64: 9, 4, 4>}, {pipeline_mode = #tpu.pipeline_mode<synchronous>, transform_indices = @transform_2, window_bounds = array<i64: 9, 4, 4>}, {transform_indices = @transform_3, window_bounds = array<i64: 1, 16, 16, 4>}]} {
    %c0 = arith.constant 0 : index
    %c0_0 = arith.constant 0 : index
    %c0_1 = arith.constant 0 : index
    %c0_2 = arith.constant 0 : index
    %0 = vector.load %arg1[%c0, %c0_0, %c0_1, %c0_2] : memref<1x16x16x4xf32, #tpu.memory_space<vmem>>, vector<1x16x16x4xf32>
    %1 = vector.shape_cast %0 : vector<1x16x16x4xf32> to vector<16x16x4xf32>
    %c1 = arith.constant 1 : index
    %c1_3 = arith.constant 1 : index
    %c0_4 = arith.constant 0 : index
    %2 = vector.load %arg5[%c1, %c1_3, %c0_4] : memref<18x18x4xf32, #tpu.memory_space<vmem>>, vector<16x16x4xf32>
    tpu.vector_store %arg5[%c1, %c1_3, %c0_4], %1 {strides = array<i32>} : memref<18x18x4xf32, #tpu.memory_space<vmem>>, vector<16x16x4xf32>,
    %3 = vector.extract_strided_slice %1 {offsets = [1, 0, 0], sizes = [1, 16, 4], strides = [1, 1, 1]} : vector<16x16x4xf32> to vector<1x16x4xf32>
    %c0_5 = arith.constant 0 : index
    %c1_6 = arith.constant 1 : index
    %c0_7 = arith.constant 0 : index
    %4 = vector.load %arg5[%c0_5, %c1_6, %c0_7] : memref<18x18x4xf32, #tpu.memory_space<vmem>>, vector<1x16x4xf32>
    tpu.vector_store %arg5[%c0_5, %c1_6, %c0_7], %3 {strides = array<i32>} : memref<18x18x4xf32, #tpu.memory_space<vmem>>, vector<1x16x4xf32>,
    %5 = vector.extract_strided_slice %1 {offsets = [14, 0, 0], sizes = [1, 16, 4], strides = [1, 1, 1]} : vector<16x16x4xf32> to vector<1x16x4xf32>
    %c17 = arith.constant 17 : index
    %c1_8 = arith.constant 1 : index
    %c0_9 = arith.constant 0 : index
    %6 = vector.load %arg5[%c17, %c1_8, %c0_9] : memref<18x18x4xf32, #tpu.memory_space<vmem>>, vector<1x16x4xf32>
    tpu.vector_store %arg5[%c17, %c1_8, %c0_9], %5 {strides = array<i32>} : memref<18x18x4xf32, #tpu.memory_space<vmem>>, vector<1x16x4xf32>,
    %c0_10 = arith.constant 0 : index
    %c2 = arith.constant 2 : index
    %c0_11 = arith.constant 0 : index
    %7 = vector.load %arg5[%c0_10, %c2, %c0_11] : memref<18x18x4xf32, #tpu.memory_space<vmem>>, vector<18x1x4xf32>
    %c0_12 = arith.constant 0 : index
    %c0_13 = arith.constant 0 : index
    %c0_14 = arith.constant 0 : index
    %8 = vector.load %arg5[%c0_12, %c0_13, %c0_14] : memref<18x18x4xf32, #tpu.memory_space<vmem>>, vector<18x1x4xf32>
    tpu.vector_store %arg5[%c0_12, %c0_13, %c0_14], %7 {strides = array<i32>} : memref<18x18x4xf32, #tpu.memory_space<vmem>>, vector<18x1x4xf32>,
    %c0_15 = arith.constant 0 : index
    %c15 = arith.constant 15 : index
    %c0_16 = arith.constant 0 : index
    %9 = vector.load %arg5[%c0_15, %c15, %c0_16] : memref<18x18x4xf32, #tpu.memory_space<vmem>>, vector<18x1x4xf32>
    %c0_17 = arith.constant 0 : index
    %c17_18 = arith.constant 17 : index
    %c0_19 = arith.constant 0 : index
    %10 = vector.load %arg5[%c0_17, %c17_18, %c0_19] : memref<18x18x4xf32, #tpu.memory_space<vmem>>, vector<18x1x4xf32>
    tpu.vector_store %arg5[%c0_17, %c17_18, %c0_19], %9 {strides = array<i32>} : memref<18x18x4xf32, #tpu.memory_space<vmem>>, vector<18x1x4xf32>,
    %cst = arith.constant 0.000000e+00 : f32
    %11 = vector.broadcast %cst : f32 to vector<256x4xf32>
    %c0_20 = arith.constant 0 : index
    %c0_21 = arith.constant 0 : index
    %c0_22 = arith.constant 0 : index
    %12 = vector.load %arg5[%c0_20, %c0_21, %c0_22] : memref<18x18x4xf32, #tpu.memory_space<vmem>>, vector<16x16x4xf32>
    %13 = vector.shape_cast %12 : vector<16x16x4xf32> to vector<256x4xf32>
    %c0_23 = arith.constant 0 : index
    %c0_24 = arith.constant 0 : index
    %c0_25 = arith.constant 0 : index
    %14 = vector.load %arg2[%c0_23, %c0_24, %c0_25] : memref<9x4x4xf32, #tpu.memory_space<vmem>>, vector<1x4x4xf32>
    %15 = vector.shape_cast %14 : vector<1x4x4xf32> to vector<4x4xf32>
    %cst_26 = arith.constant dense<0.000000e+00> : vector<256x4xf32>
    %16 = tpu.matmul %13, %15, %cst_26 {dimension_numbers = #tpu.dot_dimension_numbers<[1], [0], [0], [1], [0, 0, 1, 1], [], []>} : vector<256x4xf32>, vector<4x4xf32>, vector<256x4xf32> -> vector<256x4xf32>
    %17 = arith.addf %11, %16 : vector<256x4xf32>
    %c0_27 = arith.constant 0 : index
    %c1_28 = arith.constant 1 : index
    %c0_29 = arith.constant 0 : index
    %18 = vector.load %arg5[%c0_27, %c1_28, %c0_29] : memref<18x18x4xf32, #tpu.memory_space<vmem>>, vector<16x16x4xf32>
    %19 = vector.shape_cast %18 : vector<16x16x4xf32> to vector<256x4xf32>
    %c1_30 = arith.constant 1 : index
    %c0_31 = arith.constant 0 : index
    %c0_32 = arith.constant 0 : index
    %20 = vector.load %arg2[%c1_30, %c0_31, %c0_32] : memref<9x4x4xf32, #tpu.memory_space<vmem>>, vector<1x4x4xf32>
    %21 = vector.shape_cast %20 : vector<1x4x4xf32> to vector<4x4xf32>
    %cst_33 = arith.constant dense<0.000000e+00> : vector<256x4xf32>
    %22 = tpu.matmul %19, %21, %cst_33 {dimension_numbers = #tpu.dot_dimension_numbers<[1], [0], [0], [1], [0, 0, 1, 1], [], []>} : vector<256x4xf32>, vector<4x4xf32>, vector<256x4xf32> -> vector<256x4xf32>
    %23 = arith.addf %17, %22 : vector<256x4xf32>
    %c0_34 = arith.constant 0 : index
    %c2_35 = arith.constant 2 : index
    %c0_36 = arith.constant 0 : index
    %24 = vector.load %arg5[%c0_34, %c2_35, %c0_36] : memref<18x18x4xf32, #tpu.memory_space<vmem>>, vector<16x16x4xf32>
    %25 = vector.shape_cast %24 : vector<16x16x4xf32> to vector<256x4xf32>
    %c2_37 = arith.constant 2 : index
    %c0_38 = arith.constant 0 : index
    %c0_39 = arith.constant 0 : index
    %26 = vector.load %arg2[%c2_37, %c0_38, %c0_39] : memref<9x4x4xf32, #tpu.memory_space<vmem>>, vector<1x4x4xf32>
    %27 = vector.shape_cast %26 : vector<1x4x4xf32> to vector<4x4xf32>
    %cst_40 = arith.constant dense<0.000000e+00> : vector<256x4xf32>
    %28 = tpu.matmul %25, %27, %cst_40 {dimension_numbers = #tpu.dot_dimension_numbers<[1], [0], [0], [1], [0, 0, 1, 1], [], []>} : vector<256x4xf32>, vector<4x4xf32>, vector<256x4xf32> -> vector<256x4xf32>
    %29 = arith.addf %23, %28 : vector<256x4xf32>
    %c1_41 = arith.constant 1 : index
    %c0_42 = arith.constant 0 : index
    %c0_43 = arith.constant 0 : index
    %30 = vector.load %arg5[%c1_41, %c0_42, %c0_43] : memref<18x18x4xf32, #tpu.memory_space<vmem>>, vector<16x16x4xf32>
    %31 = vector.shape_cast %30 : vector<16x16x4xf32> to vector<256x4xf32>
    %c3 = arith.constant 3 : index
    %c0_44 = arith.constant 0 : index
    %c0_45 = arith.constant 0 : index
    %32 = vector.load %arg2[%c3, %c0_44, %c0_45] : memref<9x4x4xf32, #tpu.memory_space<vmem>>, vector<1x4x4xf32>
    %33 = vector.shape_cast %32 : vector<1x4x4xf32> to vector<4x4xf32>
    %cst_46 = arith.constant dense<0.000000e+00> : vector<256x4xf32>
    %34 = tpu.matmul %31, %33, %cst_46 {dimension_numbers = #tpu.dot_dimension_numbers<[1], [0], [0], [1], [0, 0, 1, 1], [], []>} : vector<256x4xf32>, vector<4x4xf32>, vector<256x4xf32> -> vector<256x4xf32>
    %35 = arith.addf %29, %34 : vector<256x4xf32>
    %c1_47 = arith.constant 1 : index
    %c1_48 = arith.constant 1 : index
    %c0_49 = arith.constant 0 : index
    %36 = vector.load %arg5[%c1_47, %c1_48, %c0_49] : memref<18x18x4xf32, #tpu.memory_space<vmem>>, vector<16x16x4xf32>
    %37 = vector.shape_cast %36 : vector<16x16x4xf32> to vector<256x4xf32>
    %c4 = arith.constant 4 : index
    %c0_50 = arith.constant 0 : index
    %c0_51 = arith.constant 0 : index
    %38 = vector.load %arg2[%c4, %c0_50, %c0_51] : memref<9x4x4xf32, #tpu.memory_space<vmem>>, vector<1x4x4xf32>
    %39 = vector.shape_cast %38 : vector<1x4x4xf32> to vector<4x4xf32>
    %cst_52 = arith.constant dense<0.000000e+00> : vector<256x4xf32>
    %40 = tpu.matmul %37, %39, %cst_52 {dimension_numbers = #tpu.dot_dimension_numbers<[1], [0], [0], [1], [0, 0, 1, 1], [], []>} : vector<256x4xf32>, vector<4x4xf32>, vector<256x4xf32> -> vector<256x4xf32>
    %41 = arith.addf %35, %40 : vector<256x4xf32>
    %c1_53 = arith.constant 1 : index
    %c2_54 = arith.constant 2 : index
    %c0_55 = arith.constant 0 : index
    %42 = vector.load %arg5[%c1_53, %c2_54, %c0_55] : memref<18x18x4xf32, #tpu.memory_space<vmem>>, vector<16x16x4xf32>
    %43 = vector.shape_cast %42 : vector<16x16x4xf32> to vector<256x4xf32>
    %c5 = arith.constant 5 : index
    %c0_56 = arith.constant 0 : index
    %c0_57 = arith.constant 0 : index
    %44 = vector.load %arg2[%c5, %c0_56, %c0_57] : memref<9x4x4xf32, #tpu.memory_space<vmem>>, vector<1x4x4xf32>
    %45 = vector.shape_cast %44 : vector<1x4x4xf32> to vector<4x4xf32>
    %cst_58 = arith.constant dense<0.000000e+00> : vector<256x4xf32>
    %46 = tpu.matmul %43, %45, %cst_58 {dimension_numbers = #tpu.dot_dimension_numbers<[1], [0], [0], [1], [0, 0, 1, 1], [], []>} : vector<256x4xf32>, vector<4x4xf32>, vector<256x4xf32> -> vector<256x4xf32>
    %47 = arith.addf %41, %46 : vector<256x4xf32>
    %c2_59 = arith.constant 2 : index
    %c0_60 = arith.constant 0 : index
    %c0_61 = arith.constant 0 : index
    %48 = vector.load %arg5[%c2_59, %c0_60, %c0_61] : memref<18x18x4xf32, #tpu.memory_space<vmem>>, vector<16x16x4xf32>
    %49 = vector.shape_cast %48 : vector<16x16x4xf32> to vector<256x4xf32>
    %c6 = arith.constant 6 : index
    %c0_62 = arith.constant 0 : index
    %c0_63 = arith.constant 0 : index
    %50 = vector.load %arg2[%c6, %c0_62, %c0_63] : memref<9x4x4xf32, #tpu.memory_space<vmem>>, vector<1x4x4xf32>
    %51 = vector.shape_cast %50 : vector<1x4x4xf32> to vector<4x4xf32>
    %cst_64 = arith.constant dense<0.000000e+00> : vector<256x4xf32>
    %52 = tpu.matmul %49, %51, %cst_64 {dimension_numbers = #tpu.dot_dimension_numbers<[1], [0], [0], [1], [0, 0, 1, 1], [], []>} : vector<256x4xf32>, vector<4x4xf32>, vector<256x4xf32> -> vector<256x4xf32>
    %53 = arith.addf %47, %52 : vector<256x4xf32>
    %c2_65 = arith.constant 2 : index
    %c1_66 = arith.constant 1 : index
    %c0_67 = arith.constant 0 : index
    %54 = vector.load %arg5[%c2_65, %c1_66, %c0_67] : memref<18x18x4xf32, #tpu.memory_space<vmem>>, vector<16x16x4xf32>
    %55 = vector.shape_cast %54 : vector<16x16x4xf32> to vector<256x4xf32>
    %c7 = arith.constant 7 : index
    %c0_68 = arith.constant 0 : index
    %c0_69 = arith.constant 0 : index
    %56 = vector.load %arg2[%c7, %c0_68, %c0_69] : memref<9x4x4xf32, #tpu.memory_space<vmem>>, vector<1x4x4xf32>
    %57 = vector.shape_cast %56 : vector<1x4x4xf32> to vector<4x4xf32>
    %cst_70 = arith.constant dense<0.000000e+00> : vector<256x4xf32>
    %58 = tpu.matmul %55, %57, %cst_70 {dimension_numbers = #tpu.dot_dimension_numbers<[1], [0], [0], [1], [0, 0, 1, 1], [], []>} : vector<256x4xf32>, vector<4x4xf32>, vector<256x4xf32> -> vector<256x4xf32>
    %59 = arith.addf %53, %58 : vector<256x4xf32>
    %c2_71 = arith.constant 2 : index
    %c2_72 = arith.constant 2 : index
    %c0_73 = arith.constant 0 : index
    %60 = vector.load %arg5[%c2_71, %c2_72, %c0_73] : memref<18x18x4xf32, #tpu.memory_space<vmem>>, vector<16x16x4xf32>
    %61 = vector.shape_cast %60 : vector<16x16x4xf32> to vector<256x4xf32>
    %c8 = arith.constant 8 : index
    %c0_74 = arith.constant 0 : index
    %c0_75 = arith.constant 0 : index
    %62 = vector.load %arg2[%c8, %c0_74, %c0_75] : memref<9x4x4xf32, #tpu.memory_space<vmem>>, vector<1x4x4xf32>
    %63 = vector.shape_cast %62 : vector<1x4x4xf32> to vector<4x4xf32>
    %cst_76 = arith.constant dense<0.000000e+00> : vector<256x4xf32>
    %64 = tpu.matmul %61, %63, %cst_76 {dimension_numbers = #tpu.dot_dimension_numbers<[1], [0], [0], [1], [0, 0, 1, 1], [], []>} : vector<256x4xf32>, vector<4x4xf32>, vector<256x4xf32> -> vector<256x4xf32>
    %65 = arith.addf %59, %64 : vector<256x4xf32>
    %cst_77 = arith.constant dense<0.000000e+00> : vector<4xf32>
    %66 = vector.multi_reduction <add>, %65, %cst_77 [0] : vector<256x4xf32> to vector<4xf32>
    %67 = vector.shape_cast %66 : vector<4xf32> to vector<1x4xf32>
    %cst_78 = arith.constant 2.560000e+02 : f32
    %68 = vector.broadcast %cst_78 : f32 to vector<1x4xf32>
    %69 = arith.divf %67, %68 : vector<1x4xf32>
    %70 = vector.broadcast %69 : vector<1x4xf32> to vector<256x4xf32>
    %71 = arith.subf %65, %70 : vector<256x4xf32>
    %72 = arith.mulf %71, %71 : vector<256x4xf32>
    %cst_79 = arith.constant dense<0.000000e+00> : vector<4xf32>
    %73 = vector.multi_reduction <add>, %72, %cst_79 [0] : vector<256x4xf32> to vector<4xf32>
    %74 = vector.shape_cast %73 : vector<4xf32> to vector<1x4xf32>
    %cst_80 = arith.constant 2.560000e+02 : f32
    %75 = vector.broadcast %cst_80 : f32 to vector<1x4xf32>
    %76 = arith.divf %74, %75 : vector<1x4xf32>
    %cst_81 = arith.constant 9.99999974E-6 : f32
    %77 = vector.broadcast %cst_81 : f32 to vector<1x4xf32>
    %78 = arith.addf %76, %77 : vector<1x4xf32>
    %79 = math.rsqrt %78 : vector<1x4xf32>
    %80 = vector.broadcast %79 : vector<1x4xf32> to vector<256x4xf32>
    %81 = arith.mulf %71, %80 : vector<256x4xf32>
    %cst_82 = arith.constant 0.000000e+00 : f32
    %82 = vector.broadcast %cst_82 : f32 to vector<256x4xf32>
    %83 = arith.maximumf %81, %82 : vector<256x4xf32>
    %84 = vector.shape_cast %83 : vector<256x4xf32> to vector<16x16x4xf32>
    %c1_83 = arith.constant 1 : index
    %c1_84 = arith.constant 1 : index
    %c0_85 = arith.constant 0 : index
    %85 = vector.load %arg5[%c1_83, %c1_84, %c0_85] : memref<18x18x4xf32, #tpu.memory_space<vmem>>, vector<16x16x4xf32>
    tpu.vector_store %arg5[%c1_83, %c1_84, %c0_85], %84 {strides = array<i32>} : memref<18x18x4xf32, #tpu.memory_space<vmem>>, vector<16x16x4xf32>,
    %86 = vector.extract_strided_slice %84 {offsets = [1, 0, 0], sizes = [1, 16, 4], strides = [1, 1, 1]} : vector<16x16x4xf32> to vector<1x16x4xf32>
    %c0_86 = arith.constant 0 : index
    %c1_87 = arith.constant 1 : index
    %c0_88 = arith.constant 0 : index
    %87 = vector.load %arg5[%c0_86, %c1_87, %c0_88] : memref<18x18x4xf32, #tpu.memory_space<vmem>>, vector<1x16x4xf32>
    tpu.vector_store %arg5[%c0_86, %c1_87, %c0_88], %86 {strides = array<i32>} : memref<18x18x4xf32, #tpu.memory_space<vmem>>, vector<1x16x4xf32>,
    %88 = vector.extract_strided_slice %84 {offsets = [14, 0, 0], sizes = [1, 16, 4], strides = [1, 1, 1]} : vector<16x16x4xf32> to vector<1x16x4xf32>
    %c17_89 = arith.constant 17 : index
    %c1_90 = arith.constant 1 : index
    %c0_91 = arith.constant 0 : index
    %89 = vector.load %arg5[%c17_89, %c1_90, %c0_91] : memref<18x18x4xf32, #tpu.memory_space<vmem>>, vector<1x16x4xf32>
    tpu.vector_store %arg5[%c17_89, %c1_90, %c0_91], %88 {strides = array<i32>} : memref<18x18x4xf32, #tpu.memory_space<vmem>>, vector<1x16x4xf32>,
    %c0_92 = arith.constant 0 : index
    %c2_93 = arith.constant 2 : index
    %c0_94 = arith.constant 0 : index
    %90 = vector.load %arg5[%c0_92, %c2_93, %c0_94] : memref<18x18x4xf32, #tpu.memory_space<vmem>>, vector<18x1x4xf32>
    %c0_95 = arith.constant 0 : index
    %c0_96 = arith.constant 0 : index
    %c0_97 = arith.constant 0 : index
    %91 = vector.load %arg5[%c0_95, %c0_96, %c0_97] : memref<18x18x4xf32, #tpu.memory_space<vmem>>, vector<18x1x4xf32>
    tpu.vector_store %arg5[%c0_95, %c0_96, %c0_97], %90 {strides = array<i32>} : memref<18x18x4xf32, #tpu.memory_space<vmem>>, vector<18x1x4xf32>,
    %c0_98 = arith.constant 0 : index
    %c15_99 = arith.constant 15 : index
    %c0_100 = arith.constant 0 : index
    %92 = vector.load %arg5[%c0_98, %c15_99, %c0_100] : memref<18x18x4xf32, #tpu.memory_space<vmem>>, vector<18x1x4xf32>
    %c0_101 = arith.constant 0 : index
    %c17_102 = arith.constant 17 : index
    %c0_103 = arith.constant 0 : index
    %93 = vector.load %arg5[%c0_101, %c17_102, %c0_103] : memref<18x18x4xf32, #tpu.memory_space<vmem>>, vector<18x1x4xf32>
    tpu.vector_store %arg5[%c0_101, %c17_102, %c0_103], %92 {strides = array<i32>} : memref<18x18x4xf32, #tpu.memory_space<vmem>>, vector<18x1x4xf32>,
    %cst_104 = arith.constant 0.000000e+00 : f32
    %94 = vector.broadcast %cst_104 : f32 to vector<256x4xf32>
    %c0_105 = arith.constant 0 : index
    %c0_106 = arith.constant 0 : index
    %c0_107 = arith.constant 0 : index
    %95 = vector.load %arg5[%c0_105, %c0_106, %c0_107] : memref<18x18x4xf32, #tpu.memory_space<vmem>>, vector<16x16x4xf32>
    %96 = vector.shape_cast %95 : vector<16x16x4xf32> to vector<256x4xf32>
    %c0_108 = arith.constant 0 : index
    %c0_109 = arith.constant 0 : index
    %c0_110 = arith.constant 0 : index
    %97 = vector.load %arg3[%c0_108, %c0_109, %c0_110] : memref<9x4x4xf32, #tpu.memory_space<vmem>>, vector<1x4x4xf32>
    %98 = vector.shape_cast %97 : vector<1x4x4xf32> to vector<4x4xf32>
    %cst_111 = arith.constant dense<0.000000e+00> : vector<256x4xf32>
    %99 = tpu.matmul %96, %98, %cst_111 {dimension_numbers = #tpu.dot_dimension_numbers<[1], [0], [0], [1], [0, 0, 1, 1], [], []>} : vector<256x4xf32>, vector<4x4xf32>, vector<256x4xf32> -> vector<256x4xf32>
    %100 = arith.addf %94, %99 : vector<256x4xf32>
    %c0_112 = arith.constant 0 : index
    %c1_113 = arith.constant 1 : index
    %c0_114 = arith.constant 0 : index
    %101 = vector.load %arg5[%c0_112, %c1_113, %c0_114] : memref<18x18x4xf32, #tpu.memory_space<vmem>>, vector<16x16x4xf32>
    %102 = vector.shape_cast %101 : vector<16x16x4xf32> to vector<256x4xf32>
    %c1_115 = arith.constant 1 : index
    %c0_116 = arith.constant 0 : index
    %c0_117 = arith.constant 0 : index
    %103 = vector.load %arg3[%c1_115, %c0_116, %c0_117] : memref<9x4x4xf32, #tpu.memory_space<vmem>>, vector<1x4x4xf32>
    %104 = vector.shape_cast %103 : vector<1x4x4xf32> to vector<4x4xf32>
    %cst_118 = arith.constant dense<0.000000e+00> : vector<256x4xf32>
    %105 = tpu.matmul %102, %104, %cst_118 {dimension_numbers = #tpu.dot_dimension_numbers<[1], [0], [0], [1], [0, 0, 1, 1], [], []>} : vector<256x4xf32>, vector<4x4xf32>, vector<256x4xf32> -> vector<256x4xf32>
    %106 = arith.addf %100, %105 : vector<256x4xf32>
    %c0_119 = arith.constant 0 : index
    %c2_120 = arith.constant 2 : index
    %c0_121 = arith.constant 0 : index
    %107 = vector.load %arg5[%c0_119, %c2_120, %c0_121] : memref<18x18x4xf32, #tpu.memory_space<vmem>>, vector<16x16x4xf32>
    %108 = vector.shape_cast %107 : vector<16x16x4xf32> to vector<256x4xf32>
    %c2_122 = arith.constant 2 : index
    %c0_123 = arith.constant 0 : index
    %c0_124 = arith.constant 0 : index
    %109 = vector.load %arg3[%c2_122, %c0_123, %c0_124] : memref<9x4x4xf32, #tpu.memory_space<vmem>>, vector<1x4x4xf32>
    %110 = vector.shape_cast %109 : vector<1x4x4xf32> to vector<4x4xf32>
    %cst_125 = arith.constant dense<0.000000e+00> : vector<256x4xf32>
    %111 = tpu.matmul %108, %110, %cst_125 {dimension_numbers = #tpu.dot_dimension_numbers<[1], [0], [0], [1], [0, 0, 1, 1], [], []>} : vector<256x4xf32>, vector<4x4xf32>, vector<256x4xf32> -> vector<256x4xf32>
    %112 = arith.addf %106, %111 : vector<256x4xf32>
    %c1_126 = arith.constant 1 : index
    %c0_127 = arith.constant 0 : index
    %c0_128 = arith.constant 0 : index
    %113 = vector.load %arg5[%c1_126, %c0_127, %c0_128] : memref<18x18x4xf32, #tpu.memory_space<vmem>>, vector<16x16x4xf32>
    %114 = vector.shape_cast %113 : vector<16x16x4xf32> to vector<256x4xf32>
    %c3_129 = arith.constant 3 : index
    %c0_130 = arith.constant 0 : index
    %c0_131 = arith.constant 0 : index
    %115 = vector.load %arg3[%c3_129, %c0_130, %c0_131] : memref<9x4x4xf32, #tpu.memory_space<vmem>>, vector<1x4x4xf32>
    %116 = vector.shape_cast %115 : vector<1x4x4xf32> to vector<4x4xf32>
    %cst_132 = arith.constant dense<0.000000e+00> : vector<256x4xf32>
    %117 = tpu.matmul %114, %116, %cst_132 {dimension_numbers = #tpu.dot_dimension_numbers<[1], [0], [0], [1], [0, 0, 1, 1], [], []>} : vector<256x4xf32>, vector<4x4xf32>, vector<256x4xf32> -> vector<256x4xf32>
    %118 = arith.addf %112, %117 : vector<256x4xf32>
    %c1_133 = arith.constant 1 : index
    %c1_134 = arith.constant 1 : index
    %c0_135 = arith.constant 0 : index
    %119 = vector.load %arg5[%c1_133, %c1_134, %c0_135] : memref<18x18x4xf32, #tpu.memory_space<vmem>>, vector<16x16x4xf32>
    %120 = vector.shape_cast %119 : vector<16x16x4xf32> to vector<256x4xf32>
    %c4_136 = arith.constant 4 : index
    %c0_137 = arith.constant 0 : index
    %c0_138 = arith.constant 0 : index
    %121 = vector.load %arg3[%c4_136, %c0_137, %c0_138] : memref<9x4x4xf32, #tpu.memory_space<vmem>>, vector<1x4x4xf32>
    %122 = vector.shape_cast %121 : vector<1x4x4xf32> to vector<4x4xf32>
    %cst_139 = arith.constant dense<0.000000e+00> : vector<256x4xf32>
    %123 = tpu.matmul %120, %122, %cst_139 {dimension_numbers = #tpu.dot_dimension_numbers<[1], [0], [0], [1], [0, 0, 1, 1], [], []>} : vector<256x4xf32>, vector<4x4xf32>, vector<256x4xf32> -> vector<256x4xf32>
    %124 = arith.addf %118, %123 : vector<256x4xf32>
    %c1_140 = arith.constant 1 : index
    %c2_141 = arith.constant 2 : index
    %c0_142 = arith.constant 0 : index
    %125 = vector.load %arg5[%c1_140, %c2_141, %c0_142] : memref<18x18x4xf32, #tpu.memory_space<vmem>>, vector<16x16x4xf32>
    %126 = vector.shape_cast %125 : vector<16x16x4xf32> to vector<256x4xf32>
    %c5_143 = arith.constant 5 : index
    %c0_144 = arith.constant 0 : index
    %c0_145 = arith.constant 0 : index
    %127 = vector.load %arg3[%c5_143, %c0_144, %c0_145] : memref<9x4x4xf32, #tpu.memory_space<vmem>>, vector<1x4x4xf32>
    %128 = vector.shape_cast %127 : vector<1x4x4xf32> to vector<4x4xf32>
    %cst_146 = arith.constant dense<0.000000e+00> : vector<256x4xf32>
    %129 = tpu.matmul %126, %128, %cst_146 {dimension_numbers = #tpu.dot_dimension_numbers<[1], [0], [0], [1], [0, 0, 1, 1], [], []>} : vector<256x4xf32>, vector<4x4xf32>, vector<256x4xf32> -> vector<256x4xf32>
    %130 = arith.addf %124, %129 : vector<256x4xf32>
    %c2_147 = arith.constant 2 : index
    %c0_148 = arith.constant 0 : index
    %c0_149 = arith.constant 0 : index
    %131 = vector.load %arg5[%c2_147, %c0_148, %c0_149] : memref<18x18x4xf32, #tpu.memory_space<vmem>>, vector<16x16x4xf32>
    %132 = vector.shape_cast %131 : vector<16x16x4xf32> to vector<256x4xf32>
    %c6_150 = arith.constant 6 : index
    %c0_151 = arith.constant 0 : index
    %c0_152 = arith.constant 0 : index
    %133 = vector.load %arg3[%c6_150, %c0_151, %c0_152] : memref<9x4x4xf32, #tpu.memory_space<vmem>>, vector<1x4x4xf32>
    %134 = vector.shape_cast %133 : vector<1x4x4xf32> to vector<4x4xf32>
    %cst_153 = arith.constant dense<0.000000e+00> : vector<256x4xf32>
    %135 = tpu.matmul %132, %134, %cst_153 {dimension_numbers = #tpu.dot_dimension_numbers<[1], [0], [0], [1], [0, 0, 1, 1], [], []>} : vector<256x4xf32>, vector<4x4xf32>, vector<256x4xf32> -> vector<256x4xf32>
    %136 = arith.addf %130, %135 : vector<256x4xf32>
    %c2_154 = arith.constant 2 : index
    %c1_155 = arith.constant 1 : index
    %c0_156 = arith.constant 0 : index
    %137 = vector.load %arg5[%c2_154, %c1_155, %c0_156] : memref<18x18x4xf32, #tpu.memory_space<vmem>>, vector<16x16x4xf32>
    %138 = vector.shape_cast %137 : vector<16x16x4xf32> to vector<256x4xf32>
    %c7_157 = arith.constant 7 : index
    %c0_158 = arith.constant 0 : index
    %c0_159 = arith.constant 0 : index
    %139 = vector.load %arg3[%c7_157, %c0_158, %c0_159] : memref<9x4x4xf32, #tpu.memory_space<vmem>>, vector<1x4x4xf32>
    %140 = vector.shape_cast %139 : vector<1x4x4xf32> to vector<4x4xf32>
    %cst_160 = arith.constant dense<0.000000e+00> : vector<256x4xf32>
    %141 = tpu.matmul %138, %140, %cst_160 {dimension_numbers = #tpu.dot_dimension_numbers<[1], [0], [0], [1], [0, 0, 1, 1], [], []>} : vector<256x4xf32>, vector<4x4xf32>, vector<256x4xf32> -> vector<256x4xf32>
    %142 = arith.addf %136, %141 : vector<256x4xf32>
    %c2_161 = arith.constant 2 : index
    %c2_162 = arith.constant 2 : index
    %c0_163 = arith.constant 0 : index
    %143 = vector.load %arg5[%c2_161, %c2_162, %c0_163] : memref<18x18x4xf32, #tpu.memory_space<vmem>>, vector<16x16x4xf32>
    %144 = vector.shape_cast %143 : vector<16x16x4xf32> to vector<256x4xf32>
    %c8_164 = arith.constant 8 : index
    %c0_165 = arith.constant 0 : index
    %c0_166 = arith.constant 0 : index
    %145 = vector.load %arg3[%c8_164, %c0_165, %c0_166] : memref<9x4x4xf32, #tpu.memory_space<vmem>>, vector<1x4x4xf32>
    %146 = vector.shape_cast %145 : vector<1x4x4xf32> to vector<4x4xf32>
    %cst_167 = arith.constant dense<0.000000e+00> : vector<256x4xf32>
    %147 = tpu.matmul %144, %146, %cst_167 {dimension_numbers = #tpu.dot_dimension_numbers<[1], [0], [0], [1], [0, 0, 1, 1], [], []>} : vector<256x4xf32>, vector<4x4xf32>, vector<256x4xf32> -> vector<256x4xf32>
    %148 = arith.addf %142, %147 : vector<256x4xf32>
    %cst_168 = arith.constant dense<0.000000e+00> : vector<4xf32>
    %149 = vector.multi_reduction <add>, %148, %cst_168 [0] : vector<256x4xf32> to vector<4xf32>
    %150 = vector.shape_cast %149 : vector<4xf32> to vector<1x4xf32>
    %cst_169 = arith.constant 2.560000e+02 : f32
    %151 = vector.broadcast %cst_169 : f32 to vector<1x4xf32>
    %152 = arith.divf %150, %151 : vector<1x4xf32>
    %153 = vector.broadcast %152 : vector<1x4xf32> to vector<256x4xf32>
    %154 = arith.subf %148, %153 : vector<256x4xf32>
    %155 = arith.mulf %154, %154 : vector<256x4xf32>
    %cst_170 = arith.constant dense<0.000000e+00> : vector<4xf32>
    %156 = vector.multi_reduction <add>, %155, %cst_170 [0] : vector<256x4xf32> to vector<4xf32>
    %157 = vector.shape_cast %156 : vector<4xf32> to vector<1x4xf32>
    %cst_171 = arith.constant 2.560000e+02 : f32
    %158 = vector.broadcast %cst_171 : f32 to vector<1x4xf32>
    %159 = arith.divf %157, %158 : vector<1x4xf32>
    %cst_172 = arith.constant 9.99999974E-6 : f32
    %160 = vector.broadcast %cst_172 : f32 to vector<1x4xf32>
    %161 = arith.addf %159, %160 : vector<1x4xf32>
    %162 = math.rsqrt %161 : vector<1x4xf32>
    %163 = vector.broadcast %162 : vector<1x4xf32> to vector<256x4xf32>
    %164 = arith.mulf %154, %163 : vector<256x4xf32>
    %165 = vector.shape_cast %1 : vector<16x16x4xf32> to vector<256x4xf32>
    %166 = arith.addf %165, %164 : vector<256x4xf32>
    %167 = vector.shape_cast %166 : vector<256x4xf32> to vector<16x16x4xf32>
    %c0_173 = arith.constant 0 : index
    %c0_174 = arith.constant 0 : index
    %c0_175 = arith.constant 0 : index
    %c0_176 = arith.constant 0 : index
    %168 = vector.load %arg4[%c0_173, %c0_174, %c0_175, %c0_176] : memref<1x16x16x4xf32, #tpu.memory_space<vmem>>, vector<1x16x16x4xf32>
    %169 = vector.shape_cast %168 : vector<1x16x16x4xf32> to vector<16x16x4xf32>
    %170 = vector.shape_cast %167 : vector<16x16x4xf32> to vector<1x16x16x4xf32>
    tpu.vector_store %arg4[%c0_173, %c0_174, %c0_175, %c0_176], %170 {strides = array<i32>} : memref<1x16x16x4xf32, #tpu.memory_space<vmem>>, vector<1x16x16x4xf32>,
    return
  }
  func.func @transform_0(%arg0: i32) -> (i32, i32, i32, i32) {
    %c0_i32 = arith.constant 0 : i32
    %c0_i32_0 = arith.constant 0 : i32
    %c0_i32_1 = arith.constant 0 : i32
    %c0_i32_2 = arith.constant 0 : i32
    return %arg0, %c0_i32, %c0_i32_0, %c0_i32_1 : i32, i32, i32, i32
  }
  func.func @transform_1(%arg0: i32) -> (i32, i32, i32) {
    %c0_i32 = arith.constant 0 : i32
    %c0_i32_0 = arith.constant 0 : i32
    %c0_i32_1 = arith.constant 0 : i32
    %c0_i32_2 = arith.constant 0 : i32
    return %c0_i32, %c0_i32_0, %c0_i32_1 : i32, i32, i32
  }
  func.func @transform_2(%arg0: i32) -> (i32, i32, i32) {
    %c0_i32 = arith.constant 0 : i32
    %c0_i32_0 = arith.constant 0 : i32
    %c0_i32_1 = arith.constant 0 : i32
    %c0_i32_2 = arith.constant 0 : i32
    return %c0_i32, %c0_i32_0, %c0_i32_1 : i32, i32, i32
  }
  func.func @transform_3(%arg0: i32) -> (i32, i32, i32, i32) {
    %c0_i32 = arith.constant 0 : i32
    %c0_i32_0 = arith.constant 0 : i32
    %c0_i32_1 = arith.constant 0 : i32
    %c0_i32_2 = arith.constant 0 : i32
    return %arg0, %c0_i32, %c0_i32_0, %c0_i32_1 : i32, i32, i32, i32
  }
}

</mosaic_0001>

<llo_original>
// kernel: tpu_custom_call.1
$region0: #{tpu_custom_call.1}
  #allocation0 [shape = 'u32[]', space=smem, size = 0x4, offset = 0x4, fixed_abs, tag = 'smem constant byte address 0x4 - core index']
  #allocation1 [shape = 'u32[72,128]{1,0:T(1,128)}', space=vmem, size = 0x9000, scoped, tag = 'internal scratch']
  #allocation2 [shape = 'f32[18,18,4]{2,1,0:T(8,128)}', space=vmem, size = 0x36000, scoped, tag = 'scratch operand']
  %s0 = inlined_call_operand.vmem [shape: f32[2,16,16,4], index: 0, kind: input, shape index: {}]
  %s1 = inlined_call_operand.vmem [shape: f32[9,4,4], index: 1, kind: input, shape index: {}]
  %s2 = inlined_call_operand.vmem [shape: f32[9,4,4], index: 2, kind: input, shape index: {}]
  %s3 = inlined_call_operand.vmem [shape: f32[2,16,16,4], index: 3, kind: output, shape index: {}]
  %s4 = sld [smem:[#allocation0]]
  $region45: #{tpu_custom_call.1} parent=0
    _
  %s6 = ssub.s32 1, %s4
  %s7 = scalar_select 0, %s6, %s4
  loop: start=0, step=1, limit=4
  $region2: #{tpu_custom_call.1} parent=0 // loop_pre_header
    _
  $region3: #{tpu_custom_call.1} parent=0 // loop_header
    %s9 = sphi 0, %s13
    %p10 = scmp.ge.s32.totalorder %s9, 4
    %s19 = sphi 0, %s21
    %s22 = sphi 0, %s19
    %s23 = sphi 0, %s22
    %s39 = sphi 0, %s23
    %s43 = sphi 0, %s43
    %s45 = sphi 0, %s43
    %s46 = sphi 0, %s45
    %s60 = sphi 0, %s46
    %s64 = sphi 0, %s64
    %s66 = sphi 0, %s64
    %s67 = sphi 0, %s66
    %s81 = sphi 0, %s67
    %s87 = sphi 0, %s89
    %s90 = sphi 0, %s87
    %s91 = sphi 0, %s90
    %s107 = sphi 0, %s91
  $region4: #{tpu_custom_call.1} parent=0 // loop_header_branch
    %12 = sbr.rel (%p10) target = $region8
  $region5: #{tpu_custom_call.1} parent=0 // loop_body
    %s14 = ssub.s32 %s9, 1
    %s15 = ssub.s32 %s9, 2
    %s16 = sadd.s32 %s9, 1
    %s17 = ssub.s32 %s9, %s16
    %p18 = scmp.eq.s32.totalorder %s17, 0
    %s20 = sadd.s32 %s19, 1
    %s21 = scalar_select %p18, %s19, %s20
    %p24 = pneg %p18
    %p25 = scmp.eq.s32.totalorder %s9, 1
    %p26 = por %p24, %p25
    %p27 = scmp.ne.s32.totalorder %s19, %s22
    %p28 = scmp.eq.s32.totalorder %s9, 0
    %p29 = por %p27, %p28
    %p30 = scmp.ne.s32.totalorder %s19, %s22
    %p31 = scmp.eq.s32.totalorder %s14, 1
    %p32 = por %p30, %p31
    %p33 = scmp.ne.s32.totalorder %s22, %s23
    %p34 = scmp.eq.s32.totalorder %s14, 0
    %p35 = por %p33, %p34
    %p36 = scmp.ne.s32.totalorder %s22, %s23
    %p37 = scmp.eq.s32.totalorder %s15, 1
    %p38 = por %p36, %p37
    %p40 = scmp.ne.s32.totalorder %s23, %s39
    %p41 = scmp.eq.s32.totalorder %s15, 0
    %p42 = por %p40, %p41
    %s44 = sadd.s32 %s43, 1
    %p47 = scmp.eq.s32.totalorder %s9, 1
    %p48 = scmp.ne.s32.totalorder %s43, %s45
    %p49 = scmp.eq.s32.totalorder %s9, 0
    %p50 = por %p48, %p49
    %p51 = scmp.ne.s32.totalorder %s43, %s45
    %p52 = scmp.eq.s32.totalorder %s14, 1
    %p53 = por %p51, %p52
    %p54 = scmp.ne.s32.totalorder %s45, %s46
    %p55 = scmp.eq.s32.totalorder %s14, 0
    %p56 = por %p54, %p55
    %p57 = scmp.ne.s32.totalorder %s45, %s46
    %p58 = scmp.eq.s32.totalorder %s15, 1
    %p59 = por %p57, %p58
    %p61 = scmp.ne.s32.totalorder %s46, %s60
    %p62 = scmp.eq.s32.totalorder %s15, 0
    %p63 = por %p61, %p62
    %s65 = sadd.s32 %s64, 1
    %p68 = scmp.eq.s32.totalorder %s9, 1
    %p69 = scmp.ne.s32.totalorder %s64, %s66
    %p70 = scmp.eq.s32.totalorder %s9, 0
    %p71 = por %p69, %p70
    %p72 = scmp.ne.s32.totalorder %s64, %s66
    %p73 = scmp.eq.s32.totalorder %s14, 1
    %p74 = por %p72, %p73
    %p75 = scmp.ne.s32.totalorder %s66, %s67
    %p76 = scmp.eq.s32.totalorder %s14, 0
    %p77 = por %p75, %p76
    %p78 = scmp.ne.s32.totalorder %s66, %s67
    %p79 = scmp.eq.s32.totalorder %s15, 1
    %p80 = por %p78, %p79
    %p82 = scmp.ne.s32.totalorder %s67, %s81
    %p83 = scmp.eq.s32.totalorder %s15, 0
    %p84 = por %p82, %p83
    %s85 = ssub.s32 %s9, %s16
    %p86 = scmp.eq.s32.totalorder %s85, 0
    %s88 = sadd.s32 %s87, 1
    %s89 = scalar_select %p86, %s87, %s88
    %p92 = pneg %p86
    %p93 = scmp.eq.s32.totalorder %s9, 1
    %p94 = por %p92, %p93
    %p95 = scmp.ne.s32.totalorder %s87, %s90
    %p96 = scmp.eq.s32.totalorder %s9, 0
    %p97 = por %p95, %p96
    %p98 = scmp.ne.s32.totalorder %s87, %s90
    %p99 = scmp.eq.s32.totalorder %s14, 1
    %p100 = por %p98, %p99
    %p101 = scmp.ne.s32.totalorder %s90, %s91
    %p102 = scmp.eq.s32.totalorder %s14, 0
    %p103 = por %p101, %p102
    %p104 = scmp.ne.s32.totalorder %s90, %s91
    %p105 = scmp.eq.s32.totalorder %s15, 1
    %p106 = por %p104, %p105
    %p108 = scmp.ne.s32.totalorder %s91, %s107
    %p109 = scmp.eq.s32.totalorder %s15, 0
    %p110 = por %p108, %p109
    %p111 = scmp.le.s32.totalorder 1, %s9
    %p112 = scmp.lt.s32.totalorder %s9, 3
    %p113 = pnand %p111, %p112
    %p114 = pneg %p113
    // Predicated region
    $region9: #{tpu_custom_call.1} parent=5 // pred_check
      _
    $region10: #{tpu_custom_call.1} parent=5 // pred_check_branch
      %116 = sbr.rel (%p113) target = $region12
    $region11: #{tpu_custom_call.1} parent=5 // pred_region
      %s117 = ssub.s32 %s9, 1
      // Predicated region
      $region13: #{tpu_custom_call.1} parent=11 // pred_check
        %p118 = pneg %p56
      $region14: #{tpu_custom_call.1} parent=11 // pred_check_branch
        %120 = sbr.rel (%p118) target = $region16
      $region15: #{tpu_custom_call.1} parent=11 // pred_region
        _
      $region16: #{tpu_custom_call.1} parent=11 // pred_fallthru
        _
      // Predicated region
      $region17: #{tpu_custom_call.1} parent=11 // pred_check
        %p121 = pneg %p77
      $region18: #{tpu_custom_call.1} parent=11 // pred_check_branch
        %123 = sbr.rel (%p121) target = $region20
      $region19: #{tpu_custom_call.1} parent=11 // pred_region
        _
      $region20: #{tpu_custom_call.1} parent=11 // pred_fallthru
        _
    $region12: #{tpu_custom_call.1} parent=5 // pred_fallthru
      _
    %p124 = scmp.lt.s32.totalorder %s9, 2
    // Predicated region
    $region21: #{tpu_custom_call.1} parent=5 // pred_check
      %p125 = pneg %p124
    $region22: #{tpu_custom_call.1} parent=5 // pred_check_branch
      %127 = sbr.rel (%p125) target = $region24
    $region23: #{tpu_custom_call.1} parent=5 // pred_region
      // Predicated region
      $region25: #{tpu_custom_call.1} parent=23 // pred_check
        %p128 = pneg %p29
      $region26: #{tpu_custom_call.1} parent=23 // pred_check_branch
        %130 = sbr.rel (%p128) target = $region28
      $region27: #{tpu_custom_call.1} parent=23 // pred_region
        %p131 = scmp.lt.s32.totalorder %s9, 1
        %s132 = scalar_select %p131, %s9, 1
        %s133 = smul.addr %s132, 32
        %s134 = smul.addr %s133, 8
        %s135 = scalar_lea.vmem %s0, %s134
      $region28: #{tpu_custom_call.1} parent=23 // pred_fallthru
        _
    $region24: #{tpu_custom_call.1} parent=5 // pred_fallthru
      _
    %p136 = scmp.le.s32.totalorder 1, %s9
    %p137 = scmp.lt.s32.totalorder %s9, 3
    %p138 = pnand %p136, %p137
    %p139 = pneg %p138
    // Predicated region
    $region29: #{tpu_custom_call.1} parent=5 // pred_check
      _
    $region30: #{tpu_custom_call.1} parent=5 // pred_check_branch
      %141 = sbr.rel (%p138) target = $region32
    $region31: #{tpu_custom_call.1} parent=5 // pred_region
      %s142 = ssub.s32 %s9, 1
      %p143 = scmp.lt.s32.totalorder %s14, 1
      %s144 = scalar_select %p143, %s14, 1
      %s145 = smul.addr %s144, 32
      %s146 = smul.addr %s145, 8
      %s147 = scalar_lea.vmem %s0, %s146
      %p148 = pneg %p35
      %p149 = pneg %p32
      %p150 = pneg %p56
      %p151 = pneg %p53
      %p152 = pneg %p77
      %p153 = pneg %p74
      %p154 = pneg %p103
      %p155 = pneg %p100
      %p156 = scmp.lt.s32.totalorder %s14, 1
      %s157 = scalar_select %p156, %s14, 1
      %s158 = smul.addr %s157, 32
      %s159 = smul.addr %s158, 8
      %s160 = scalar_lea.vmem %s3, %s159
      %p161 = scmp.lt.s32.totalorder %s14, 1
      %s162 = scalar_select %p161, %s14, 1
      %s163 = smul.addr %s162, 32
      %s164 = smul.addr %s163, 8
      %s165 = scalar_lea.vmem %s0, %s164
      %p166 = scmp.lt.s32.totalorder %s14, 1
      %s167 = scalar_select %p166, %s14, 1
      %s168 = smul.addr %s167, 32
      %s169 = smul.addr %s168, 8
      %s170 = scalar_lea.vmem %s3, %s169
      %v171 = vld [vmem:[%s165] sm:$0xff]
      %v172 = vld [vmem:[%s165 + $0x8] sm:$0xff]
      %v173 = vld [vmem:[%s165 + $0x10] sm:$0xff]
      %v174 = vld [vmem:[%s165 + $0x18] sm:$0xff]
      %v175 = vld [vmem:[%s165 + $0x20] sm:$0xff]
      %v176 = vld [vmem:[%s165 + $0x28] sm:$0xff]
      %v177 = vld [vmem:[%s165 + $0x30] sm:$0xff]
      %v178 = vld [vmem:[%s165 + $0x38] sm:$0xff]
      %v179 = vld [vmem:[%s165 + $0x40] sm:$0xff]
      %v180 = vld [vmem:[%s165 + $0x48] sm:$0xff]
      %v181 = vld [vmem:[%s165 + $0x50] sm:$0xff]
      %v182 = vld [vmem:[%s165 + $0x58] sm:$0xff]
      %v183 = vld [vmem:[%s165 + $0x60] sm:$0xff]
      %v184 = vld [vmem:[%s165 + $0x68] sm:$0xff]
      %v185 = vld [vmem:[%s165 + $0x70] sm:$0xff]
      %v186 = vld [vmem:[%s165 + $0x78] sm:$0xff]
      %v187 = vld [vmem:[%s165 + $0x80] sm:$0xff]
      %v188 = vld [vmem:[%s165 + $0x88] sm:$0xff]
      %v189 = vld [vmem:[%s165 + $0x90] sm:$0xff]
      %v190 = vld [vmem:[%s165 + $0x98] sm:$0xff]
      %v191 = vld [vmem:[%s165 + $0xa0] sm:$0xff]
      %v192 = vld [vmem:[%s165 + $0xa8] sm:$0xff]
      %v193 = vld [vmem:[%s165 + $0xb0] sm:$0xff]
      %v194 = vld [vmem:[%s165 + $0xb8] sm:$0xff]
      %v195 = vld [vmem:[%s165 + $0xc0] sm:$0xff]
      %v196 = vld [vmem:[%s165 + $0xc8] sm:$0xff]
      %v197 = vld [vmem:[%s165 + $0xd0] sm:$0xff]
      %v198 = vld [vmem:[%s165 + $0xd8] sm:$0xff]
      %v199 = vld [vmem:[%s165 + $0xe0] sm:$0xff]
      %v200 = vld [vmem:[%s165 + $0xe8] sm:$0xff]
      %v201 = vld [vmem:[%s165 + $0xf0] sm:$0xff]
      %v202 = vld [vmem:[%s165 + $0xf8] sm:$0xff]
      %s203 = scalar_lea.vmem [#allocation2], 24
      %vm204 = vcmask 31744
      %205 = vst.msk [vmem:[%s203 + $0x1] sm:$0xff] %vm204, %v171
      %206 = vst.msk [vmem:[%s203 + $0x9] sm:$0xff] %vm204, %v172
      %207 = vst.msk [vmem:[%s203 + $0x19] sm:$0xff] %vm204, %v173
      %208 = vst.msk [vmem:[%s203 + $0x21] sm:$0xff] %vm204, %v174
      %209 = vst.msk [vmem:[%s203 + $0x31] sm:$0xff] %vm204, %v175
      %210 = vst.msk [vmem:[%s203 + $0x39] sm:$0xff] %vm204, %v176
      %211 = vst.msk [vmem:[%s203 + $0x49] sm:$0xff] %vm204, %v177
      %212 = vst.msk [vmem:[%s203 + $0x51] sm:$0xff] %vm204, %v178
      %213 = vst.msk [vmem:[%s203 + $0x61] sm:$0xff] %vm204, %v179
      %214 = vst.msk [vmem:[%s203 + $0x69] sm:$0xff] %vm204, %v180
      %215 = vst.msk [vmem:[%s203 + $0x79] sm:$0xff] %vm204, %v181
      %216 = vst.msk [vmem:[%s203 + $0x81] sm:$0xff] %vm204, %v182
      %217 = vst.msk [vmem:[%s203 + $0x91] sm:$0xff] %vm204, %v183
      %218 = vst.msk [vmem:[%s203 + $0x99] sm:$0xff] %vm204, %v184
      %219 = vst.msk [vmem:[%s203 + $0xa9] sm:$0xff] %vm204, %v185
      %220 = vst.msk [vmem:[%s203 + $0xb1] sm:$0xff] %vm204, %v186
      %221 = vst.msk [vmem:[%s203 + $0xc1] sm:$0xff] %vm204, %v187
      %222 = vst.msk [vmem:[%s203 + $0xc9] sm:$0xff] %vm204, %v188
      %223 = vst.msk [vmem:[%s203 + $0xd9] sm:$0xff] %vm204, %v189
      %224 = vst.msk [vmem:[%s203 + $0xe1] sm:$0xff] %vm204, %v190
      %225 = vst.msk [vmem:[%s203 + $0xf1] sm:$0xff] %vm204, %v191
      %226 = vst.msk [vmem:[%s203 + $0xf9] sm:$0xff] %vm204, %v192
      %227 = vst.msk [vmem:[%s203 + $0x109] sm:$0xff] %vm204, %v193
      %228 = vst.msk [vmem:[%s203 + $0x111] sm:$0xff] %vm204, %v194
      %229 = vst.msk [vmem:[%s203 + $0x121] sm:$0xff] %vm204, %v195
      %230 = vst.msk [vmem:[%s203 + $0x129] sm:$0xff] %vm204, %v196
      %231 = vst.msk [vmem:[%s203 + $0x139] sm:$0xff] %vm204, %v197
      %232 = vst.msk [vmem:[%s203 + $0x141] sm:$0xff] %vm204, %v198
      %233 = vst.msk [vmem:[%s203 + $0x151] sm:$0xff] %vm204, %v199
      %234 = vst.msk [vmem:[%s203 + $0x159] sm:$0xff] %vm204, %v200
      %235 = vst.msk [vmem:[%s203 + $0x169] sm:$0xff] %vm204, %v201
      %236 = vst.msk [vmem:[%s203 + $0x171] sm:$0xff] %vm204, %v202
      %237 = vst.msk [vmem:[#allocation2 + $0x1] sm:$0xff] %vm204, %v173
      %238 = vst.msk [vmem:[#allocation2 + $0x9] sm:$0xff] %vm204, %v174
      %s239 = scalar_lea.vmem [#allocation2], 408
      %240 = vst.msk [vmem:[%s239 + $0x1] sm:$0xff] %vm204, %v199
      %241 = vst.msk [vmem:[%s239 + $0x9] sm:$0xff] %vm204, %v200
      %v242 = vld [vmem:[#allocation2 + $0x2] sm:$0x1]
      %v243 = vld [vmem:[#allocation2 + $0x1a] sm:$0x1]
      %v244 = vld [vmem:[#allocation2 + $0x32] sm:$0x1]
      %v245 = vld [vmem:[#allocation2 + $0x4a] sm:$0x1]
      %v246 = vld [vmem:[#allocation2 + $0x62] sm:$0x1]
      %v247 = vld [vmem:[#allocation2 + $0x7a] sm:$0x1]
      %v248 = vld [vmem:[#allocation2 + $0x92] sm:$0x1]
      %v249 = vld [vmem:[#allocation2 + $0xaa] sm:$0x1]
      %v250 = vld [vmem:[#allocation2 + $0xc2] sm:$0x1]
      %v251 = vld [vmem:[#allocation2 + $0xda] sm:$0x1]
      %v252 = vld [vmem:[#allocation2 + $0xf2] sm:$0x1]
      %v253 = vld [vmem:[#allocation2 + $0x10a] sm:$0x1]
      %v254 = vld [vmem:[#allocation2 + $0x122] sm:$0x1]
      %v255 = vld [vmem:[#allocation2 + $0x13a] sm:$0x1]
      %v256 = vld [vmem:[#allocation2 + $0x152] sm:$0x1]
      %v257 = vld [vmem:[#allocation2 + $0x16a] sm:$0x1]
      %v258 = vld [vmem:[#allocation2 + $0x182] sm:$0x1]
      %v259 = vld [vmem:[#allocation2 + $0x19a] sm:$0x1]
      %vm260 = vcmask 24576
      %261 = vst.msk [vmem:[#allocation2] sm:$0x1] %vm260, %v242
      %262 = vst.msk [vmem:[#allocation2 + $0x18] sm:$0x1] %vm260, %v243
      %263 = vst.msk [vmem:[#allocation2 + $0x30] sm:$0x1] %vm260, %v244
      %264 = vst.msk [vmem:[#allocation2 + $0x48] sm:$0x1] %vm260, %v245
      %265 = vst.msk [vmem:[#allocation2 + $0x60] sm:$0x1] %vm260, %v246
      %266 = vst.msk [vmem:[#allocation2 + $0x78] sm:$0x1] %vm260, %v247
      %267 = vst.msk [vmem:[#allocation2 + $0x90] sm:$0x1] %vm260, %v248
      %268 = vst.msk [vmem:[#allocation2 + $0xa8] sm:$0x1] %vm260, %v249
      %269 = vst.msk [vmem:[#allocation2 + $0xc0] sm:$0x1] %vm260, %v250
      %270 = vst.msk [vmem:[#allocation2 + $0xd8] sm:$0x1] %vm260, %v251
      %271 = vst.msk [vmem:[#allocation2 + $0xf0] sm:$0x1] %vm260, %v252
      %272 = vst.msk [vmem:[#allocation2 + $0x108] sm:$0x1] %vm260, %v253
      %273 = vst.msk [vmem:[#allocation2 + $0x120] sm:$0x1] %vm260, %v254
      %274 = vst.msk [vmem:[#allocation2 + $0x138] sm:$0x1] %vm260, %v255
      %275 = vst.msk [vmem:[#allocation2 + $0x150] sm:$0x1] %vm260, %v256
      %276 = vst.msk [vmem:[#allocation2 + $0x168] sm:$0x1] %vm260, %v257
      %277 = vst.msk [vmem:[#allocation2 + $0x180] sm:$0x1] %vm260, %v258
      %278 = vst.msk [vmem:[#allocation2 + $0x198] sm:$0x1] %vm260, %v259
      %v279 = vld [vmem:[#allocation2 + $0xf] sm:$0x1]
      %v280 = vld [vmem:[#allocation2 + $0x27] sm:$0x1]
      %v281 = vld [vmem:[#allocation2 + $0x3f] sm:$0x1]
      %v282 = vld [vmem:[#allocation2 + $0x57] sm:$0x1]
      %v283 = vld [vmem:[#allocation2 + $0x6f] sm:$0x1]
      %v284 = vld [vmem:[#allocation2 + $0x87] sm:$0x1]
      %v285 = vld [vmem:[#allocation2 + $0x9f] sm:$0x1]
      %v286 = vld [vmem:[#allocation2 + $0xb7] sm:$0x1]
      %v287 = vld [vmem:[#allocation2 + $0xcf] sm:$0x1]
      %v288 = vld [vmem:[#allocation2 + $0xe7] sm:$0x1]
      %v289 = vld [vmem:[#allocation2 + $0xff] sm:$0x1]
      %v290 = vld [vmem:[#allocation2 + $0x117] sm:$0x1]
      %v291 = vld [vmem:[#allocation2 + $0x12f] sm:$0x1]
      %v292 = vld [vmem:[#allocation2 + $0x147] sm:$0x1]
      %v293 = vld [vmem:[#allocation2 + $0x15f] sm:$0x1]
      %v294 = vld [vmem:[#allocation2 + $0x177] sm:$0x1]
      %v295 = vld [vmem:[#allocation2 + $0x18f] sm:$0x1]
      %v296 = vld [vmem:[#allocation2 + $0x1a7] sm:$0x1]
      %297 = vst.msk [vmem:[#allocation2 + $0x11] sm:$0x1] %vm260, %v279
      %298 = vst.msk [vmem:[#allocation2 + $0x29] sm:$0x1] %vm260, %v280
      %299 = vst.msk [vmem:[#allocation2 + $0x41] sm:$0x1] %vm260, %v281
      %300 = vst.msk [vmem:[#allocation2 + $0x59] sm:$0x1] %vm260, %v282
      %301 = vst.msk [vmem:[#allocation2 + $0x71] sm:$0x1] %vm260, %v283
      %302 = vst.msk [vmem:[#allocation2 + $0x89] sm:$0x1] %vm260, %v284
      %303 = vst.msk [vmem:[#allocation2 + $0xa1] sm:$0x1] %vm260, %v285
      %304 = vst.msk [vmem:[#allocation2 + $0xb9] sm:$0x1] %vm260, %v286
      %305 = vst.msk [vmem:[#allocation2 + $0xd1] sm:$0x1] %vm260, %v287
      %306 = vst.msk [vmem:[#allocation2 + $0xe9] sm:$0x1] %vm260, %v288
      %307 = vst.msk [vmem:[#allocation2 + $0x101] sm:$0x1] %vm260, %v289
      %308 = vst.msk [vmem:[#allocation2 + $0x119] sm:$0x1] %vm260, %v290
      %309 = vst.msk [vmem:[#allocation2 + $0x131] sm:$0x1] %vm260, %v291
      %310 = vst.msk [vmem:[#allocation2 + $0x149] sm:$0x1] %vm260, %v292
      %311 = vst.msk [vmem:[#allocation2 + $0x161] sm:$0x1] %vm260, %v293
      %312 = vst.msk [vmem:[#allocation2 + $0x179] sm:$0x1] %vm260, %v294
      %313 = vst.msk [vmem:[#allocation2 + $0x191] sm:$0x1] %vm260, %v295
      %314 = vst.msk [vmem:[#allocation2 + $0x1a9] sm:$0x1] %vm260, %v296
      %v315 = vld [vmem:[#allocation2] sm:$0xff]
      %v316 = vld [vmem:[#allocation2 + $0x8] sm:$0xff]
      %v317 = vld [vmem:[#allocation2 + $0x18] sm:$0xff]
      %v318 = vld [vmem:[#allocation2 + $0x20] sm:$0xff]
      %v319 = vld [vmem:[#allocation2 + $0x30] sm:$0xff]
      %v320 = vld [vmem:[#allocation2 + $0x38] sm:$0xff]
      %v321 = vld [vmem:[#allocation2 + $0x48] sm:$0xff]
      %v322 = vld [vmem:[#allocation2 + $0x50] sm:$0xff]
      %v323 = vld [vmem:[#allocation2 + $0x60] sm:$0xff]
      %v324 = vld [vmem:[#allocation2 + $0x68] sm:$0xff]
      %v325 = vld [vmem:[#allocation2 + $0x78] sm:$0xff]
      %v326 = vld [vmem:[#allocation2 + $0x80] sm:$0xff]
      %v327 = vld [vmem:[#allocation2 + $0x90] sm:$0xff]
      %v328 = vld [vmem:[#allocation2 + $0x98] sm:$0xff]
      %v329 = vld [vmem:[#allocation2 + $0xa8] sm:$0xff]
      %v330 = vld [vmem:[#allocation2 + $0xb0] sm:$0xff]
      %v331 = vld [vmem:[#allocation2 + $0xc0] sm:$0xff]
      %v332 = vld [vmem:[#allocation2 + $0xc8] sm:$0xff]
      %v333 = vld [vmem:[#allocation2 + $0xd8] sm:$0xff]
      %v334 = vld [vmem:[#allocation2 + $0xe0] sm:$0xff]
      %v335 = vld [vmem:[#allocation2 + $0xf0] sm:$0xff]
      %v336 = vld [vmem:[#allocation2 + $0xf8] sm:$0xff]
      %v337 = vld [vmem:[#allocation2 + $0x108] sm:$0xff]
      %v338 = vld [vmem:[#allocation2 + $0x110] sm:$0xff]
      %v339 = vld [vmem:[#allocation2 + $0x120] sm:$0xff]
      %v340 = vld [vmem:[#allocation2 + $0x128] sm:$0xff]
      %v341 = vld [vmem:[#allocation2 + $0x138] sm:$0xff]
      %v342 = vld [vmem:[#allocation2 + $0x140] sm:$0xff]
      %v343 = vld [vmem:[#allocation2 + $0x150] sm:$0xff]
      %v344 = vld [vmem:[#allocation2 + $0x158] sm:$0xff]
      %v345 = vld [vmem:[#allocation2 + $0x168] sm:$0xff]
      %v346 = vld [vmem:[#allocation2 + $0x170] sm:$0xff]
      %v347 = vld [vmem:[%s1] sm:$0xf]
      %v348 = vld [vmem:[#allocation2 + $0x1] sm:$0xff]
      %v349 = vld [vmem:[#allocation2 + $0x9] sm:$0xff]
      %v350 = vld [vmem:[#allocation2 + $0x19] sm:$0xff]
      %v351 = vld [vmem:[#allocation2 + $0x21] sm:$0xff]
      %v352 = vld [vmem:[#allocation2 + $0x31] sm:$0xff]
      %v353 = vld [vmem:[#allocation2 + $0x39] sm:$0xff]
      %v354 = vld [vmem:[#allocation2 + $0x49] sm:$0xff]
      %v355 = vld [vmem:[#allocation2 + $0x51] sm:$0xff]
      %v356 = vld [vmem:[#allocation2 + $0x61] sm:$0xff]
      %v357 = vld [vmem:[#allocation2 + $0x69] sm:$0xff]
      %v358 = vld [vmem:[#allocation2 + $0x79] sm:$0xff]
      %v359 = vld [vmem:[#allocation2 + $0x81] sm:$0xff]
      %v360 = vld [vmem:[#allocation2 + $0x91] sm:$0xff]
      %v361 = vld [vmem:[#allocation2 + $0x99] sm:$0xff]
      %v362 = vld [vmem:[#allocation2 + $0xa9] sm:$0xff]
      %v363 = vld [vmem:[#allocation2 + $0xb1] sm:$0xff]
      %v364 = vld [vmem:[#allocation2 + $0xc1] sm:$0xff]
      %v365 = vld [vmem:[#allocation2 + $0xc9] sm:$0xff]
      %v366 = vld [vmem:[#allocation2 + $0xd9] sm:$0xff]
      %v367 = vld [vmem:[#allocation2 + $0xe1] sm:$0xff]
      %v368 = vld [vmem:[#allocation2 + $0xf1] sm:$0xff]
      %v369 = vld [vmem:[#allocation2 + $0xf9] sm:$0xff]
      %v370 = vld [vmem:[#allocation2 + $0x109] sm:$0xff]
      %v371 = vld [vmem:[#allocation2 + $0x111] sm:$0xff]
      %v372 = vld [vmem:[#allocation2 + $0x121] sm:$0xff]
      %v373 = vld [vmem:[#allocation2 + $0x129] sm:$0xff]
      %v374 = vld [vmem:[#allocation2 + $0x139] sm:$0xff]
      %v375 = vld [vmem:[#allocation2 + $0x141] sm:$0xff]
      %v376 = vld [vmem:[#allocation2 + $0x151] sm:$0xff]
      %v377 = vld [vmem:[#allocation2 + $0x159] sm:$0xff]
      %v378 = vld [vmem:[#allocation2 + $0x169] sm:$0xff]
      %v379 = vld [vmem:[#allocation2 + $0x171] sm:$0xff]
      %s380 = scalar_lea.vmem %s1, 4
      %v381 = vld [vmem:[%s380] sm:$0xf]
      %v383 = vsel %vm204, %v348, 0
      %v386 = vsel %vm204, %v349, 0
      %v389 = vsel %vm204, %v350, 0
      %v392 = vsel %vm204, %v351, 0
      %v395 = vsel %vm204, %v352, 0
      %v398 = vsel %vm204, %v353, 0
      %v401 = vsel %vm204, %v354, 0
      %v404 = vsel %vm204, %v355, 0
      %v407 = vsel %vm204, %v356, 0
      %v410 = vsel %vm204, %v357, 0
      %v413 = vsel %vm204, %v358, 0
      %v416 = vsel %vm204, %v359, 0
      %v419 = vsel %vm204, %v360, 0
      %v422 = vsel %vm204, %v361, 0
      %v425 = vsel %vm204, %v362, 0
      %v428 = vsel %vm204, %v363, 0
      %v431 = vsel %vm204, %v364, 0
      %v434 = vsel %vm204, %v365, 0
      %v437 = vsel %vm204, %v366, 0
      %v440 = vsel %vm204, %v367, 0
      %v443 = vsel %vm204, %v368, 0
      %v446 = vsel %vm204, %v369, 0
      %v449 = vsel %vm204, %v370, 0
      %v452 = vsel %vm204, %v371, 0
      %v455 = vsel %vm204, %v372, 0
      %v458 = vsel %vm204, %v373, 0
      %v461 = vsel %vm204, %v374, 0
      %v464 = vsel %vm204, %v375, 0
      %v467 = vsel %vm204, %v376, 0
      %v470 = vsel %vm204, %v377, 0
      %v473 = vsel %vm204, %v378, 0
      %v476 = vsel %vm204, %v379, 0
      %vm478 = vcmask 1043456
      %v480 = vsel %vm478, %v381, 0
      %482 = vmatpush.msra.mxu0 0.0
      %483 = vmatpush.msra.mxu0 0.0
      %484 = vmatpush.msra.mxu0 0.0
      %485 = vmatpush.msra.mxu0 0.0
      %486 = vmatpush.msra.mxu0 0.0
      %487 = vmatpush.msra.mxu0 0.0
      %488 = vmatpush.msra.mxu0 0.0
      %489 = vmatpush.msra.mxu0 0.0
      %490 = vmatpush.msra.mxu0 0.0
      %491 = vmatpush.msra.mxu0 0.0
      %492 = vmatpush.msra.mxu0 0.0
      %493 = vmatpush.msra.mxu0 0.0
      %494 = vmatpush.msra.mxu0 0.0
      %495 = vmatpush.msra.mxu0 0.0
      %496 = vmatpush.msra.mxu0 0.0
      %497 = vmatpush.msra.mxu0 %v480
      %498 = vmatmul.f32.gmra.mxu0 %v383
      %v499 = vpop.f32.mrf.mxu0
      %v500 = vadd.f32 0.0, %v499
      %501 = vmatmul.f32.gmra.mxu0 %v386
      %v502 = vpop.f32.mrf.mxu0
      %v503 = vadd.f32 0.0, %v502
      %504 = vmatmul.f32.gmra.mxu0 %v389
      %v505 = vpop.f32.mrf.mxu0
      %v506 = vadd.f32 0.0, %v505
      %507 = vmatmul.f32.gmra.mxu0 %v392
      %v508 = vpop.f32.mrf.mxu0
      %v509 = vadd.f32 0.0, %v508
      %510 = vmatmul.f32.gmra.mxu0 %v395
      %v511 = vpop.f32.mrf.mxu0
      %v512 = vadd.f32 0.0, %v511
      %513 = vmatmul.f32.gmra.mxu0 %v398
      %v514 = vpop.f32.mrf.mxu0
      %v515 = vadd.f32 0.0, %v514
      %516 = vmatmul.f32.gmra.mxu0 %v401
      %v517 = vpop.f32.mrf.mxu0
      %v518 = vadd.f32 0.0, %v517
      %519 = vmatmul.f32.gmra.mxu0 %v404
      %v520 = vpop.f32.mrf.mxu0
      %v521 = vadd.f32 0.0, %v520
      %522 = vmatmul.f32.gmra.mxu0 %v407
      %v523 = vpop.f32.mrf.mxu0
      %v524 = vadd.f32 0.0, %v523
      %525 = vmatmul.f32.gmra.mxu0 %v410
      %v526 = vpop.f32.mrf.mxu0
      %v527 = vadd.f32 0.0, %v526
      %528 = vmatmul.f32.gmra.mxu0 %v413
      %v529 = vpop.f32.mrf.mxu0
      %v530 = vadd.f32 0.0, %v529
      %531 = vmatmul.f32.gmra.mxu0 %v416
      %v532 = vpop.f32.mrf.mxu0
      %v533 = vadd.f32 0.0, %v532
      %534 = vmatmul.f32.gmra.mxu0 %v419
      %v535 = vpop.f32.mrf.mxu0
      %v536 = vadd.f32 0.0, %v535
      %537 = vmatmul.f32.gmra.mxu0 %v422
      %v538 = vpop.f32.mrf.mxu0
      %v539 = vadd.f32 0.0, %v538
      %540 = vmatmul.f32.gmra.mxu0 %v425
      %v541 = vpop.f32.mrf.mxu0
      %v542 = vadd.f32 0.0, %v541
      %543 = vmatmul.f32.gmra.mxu0 %v428
      %v544 = vpop.f32.mrf.mxu0
      %v545 = vadd.f32 0.0, %v544
      %546 = vmatmul.f32.gmra.mxu0 %v431
      %v547 = vpop.f32.mrf.mxu0
      %v548 = vadd.f32 0.0, %v547
      %549 = vmatmul.f32.gmra.mxu0 %v434
      %v550 = vpop.f32.mrf.mxu0
      %v551 = vadd.f32 0.0, %v550
      %552 = vmatmul.f32.gmra.mxu0 %v437
      %v553 = vpop.f32.mrf.mxu0
      %v554 = vadd.f32 0.0, %v553
      %555 = vmatmul.f32.gmra.mxu0 %v440
      %v556 = vpop.f32.mrf.mxu0
      %v557 = vadd.f32 0.0, %v556
      %558 = vmatmul.f32.gmra.mxu0 %v443
      %v559 = vpop.f32.mrf.mxu0
      %v560 = vadd.f32 0.0, %v559
      %561 = vmatmul.f32.gmra.mxu0 %v446
      %v562 = vpop.f32.mrf.mxu0
      %v563 = vadd.f32 0.0, %v562
      %564 = vmatmul.f32.gmra.mxu0 %v449
      %v565 = vpop.f32.mrf.mxu0
      %v566 = vadd.f32 0.0, %v565
      %567 = vmatmul.f32.gmra.mxu0 %v452
      %v568 = vpop.f32.mrf.mxu0
      %v569 = vadd.f32 0.0, %v568
      %570 = vmatmul.f32.gmra.mxu0 %v455
      %v571 = vpop.f32.mrf.mxu0
      %v572 = vadd.f32 0.0, %v571
      %573 = vmatmul.f32.gmra.mxu0 %v458
      %v574 = vpop.f32.mrf.mxu0
      %v575 = vadd.f32 0.0, %v574
      %576 = vmatmul.f32.gmra.mxu0 %v461
      %v577 = vpop.f32.mrf.mxu0
      %v578 = vadd.f32 0.0, %v577
      %579 = vmatmul.f32.gmra.mxu0 %v464
      %v580 = vpop.f32.mrf.mxu0
      %v581 = vadd.f32 0.0, %v580
      %582 = vmatmul.f32.gmra.mxu0 %v467
      %v583 = vpop.f32.mrf.mxu0
      %v584 = vadd.f32 0.0, %v583
      %585 = vmatmul.f32.gmra.mxu0 %v470
      %v586 = vpop.f32.mrf.mxu0
      %v587 = vadd.f32 0.0, %v586
      %588 = vmatmul.f32.gmra.mxu0 %v473
      %v589 = vpop.f32.mrf.mxu0
      %v590 = vadd.f32 0.0, %v589
      %591 = vmatmul.f32.gmra.mxu0 %v476
      %v592 = vpop.f32.mrf.mxu0
      %v593 = vadd.f32 0.0, %v592
      %594 = vdwg.mxu0
      %v596 = vsel %vm204, %v315, 0
      %v599 = vsel %vm204, %v316, 0
      %v602 = vsel %vm204, %v317, 0
      %v605 = vsel %vm204, %v318, 0
      %v608 = vsel %vm204, %v319, 0
      %v611 = vsel %vm204, %v320, 0
      %v614 = vsel %vm204, %v321, 0
      %v617 = vsel %vm204, %v322, 0
      %v620 = vsel %vm204, %v323, 0
      %v623 = vsel %vm204, %v324, 0
      %v626 = vsel %vm204, %v325, 0
      %v629 = vsel %vm204, %v326, 0
      %v632 = vsel %vm204, %v327, 0
      %v635 = vsel %vm204, %v328, 0
      %v638 = vsel %vm204, %v329, 0
      %v641 = vsel %vm204, %v330, 0
      %v644 = vsel %vm204, %v331, 0
      %v647 = vsel %vm204, %v332, 0
      %v650 = vsel %vm204, %v333, 0
      %v653 = vsel %vm204, %v334, 0
      %v656 = vsel %vm204, %v335, 0
      %v659 = vsel %vm204, %v336, 0
      %v662 = vsel %vm204, %v337, 0
      %v665 = vsel %vm204, %v338, 0
      %v668 = vsel %vm204, %v339, 0
      %v671 = vsel %vm204, %v340, 0
      %v674 = vsel %vm204, %v341, 0
      %v677 = vsel %vm204, %v342, 0
      %v680 = vsel %vm204, %v343, 0
      %v683 = vsel %vm204, %v344, 0
      %v686 = vsel %vm204, %v345, 0
      %v689 = vsel %vm204, %v346, 0
      %v692 = vsel %vm478, %v347, 0
      %694 = vmatpush.msra.mxu0 0.0
      %695 = vmatpush.msra.mxu0 0.0
      %696 = vmatpush.msra.mxu0 0.0
      %697 = vmatpush.msra.mxu0 0.0
      %698 = vmatpush.msra.mxu0 0.0
      %699 = vmatpush.msra.mxu0 0.0
      %700 = vmatpush.msra.mxu0 0.0
      %701 = vmatpush.msra.mxu0 0.0
      %702 = vmatpush.msra.mxu0 0.0
      %703 = vmatpush.msra.mxu0 0.0
      %704 = vmatpush.msra.mxu0 0.0
      %705 = vmatpush.msra.mxu0 0.0
      %706 = vmatpush.msra.mxu0 0.0
      %707 = vmatpush.msra.mxu0 0.0
      %708 = vmatpush.msra.mxu0 0.0
      %709 = vmatpush.msra.mxu0 %v692
      %710 = vmatmul.f32.gmra.mxu0 %v596
      %v711 = vpop.f32.mrf.mxu0
      %v712 = vadd.f32 %v500, %v711
      %713 = vmatmul.f32.gmra.mxu0 %v599
      %v714 = vpop.f32.mrf.mxu0
      %v715 = vadd.f32 %v503, %v714
      %716 = vmatmul.f32.gmra.mxu0 %v602
      %v717 = vpop.f32.mrf.mxu0
      %v718 = vadd.f32 %v506, %v717
      %719 = vmatmul.f32.gmra.mxu0 %v605
      %v720 = vpop.f32.mrf.mxu0
      %v721 = vadd.f32 %v509, %v720
      %722 = vmatmul.f32.gmra.mxu0 %v608
      %v723 = vpop.f32.mrf.mxu0
      %v724 = vadd.f32 %v512, %v723
      %725 = vmatmul.f32.gmra.mxu0 %v611
      %v726 = vpop.f32.mrf.mxu0
      %v727 = vadd.f32 %v515, %v726
      %728 = vmatmul.f32.gmra.mxu0 %v614
      %v729 = vpop.f32.mrf.mxu0
      %v730 = vadd.f32 %v518, %v729
      %731 = vmatmul.f32.gmra.mxu0 %v617
      %v732 = vpop.f32.mrf.mxu0
      %v733 = vadd.f32 %v521, %v732
      %734 = vmatmul.f32.gmra.mxu0 %v620
      %v735 = vpop.f32.mrf.mxu0
      %v736 = vadd.f32 %v524, %v735
      %737 = vmatmul.f32.gmra.mxu0 %v623
      %v738 = vpop.f32.mrf.mxu0
      %v739 = vadd.f32 %v527, %v738
      %740 = vmatmul.f32.gmra.mxu0 %v626
      %v741 = vpop.f32.mrf.mxu0
      %v742 = vadd.f32 %v530, %v741
      %743 = vmatmul.f32.gmra.mxu0 %v629
      %v744 = vpop.f32.mrf.mxu0
      %v745 = vadd.f32 %v533, %v744
      %746 = vmatmul.f32.gmra.mxu0 %v632
      %v747 = vpop.f32.mrf.mxu0
      %v748 = vadd.f32 %v536, %v747
      %749 = vmatmul.f32.gmra.mxu0 %v635
      %v750 = vpop.f32.mrf.mxu0
      %v751 = vadd.f32 %v539, %v750
      %752 = vmatmul.f32.gmra.mxu0 %v638
      %v753 = vpop.f32.mrf.mxu0
      %v754 = vadd.f32 %v542, %v753
      %755 = vmatmul.f32.gmra.mxu0 %v641
      %v756 = vpop.f32.mrf.mxu0
      %v757 = vadd.f32 %v545, %v756
      %758 = vmatmul.f32.gmra.mxu0 %v644
      %v759 = vpop.f32.mrf.mxu0
      %v760 = vadd.f32 %v548, %v759
      %761 = vmatmul.f32.gmra.mxu0 %v647
      %v762 = vpop.f32.mrf.mxu0
      %v763 = vadd.f32 %v551, %v762
      %764 = vmatmul.f32.gmra.mxu0 %v650
      %v765 = vpop.f32.mrf.mxu0
      %v766 = vadd.f32 %v554, %v765
      %767 = vmatmul.f32.gmra.mxu0 %v653
      %v768 = vpop.f32.mrf.mxu0
      %v769 = vadd.f32 %v557, %v768
      %770 = vmatmul.f32.gmra.mxu0 %v656
      %v771 = vpop.f32.mrf.mxu0
      %v772 = vadd.f32 %v560, %v771
      %773 = vmatmul.f32.gmra.mxu0 %v659
      %v774 = vpop.f32.mrf.mxu0
      %v775 = vadd.f32 %v563, %v774
      %776 = vmatmul.f32.gmra.mxu0 %v662
      %v777 = vpop.f32.mrf.mxu0
      %v778 = vadd.f32 %v566, %v777
      %779 = vmatmul.f32.gmra.mxu0 %v665
      %v780 = vpop.f32.mrf.mxu0
      %v781 = vadd.f32 %v569, %v780
      %782 = vmatmul.f32.gmra.mxu0 %v668
      %v783 = vpop.f32.mrf.mxu0
      %v784 = vadd.f32 %v572, %v783
      %785 = vmatmul.f32.gmra.mxu0 %v671
      %v786 = vpop.f32.mrf.mxu0
      %v787 = vadd.f32 %v575, %v786
      %788 = vmatmul.f32.gmra.mxu0 %v674
      %v789 = vpop.f32.mrf.mxu0
      %v790 = vadd.f32 %v578, %v789
      %791 = vmatmul.f32.gmra.mxu0 %v677
      %v792 = vpop.f32.mrf.mxu0
      %v793 = vadd.f32 %v581, %v792
      %794 = vmatmul.f32.gmra.mxu0 %v680
      %v795 = vpop.f32.mrf.mxu0
      %v796 = vadd.f32 %v584, %v795
      %797 = vmatmul.f32.gmra.mxu0 %v683
      %v798 = vpop.f32.mrf.mxu0
      %v799 = vadd.f32 %v587, %v798
      %800 = vmatmul.f32.gmra.mxu0 %v686
      %v801 = vpop.f32.mrf.mxu0
      %v802 = vadd.f32 %v590, %v801
      %803 = vmatmul.f32.gmra.mxu0 %v689
      %v804 = vpop.f32.mrf.mxu0
      %v805 = vadd.f32 %v593, %v804
      %806 = vdwg.mxu0
      %v807 = vld [vmem:[#allocation2 + $0x2] sm:$0xff]
      %v808 = vld [vmem:[#allocation2 + $0xa] sm:$0xff]
      %v809 = vld [vmem:[#allocation2 + $0x1a] sm:$0xff]
      %v810 = vld [vmem:[#allocation2 + $0x22] sm:$0xff]
      %v811 = vld [vmem:[#allocation2 + $0x32] sm:$0xff]
      %v812 = vld [vmem:[#allocation2 + $0x3a] sm:$0xff]
      %v813 = vld [vmem:[#allocation2 + $0x4a] sm:$0xff]
      %v814 = vld [vmem:[#allocation2 + $0x52] sm:$0xff]
      %v815 = vld [vmem:[#allocation2 + $0x62] sm:$0xff]
      %v816 = vld [vmem:[#allocation2 + $0x6a] sm:$0xff]
      %v817 = vld [vmem:[#allocation2 + $0x7a] sm:$0xff]
      %v818 = vld [vmem:[#allocation2 + $0x82] sm:$0xff]
      %v819 = vld [vmem:[#allocation2 + $0x92] sm:$0xff]
      %v820 = vld [vmem:[#allocation2 + $0x9a] sm:$0xff]
      %v821 = vld [vmem:[#allocation2 + $0xaa] sm:$0xff]
      %v822 = vld [vmem:[#allocation2 + $0xb2] sm:$0xff]
      %v823 = vld [vmem:[#allocation2 + $0xc2] sm:$0xff]
      %v824 = vld [vmem:[#allocation2 + $0xca] sm:$0xff]
      %v825 = vld [vmem:[#allocation2 + $0xda] sm:$0xff]
      %v826 = vld [vmem:[#allocation2 + $0xe2] sm:$0xff]
      %v827 = vld [vmem:[#allocation2 + $0xf2] sm:$0xff]
      %v828 = vld [vmem:[#allocation2 + $0xfa] sm:$0xff]
      %v829 = vld [vmem:[#allocation2 + $0x10a] sm:$0xff]
      %v830 = vld [vmem:[#allocation2 + $0x112] sm:$0xff]
      %v831 = vld [vmem:[#allocation2 + $0x122] sm:$0xff]
      %v832 = vld [vmem:[#allocation2 + $0x12a] sm:$0xff]
      %v833 = vld [vmem:[#allocation2 + $0x13a] sm:$0xff]
      %v834 = vld [vmem:[#allocation2 + $0x142] sm:$0xff]
      %v835 = vld [vmem:[#allocation2 + $0x152] sm:$0xff]
      %v836 = vld [vmem:[#allocation2 + $0x15a] sm:$0xff]
      %v837 = vld [vmem:[#allocation2 + $0x16a] sm:$0xff]
      %v838 = vld [vmem:[#allocation2 + $0x172] sm:$0xff]
      %s839 = scalar_lea.vmem %s1, 8
      %v840 = vld [vmem:[%s839] sm:$0xf]
      %v842 = vsel %vm204, %v807, 0
      %v845 = vsel %vm204, %v808, 0
      %v848 = vsel %vm204, %v809, 0
      %v851 = vsel %vm204, %v810, 0
      %v854 = vsel %vm204, %v811, 0
      %v857 = vsel %vm204, %v812, 0
      %v860 = vsel %vm204, %v813, 0
      %v863 = vsel %vm204, %v814, 0
      %v866 = vsel %vm204, %v815, 0
      %v869 = vsel %vm204, %v816, 0
      %v872 = vsel %vm204, %v817, 0
      %v875 = vsel %vm204, %v818, 0
      %v878 = vsel %vm204, %v819, 0
      %v881 = vsel %vm204, %v820, 0
      %v884 = vsel %vm204, %v821, 0
      %v887 = vsel %vm204, %v822, 0
      %v890 = vsel %vm204, %v823, 0
      %v893 = vsel %vm204, %v824, 0
      %v896 = vsel %vm204, %v825, 0
      %v899 = vsel %vm204, %v826, 0
      %v902 = vsel %vm204, %v827, 0
      %v905 = vsel %vm204, %v828, 0
      %v908 = vsel %vm204, %v829, 0
      %v911 = vsel %vm204, %v830, 0
      %v914 = vsel %vm204, %v831, 0
      %v917 = vsel %vm204, %v832, 0
      %v920 = vsel %vm204, %v833, 0
      %v923 = vsel %vm204, %v834, 0
      %v926 = vsel %vm204, %v835, 0
      %v929 = vsel %vm204, %v836, 0
      %v932 = vsel %vm204, %v837, 0
      %v935 = vsel %vm204, %v838, 0
      %v938 = vsel %vm478, %v840, 0
      %940 = vmatpush.msra.mxu0 0.0
      %941 = vmatpush.msra.mxu0 0.0
      %942 = vmatpush.msra.mxu0 0.0
      %943 = vmatpush.msra.mxu0 0.0
      %944 = vmatpush.msra.mxu0 0.0
      %945 = vmatpush.msra.mxu0 0.0
      %946 = vmatpush.msra.mxu0 0.0
      %947 = vmatpush.msra.mxu0 0.0
      %948 = vmatpush.msra.mxu0 0.0
      %949 = vmatpush.msra.mxu0 0.0
      %950 = vmatpush.msra.mxu0 0.0
      %951 = vmatpush.msra.mxu0 0.0
      %952 = vmatpush.msra.mxu0 0.0
      %953 = vmatpush.msra.mxu0 0.0
      %954 = vmatpush.msra.mxu0 0.0
      %955 = vmatpush.msra.mxu0 %v938
      %956 = vmatmul.f32.gmra.mxu0 %v842
      %v957 = vpop.f32.mrf.mxu0
      %v958 = vadd.f32 0.0, %v957
      %959 = vmatmul.f32.gmra.mxu0 %v845
      %v960 = vpop.f32.mrf.mxu0
      %v961 = vadd.f32 0.0, %v960
      %962 = vmatmul.f32.gmra.mxu0 %v848
      %v963 = vpop.f32.mrf.mxu0
      %v964 = vadd.f32 0.0, %v963
      %965 = vmatmul.f32.gmra.mxu0 %v851
      %v966 = vpop.f32.mrf.mxu0
      %v967 = vadd.f32 0.0, %v966
      %968 = vmatmul.f32.gmra.mxu0 %v854
      %v969 = vpop.f32.mrf.mxu0
      %v970 = vadd.f32 0.0, %v969
      %971 = vmatmul.f32.gmra.mxu0 %v857
      %v972 = vpop.f32.mrf.mxu0
      %v973 = vadd.f32 0.0, %v972
      %974 = vmatmul.f32.gmra.mxu0 %v860
      %v975 = vpop.f32.mrf.mxu0
      %v976 = vadd.f32 0.0, %v975
      %977 = vmatmul.f32.gmra.mxu0 %v863
      %v978 = vpop.f32.mrf.mxu0
      %v979 = vadd.f32 0.0, %v978
      %980 = vmatmul.f32.gmra.mxu0 %v866
      %v981 = vpop.f32.mrf.mxu0
      %v982 = vadd.f32 0.0, %v981
      %983 = vmatmul.f32.gmra.mxu0 %v869
      %v984 = vpop.f32.mrf.mxu0
      %v985 = vadd.f32 0.0, %v984
      %986 = vmatmul.f32.gmra.mxu0 %v872
      %v987 = vpop.f32.mrf.mxu0
      %v988 = vadd.f32 0.0, %v987
      %989 = vmatmul.f32.gmra.mxu0 %v875
      %v990 = vpop.f32.mrf.mxu0
      %v991 = vadd.f32 0.0, %v990
      %992 = vmatmul.f32.gmra.mxu0 %v878
      %v993 = vpop.f32.mrf.mxu0
      %v994 = vadd.f32 0.0, %v993
      %995 = vmatmul.f32.gmra.mxu0 %v881
      %v996 = vpop.f32.mrf.mxu0
      %v997 = vadd.f32 0.0, %v996
      %998 = vmatmul.f32.gmra.mxu0 %v884
      %v999 = vpop.f32.mrf.mxu0
      %v1000 = vadd.f32 0.0, %v999
      %1001 = vmatmul.f32.gmra.mxu0 %v887
      %v1002 = vpop.f32.mrf.mxu0
      %v1003 = vadd.f32 0.0, %v1002
      %1004 = vmatmul.f32.gmra.mxu0 %v890
      %v1005 = vpop.f32.mrf.mxu0
      %v1006 = vadd.f32 0.0, %v1005
      %1007 = vmatmul.f32.gmra.mxu0 %v893
      %v1008 = vpop.f32.mrf.mxu0
      %v1009 = vadd.f32 0.0, %v1008
      %1010 = vmatmul.f32.gmra.mxu0 %v896
      %v1011 = vpop.f32.mrf.mxu0
      %v1012 = vadd.f32 0.0, %v1011
      %1013 = vmatmul.f32.gmra.mxu0 %v899
      %v1014 = vpop.f32.mrf.mxu0
      %v1015 = vadd.f32 0.0, %v1014
      %1016 = vmatmul.f32.gmra.mxu0 %v902
      %v1017 = vpop.f32.mrf.mxu0
      %v1018 = vadd.f32 0.0, %v1017
      %1019 = vmatmul.f32.gmra.mxu0 %v905
      %v1020 = vpop.f32.mrf.mxu0
      %v1021 = vadd.f32 0.0, %v1020
      %1022 = vmatmul.f32.gmra.mxu0 %v908
      %v1023 = vpop.f32.mrf.mxu0
      %v1024 = vadd.f32 0.0, %v1023
      %1025 = vmatmul.f32.gmra.mxu0 %v911
      %v1026 = vpop.f32.mrf.mxu0
      %v1027 = vadd.f32 0.0, %v1026
      %1028 = vmatmul.f32.gmra.mxu0 %v914
      %v1029 = vpop.f32.mrf.mxu0
      %v1030 = vadd.f32 0.0, %v1029
      %1031 = vmatmul.f32.gmra.mxu0 %v917
      %v1032 = vpop.f32.mrf.mxu0
      %v1033 = vadd.f32 0.0, %v1032
      %1034 = vmatmul.f32.gmra.mxu0 %v920
      %v1035 = vpop.f32.mrf.mxu0
      %v1036 = vadd.f32 0.0, %v1035
      %1037 = vmatmul.f32.gmra.mxu0 %v923
      %v1038 = vpop.f32.mrf.mxu0
      %v1039 = vadd.f32 0.0, %v1038
      %1040 = vmatmul.f32.gmra.mxu0 %v926
      %v1041 = vpop.f32.mrf.mxu0
      %v1042 = vadd.f32 0.0, %v1041
      %1043 = vmatmul.f32.gmra.mxu0 %v929
      %v1044 = vpop.f32.mrf.mxu0
      %v1045 = vadd.f32 0.0, %v1044
      %1046 = vmatmul.f32.gmra.mxu0 %v932
      %v1047 = vpop.f32.mrf.mxu0
      %v1048 = vadd.f32 0.0, %v1047
      %1049 = vmatmul.f32.gmra.mxu0 %v935
      %v1050 = vpop.f32.mrf.mxu0
      %v1051 = vadd.f32 0.0, %v1050
      %1052 = vdwg.mxu0
      %v1053 = vadd.f32 %v712, %v958
      %v1054 = vadd.f32 %v715, %v961
      %v1055 = vadd.f32 %v718, %v964
      %v1056 = vadd.f32 %v721, %v967
      %v1057 = vadd.f32 %v724, %v970
      %v1058 = vadd.f32 %v727, %v973
      %v1059 = vadd.f32 %v730, %v976
      %v1060 = vadd.f32 %v733, %v979
      %v1061 = vadd.f32 %v736, %v982
      %v1062 = vadd.f32 %v739, %v985
      %v1063 = vadd.f32 %v742, %v988
      %v1064 = vadd.f32 %v745, %v991
      %v1065 = vadd.f32 %v748, %v994
      %v1066 = vadd.f32 %v751, %v997
      %v1067 = vadd.f32 %v754, %v1000
      %v1068 = vadd.f32 %v757, %v1003
      %v1069 = vadd.f32 %v760, %v1006
      %v1070 = vadd.f32 %v763, %v1009
      %v1071 = vadd.f32 %v766, %v1012
      %v1072 = vadd.f32 %v769, %v1015
      %v1073 = vadd.f32 %v772, %v1018
      %v1074 = vadd.f32 %v775, %v1021
      %v1075 = vadd.f32 %v778, %v1024
      %v1076 = vadd.f32 %v781, %v1027
      %v1077 = vadd.f32 %v784, %v1030
      %v1078 = vadd.f32 %v787, %v1033
      %v1079 = vadd.f32 %v790, %v1036
      %v1080 = vadd.f32 %v793, %v1039
      %v1081 = vadd.f32 %v796, %v1042
      %v1082 = vadd.f32 %v799, %v1045
      %v1083 = vadd.f32 %v802, %v1048
      %v1084 = vadd.f32 %v805, %v1051
      %v1085 = vld [vmem:[%s203] sm:$0xff]
      %v1086 = vld [vmem:[%s203 + $0x8] sm:$0xff]
      %v1087 = vld [vmem:[%s203 + $0x18] sm:$0xff]
      %v1088 = vld [vmem:[%s203 + $0x20] sm:$0xff]
      %v1089 = vld [vmem:[%s203 + $0x30] sm:$0xff]
      %v1090 = vld [vmem:[%s203 + $0x38] sm:$0xff]
      %v1091 = vld [vmem:[%s203 + $0x48] sm:$0xff]
      %v1092 = vld [vmem:[%s203 + $0x50] sm:$0xff]
      %v1093 = vld [vmem:[%s203 + $0x60] sm:$0xff]
      %v1094 = vld [vmem:[%s203 + $0x68] sm:$0xff]
      %v1095 = vld [vmem:[%s203 + $0x78] sm:$0xff]
      %v1096 = vld [vmem:[%s203 + $0x80] sm:$0xff]
      %v1097 = vld [vmem:[%s203 + $0x90] sm:$0xff]
      %v1098 = vld [vmem:[%s203 + $0x98] sm:$0xff]
      %v1099 = vld [vmem:[%s203 + $0xa8] sm:$0xff]
      %v1100 = vld [vmem:[%s203 + $0xb0] sm:$0xff]
      %v1101 = vld [vmem:[%s203 + $0xc0] sm:$0xff]
      %v1102 = vld [vmem:[%s203 + $0xc8] sm:$0xff]
      %v1103 = vld [vmem:[%s203 + $0xd8] sm:$0xff]
      %v1104 = vld [vmem:[%s203 + $0xe0] sm:$0xff]
      %v1105 = vld [vmem:[%s203 + $0xf0] sm:$0xff]
      %v1106 = vld [vmem:[%s203 + $0xf8] sm:$0xff]
      %v1107 = vld [vmem:[%s203 + $0x108] sm:$0xff]
      %v1108 = vld [vmem:[%s203 + $0x110] sm:$0xff]
      %v1109 = vld [vmem:[%s203 + $0x120] sm:$0xff]
      %v1110 = vld [vmem:[%s203 + $0x128] sm:$0xff]
      %v1111 = vld [vmem:[%s203 + $0x138] sm:$0xff]
      %v1112 = vld [vmem:[%s203 + $0x140] sm:$0xff]
      %v1113 = vld [vmem:[%s203 + $0x150] sm:$0xff]
      %v1114 = vld [vmem:[%s203 + $0x158] sm:$0xff]
      %v1115 = vld [vmem:[%s203 + $0x168] sm:$0xff]
      %v1116 = vld [vmem:[%s203 + $0x170] sm:$0xff]
      %s1117 = scalar_lea.vmem %s1, 12
      %v1118 = vld [vmem:[%s1117] sm:$0xf]
      %v1120 = vsel %vm204, %v1085, 0
      %v1123 = vsel %vm204, %v1086, 0
      %v1126 = vsel %vm204, %v1087, 0
      %v1129 = vsel %vm204, %v1088, 0
      %v1132 = vsel %vm204, %v1089, 0
      %v1135 = vsel %vm204, %v1090, 0
      %v1138 = vsel %vm204, %v1091, 0
      %v1141 = vsel %vm204, %v1092, 0
      %v1144 = vsel %vm204, %v1093, 0
      %v1147 = vsel %vm204, %v1094, 0
      %v1150 = vsel %vm204, %v1095, 0
      %v1153 = vsel %vm204, %v1096, 0
      %v1156 = vsel %vm204, %v1097, 0
      %v1159 = vsel %vm204, %v1098, 0
      %v1162 = vsel %vm204, %v1099, 0
      %v1165 = vsel %vm204, %v1100, 0
      %v1168 = vsel %vm204, %v1101, 0
      %v1171 = vsel %vm204, %v1102, 0
      %v1174 = vsel %vm204, %v1103, 0
      %v1177 = vsel %vm204, %v1104, 0
      %v1180 = vsel %vm204, %v1105, 0
      %v1183 = vsel %vm204, %v1106, 0
      %v1186 = vsel %vm204, %v1107, 0
      %v1189 = vsel %vm204, %v1108, 0
      %v1192 = vsel %vm204, %v1109, 0
      %v1195 = vsel %vm204, %v1110, 0
      %v1198 = vsel %vm204, %v1111, 0
      %v1201 = vsel %vm204, %v1112, 0
      %v1204 = vsel %vm204, %v1113, 0
      %v1207 = vsel %vm204, %v1114, 0
      %v1210 = vsel %vm204, %v1115, 0
      %v1213 = vsel %vm204, %v1116, 0
      %v1216 = vsel %vm478, %v1118, 0
      %1218 = vmatpush.msra.mxu0 0.0
      %1219 = vmatpush.msra.mxu0 0.0
      %1220 = vmatpush.msra.mxu0 0.0
      %1221 = vmatpush.msra.mxu0 0.0
      %1222 = vmatpush.msra.mxu0 0.0
      %1223 = vmatpush.msra.mxu0 0.0
      %1224 = vmatpush.msra.mxu0 0.0
      %1225 = vmatpush.msra.mxu0 0.0
      %1226 = vmatpush.msra.mxu0 0.0
      %1227 = vmatpush.msra.mxu0 0.0
      %1228 = vmatpush.msra.mxu0 0.0
      %1229 = vmatpush.msra.mxu0 0.0
      %1230 = vmatpush.msra.mxu0 0.0
      %1231 = vmatpush.msra.mxu0 0.0
      %1232 = vmatpush.msra.mxu0 0.0
      %1233 = vmatpush.msra.mxu0 %v1216
      %1234 = vmatmul.f32.gmra.mxu0 %v1120
      %v1235 = vpop.f32.mrf.mxu0
      %v1236 = vadd.f32 0.0, %v1235
      %1237 = vmatmul.f32.gmra.mxu0 %v1123
      %v1238 = vpop.f32.mrf.mxu0
      %v1239 = vadd.f32 0.0, %v1238
      %1240 = vmatmul.f32.gmra.mxu0 %v1126
      %v1241 = vpop.f32.mrf.mxu0
      %v1242 = vadd.f32 0.0, %v1241
      %1243 = vmatmul.f32.gmra.mxu0 %v1129
      %v1244 = vpop.f32.mrf.mxu0
      %v1245 = vadd.f32 0.0, %v1244
      %1246 = vmatmul.f32.gmra.mxu0 %v1132
      %v1247 = vpop.f32.mrf.mxu0
      %v1248 = vadd.f32 0.0, %v1247
      %1249 = vmatmul.f32.gmra.mxu0 %v1135
      %v1250 = vpop.f32.mrf.mxu0
      %v1251 = vadd.f32 0.0, %v1250
      %1252 = vmatmul.f32.gmra.mxu0 %v1138
      %v1253 = vpop.f32.mrf.mxu0
      %v1254 = vadd.f32 0.0, %v1253
      %1255 = vmatmul.f32.gmra.mxu0 %v1141
      %v1256 = vpop.f32.mrf.mxu0
      %v1257 = vadd.f32 0.0, %v1256
      %1258 = vmatmul.f32.gmra.mxu0 %v1144
      %v1259 = vpop.f32.mrf.mxu0
      %v1260 = vadd.f32 0.0, %v1259
      %1261 = vmatmul.f32.gmra.mxu0 %v1147
      %v1262 = vpop.f32.mrf.mxu0
      %v1263 = vadd.f32 0.0, %v1262
      %1264 = vmatmul.f32.gmra.mxu0 %v1150
      %v1265 = vpop.f32.mrf.mxu0
      %v1266 = vadd.f32 0.0, %v1265
      %1267 = vmatmul.f32.gmra.mxu0 %v1153
      %v1268 = vpop.f32.mrf.mxu0
      %v1269 = vadd.f32 0.0, %v1268
      %1270 = vmatmul.f32.gmra.mxu0 %v1156
      %v1271 = vpop.f32.mrf.mxu0
      %v1272 = vadd.f32 0.0, %v1271
      %1273 = vmatmul.f32.gmra.mxu0 %v1159
      %v1274 = vpop.f32.mrf.mxu0
      %v1275 = vadd.f32 0.0, %v1274
      %1276 = vmatmul.f32.gmra.mxu0 %v1162
      %v1277 = vpop.f32.mrf.mxu0
      %v1278 = vadd.f32 0.0, %v1277
      %1279 = vmatmul.f32.gmra.mxu0 %v1165
      %v1280 = vpop.f32.mrf.mxu0
      %v1281 = vadd.f32 0.0, %v1280
      %1282 = vmatmul.f32.gmra.mxu0 %v1168
      %v1283 = vpop.f32.mrf.mxu0
      %v1284 = vadd.f32 0.0, %v1283
      %1285 = vmatmul.f32.gmra.mxu0 %v1171
      %v1286 = vpop.f32.mrf.mxu0
      %v1287 = vadd.f32 0.0, %v1286
      %1288 = vmatmul.f32.gmra.mxu0 %v1174
      %v1289 = vpop.f32.mrf.mxu0
      %v1290 = vadd.f32 0.0, %v1289
      %1291 = vmatmul.f32.gmra.mxu0 %v1177
      %v1292 = vpop.f32.mrf.mxu0
      %v1293 = vadd.f32 0.0, %v1292
      %1294 = vmatmul.f32.gmra.mxu0 %v1180
      %v1295 = vpop.f32.mrf.mxu0
      %v1296 = vadd.f32 0.0, %v1295
      %1297 = vmatmul.f32.gmra.mxu0 %v1183
      %v1298 = vpop.f32.mrf.mxu0
      %v1299 = vadd.f32 0.0, %v1298
      %1300 = vmatmul.f32.gmra.mxu0 %v1186
      %v1301 = vpop.f32.mrf.mxu0
      %v1302 = vadd.f32 0.0, %v1301
      %1303 = vmatmul.f32.gmra.mxu0 %v1189
      %v1304 = vpop.f32.mrf.mxu0
      %v1305 = vadd.f32 0.0, %v1304
      %1306 = vmatmul.f32.gmra.mxu0 %v1192
      %v1307 = vpop.f32.mrf.mxu0
      %v1308 = vadd.f32 0.0, %v1307
      %1309 = vmatmul.f32.gmra.mxu0 %v1195
      %v1310 = vpop.f32.mrf.mxu0
      %v1311 = vadd.f32 0.0, %v1310
      %1312 = vmatmul.f32.gmra.mxu0 %v1198
      %v1313 = vpop.f32.mrf.mxu0
      %v1314 = vadd.f32 0.0, %v1313
      %1315 = vmatmul.f32.gmra.mxu0 %v1201
      %v1316 = vpop.f32.mrf.mxu0
      %v1317 = vadd.f32 0.0, %v1316
      %1318 = vmatmul.f32.gmra.mxu0 %v1204
      %v1319 = vpop.f32.mrf.mxu0
      %v1320 = vadd.f32 0.0, %v1319
      %1321 = vmatmul.f32.gmra.mxu0 %v1207
      %v1322 = vpop.f32.mrf.mxu0
      %v1323 = vadd.f32 0.0, %v1322
      %1324 = vmatmul.f32.gmra.mxu0 %v1210
      %v1325 = vpop.f32.mrf.mxu0
      %v1326 = vadd.f32 0.0, %v1325
      %1327 = vmatmul.f32.gmra.mxu0 %v1213
      %v1328 = vpop.f32.mrf.mxu0
      %v1329 = vadd.f32 0.0, %v1328
      %1330 = vdwg.mxu0
      %v1331 = vadd.f32 %v1053, %v1236
      %v1332 = vadd.f32 %v1054, %v1239
      %v1333 = vadd.f32 %v1055, %v1242
      %v1334 = vadd.f32 %v1056, %v1245
      %v1335 = vadd.f32 %v1057, %v1248
      %v1336 = vadd.f32 %v1058, %v1251
      %v1337 = vadd.f32 %v1059, %v1254
      %v1338 = vadd.f32 %v1060, %v1257
      %v1339 = vadd.f32 %v1061, %v1260
      %v1340 = vadd.f32 %v1062, %v1263
      %v1341 = vadd.f32 %v1063, %v1266
      %v1342 = vadd.f32 %v1064, %v1269
      %v1343 = vadd.f32 %v1065, %v1272
      %v1344 = vadd.f32 %v1066, %v1275
      %v1345 = vadd.f32 %v1067, %v1278
      %v1346 = vadd.f32 %v1068, %v1281
      %v1347 = vadd.f32 %v1069, %v1284
      %v1348 = vadd.f32 %v1070, %v1287
      %v1349 = vadd.f32 %v1071, %v1290
      %v1350 = vadd.f32 %v1072, %v1293
      %v1351 = vadd.f32 %v1073, %v1296
      %v1352 = vadd.f32 %v1074, %v1299
      %v1353 = vadd.f32 %v1075, %v1302
      %v1354 = vadd.f32 %v1076, %v1305
      %v1355 = vadd.f32 %v1077, %v1308
      %v1356 = vadd.f32 %v1078, %v1311
      %v1357 = vadd.f32 %v1079, %v1314
      %v1358 = vadd.f32 %v1080, %v1317
      %v1359 = vadd.f32 %v1081, %v1320
      %v1360 = vadd.f32 %v1082, %v1323
      %v1361 = vadd.f32 %v1083, %v1326
      %v1362 = vadd.f32 %v1084, %v1329
      %v1363 = vld [vmem:[%s203 + $0x1] sm:$0xff]
      %v1364 = vld [vmem:[%s203 + $0x9] sm:$0xff]
      %v1365 = vld [vmem:[%s203 + $0x19] sm:$0xff]
      %v1366 = vld [vmem:[%s203 + $0x21] sm:$0xff]
      %v1367 = vld [vmem:[%s203 + $0x31] sm:$0xff]
      %v1368 = vld [vmem:[%s203 + $0x39] sm:$0xff]
      %v1369 = vld [vmem:[%s203 + $0x49] sm:$0xff]
      %v1370 = vld [vmem:[%s203 + $0x51] sm:$0xff]
      %v1371 = vld [vmem:[%s203 + $0x61] sm:$0xff]
      %v1372 = vld [vmem:[%s203 + $0x69] sm:$0xff]
      %v1373 = vld [vmem:[%s203 + $0x79] sm:$0xff]
      %v1374 = vld [vmem:[%s203 + $0x81] sm:$0xff]
      %v1375 = vld [vmem:[%s203 + $0x91] sm:$0xff]
      %v1376 = vld [vmem:[%s203 + $0x99] sm:$0xff]
      %v1377 = vld [vmem:[%s203 + $0xa9] sm:$0xff]
      %v1378 = vld [vmem:[%s203 + $0xb1] sm:$0xff]
      %v1379 = vld [vmem:[%s203 + $0xc1] sm:$0xff]
      %v1380 = vld [vmem:[%s203 + $0xc9] sm:$0xff]
      %v1381 = vld [vmem:[%s203 + $0xd9] sm:$0xff]
      %v1382 = vld [vmem:[%s203 + $0xe1] sm:$0xff]
      %v1383 = vld [vmem:[%s203 + $0xf1] sm:$0xff]
      %v1384 = vld [vmem:[%s203 + $0xf9] sm:$0xff]
      %v1385 = vld [vmem:[%s203 + $0x109] sm:$0xff]
      %v1386 = vld [vmem:[%s203 + $0x111] sm:$0xff]
      %v1387 = vld [vmem:[%s203 + $0x121] sm:$0xff]
      %v1388 = vld [vmem:[%s203 + $0x129] sm:$0xff]
      %v1389 = vld [vmem:[%s203 + $0x139] sm:$0xff]
      %v1390 = vld [vmem:[%s203 + $0x141] sm:$0xff]
      %v1391 = vld [vmem:[%s203 + $0x151] sm:$0xff]
      %v1392 = vld [vmem:[%s203 + $0x159] sm:$0xff]
      %v1393 = vld [vmem:[%s203 + $0x169] sm:$0xff]
      %v1394 = vld [vmem:[%s203 + $0x171] sm:$0xff]
      %s1395 = scalar_lea.vmem %s1, 16
      %v1396 = vld [vmem:[%s1395] sm:$0xf]
      %v1398 = vsel %vm204, %v1363, 0
      %v1401 = vsel %vm204, %v1364, 0
      %v1404 = vsel %vm204, %v1365, 0
      %v1407 = vsel %vm204, %v1366, 0
      %v1410 = vsel %vm204, %v1367, 0
      %v1413 = vsel %vm204, %v1368, 0
      %v1416 = vsel %vm204, %v1369, 0
      %v1419 = vsel %vm204, %v1370, 0
      %v1422 = vsel %vm204, %v1371, 0
      %v1425 = vsel %vm204, %v1372, 0
      %v1428 = vsel %vm204, %v1373, 0
      %v1431 = vsel %vm204, %v1374, 0
      %v1434 = vsel %vm204, %v1375, 0
      %v1437 = vsel %vm204, %v1376, 0
      %v1440 = vsel %vm204, %v1377, 0
      %v1443 = vsel %vm204, %v1378, 0
      %v1446 = vsel %vm204, %v1379, 0
      %v1449 = vsel %vm204, %v1380, 0
      %v1452 = vsel %vm204, %v1381, 0
      %v1455 = vsel %vm204, %v1382, 0
      %v1458 = vsel %vm204, %v1383, 0
      %v1461 = vsel %vm204, %v1384, 0
      %v1464 = vsel %vm204, %v1385, 0
      %v1467 = vsel %vm204, %v1386, 0
      %v1470 = vsel %vm204, %v1387, 0
      %v1473 = vsel %vm204, %v1388, 0
      %v1476 = vsel %vm204, %v1389, 0
      %v1479 = vsel %vm204, %v1390, 0
      %v1482 = vsel %vm204, %v1391, 0
      %v1485 = vsel %vm204, %v1392, 0
      %v1488 = vsel %vm204, %v1393, 0
      %v1491 = vsel %vm204, %v1394, 0
      %v1494 = vsel %vm478, %v1396, 0
      %1496 = vmatpush.msra.mxu0 0.0
      %1497 = vmatpush.msra.mxu0 0.0
      %1498 = vmatpush.msra.mxu0 0.0
      %1499 = vmatpush.msra.mxu0 0.0
      %1500 = vmatpush.msra.mxu0 0.0
      %1501 = vmatpush.msra.mxu0 0.0
      %1502 = vmatpush.msra.mxu0 0.0
      %1503 = vmatpush.msra.mxu0 0.0
      %1504 = vmatpush.msra.mxu0 0.0
      %1505 = vmatpush.msra.mxu0 0.0
      %1506 = vmatpush.msra.mxu0 0.0
      %1507 = vmatpush.msra.mxu0 0.0
      %1508 = vmatpush.msra.mxu0 0.0
      %1509 = vmatpush.msra.mxu0 0.0
      %1510 = vmatpush.msra.mxu0 0.0
      %1511 = vmatpush.msra.mxu0 %v1494
      %1512 = vmatmul.f32.gmra.mxu0 %v1398
      %v1513 = vpop.f32.mrf.mxu0
      %v1514 = vadd.f32 0.0, %v1513
      %1515 = vmatmul.f32.gmra.mxu0 %v1401
      %v1516 = vpop.f32.mrf.mxu0
      %v1517 = vadd.f32 0.0, %v1516
      %1518 = vmatmul.f32.gmra.mxu0 %v1404
      %v1519 = vpop.f32.mrf.mxu0
      %v1520 = vadd.f32 0.0, %v1519
      %1521 = vmatmul.f32.gmra.mxu0 %v1407
      %v1522 = vpop.f32.mrf.mxu0
      %v1523 = vadd.f32 0.0, %v1522
      %1524 = vmatmul.f32.gmra.mxu0 %v1410
      %v1525 = vpop.f32.mrf.mxu0
      %v1526 = vadd.f32 0.0, %v1525
      %1527 = vmatmul.f32.gmra.mxu0 %v1413
      %v1528 = vpop.f32.mrf.mxu0
      %v1529 = vadd.f32 0.0, %v1528
      %1530 = vmatmul.f32.gmra.mxu0 %v1416
      %v1531 = vpop.f32.mrf.mxu0
      %v1532 = vadd.f32 0.0, %v1531
      %1533 = vmatmul.f32.gmra.mxu0 %v1419
      %v1534 = vpop.f32.mrf.mxu0
      %v1535 = vadd.f32 0.0, %v1534
      %1536 = vmatmul.f32.gmra.mxu0 %v1422
      %v1537 = vpop.f32.mrf.mxu0
      %v1538 = vadd.f32 0.0, %v1537
      %1539 = vmatmul.f32.gmra.mxu0 %v1425
      %v1540 = vpop.f32.mrf.mxu0
      %v1541 = vadd.f32 0.0, %v1540
      %1542 = vmatmul.f32.gmra.mxu0 %v1428
      %v1543 = vpop.f32.mrf.mxu0
      %v1544 = vadd.f32 0.0, %v1543
      %1545 = vmatmul.f32.gmra.mxu0 %v1431
      %v1546 = vpop.f32.mrf.mxu0
      %v1547 = vadd.f32 0.0, %v1546
      %1548 = vmatmul.f32.gmra.mxu0 %v1434
      %v1549 = vpop.f32.mrf.mxu0
      %v1550 = vadd.f32 0.0, %v1549
      %1551 = vmatmul.f32.gmra.mxu0 %v1437
      %v1552 = vpop.f32.mrf.mxu0
      %v1553 = vadd.f32 0.0, %v1552
      %1554 = vmatmul.f32.gmra.mxu0 %v1440
      %v1555 = vpop.f32.mrf.mxu0
      %v1556 = vadd.f32 0.0, %v1555
      %1557 = vmatmul.f32.gmra.mxu0 %v1443
      %v1558 = vpop.f32.mrf.mxu0
      %v1559 = vadd.f32 0.0, %v1558
      %1560 = vmatmul.f32.gmra.mxu0 %v1446
      %v1561 = vpop.f32.mrf.mxu0
      %v1562 = vadd.f32 0.0, %v1561
      %1563 = vmatmul.f32.gmra.mxu0 %v1449
      %v1564 = vpop.f32.mrf.mxu0
      %v1565 = vadd.f32 0.0, %v1564
      %1566 = vmatmul.f32.gmra.mxu0 %v1452
      %v1567 = vpop.f32.mrf.mxu0
      %v1568 = vadd.f32 0.0, %v1567
      %1569 = vmatmul.f32.gmra.mxu0 %v1455
      %v1570 = vpop.f32.mrf.mxu0
      %v1571 = vadd.f32 0.0, %v1570
      %1572 = vmatmul.f32.gmra.mxu0 %v1458
      %v1573 = vpop.f32.mrf.mxu0
      %v1574 = vadd.f32 0.0, %v1573
      %1575 = vmatmul.f32.gmra.mxu0 %v1461
      %v1576 = vpop.f32.mrf.mxu0
      %v1577 = vadd.f32 0.0, %v1576
      %1578 = vmatmul.f32.gmra.mxu0 %v1464
      %v1579 = vpop.f32.mrf.mxu0
      %v1580 = vadd.f32 0.0, %v1579
      %1581 = vmatmul.f32.gmra.mxu0 %v1467
      %v1582 = vpop.f32.mrf.mxu0
      %v1583 = vadd.f32 0.0, %v1582
      %1584 = vmatmul.f32.gmra.mxu0 %v1470
      %v1585 = vpop.f32.mrf.mxu0
      %v1586 = vadd.f32 0.0, %v1585
      %1587 = vmatmul.f32.gmra.mxu0 %v1473
      %v1588 = vpop.f32.mrf.mxu0
      %v1589 = vadd.f32 0.0, %v1588
      %1590 = vmatmul.f32.gmra.mxu0 %v1476
      %v1591 = vpop.f32.mrf.mxu0
      %v1592 = vadd.f32 0.0, %v1591
      %1593 = vmatmul.f32.gmra.mxu0 %v1479
      %v1594 = vpop.f32.mrf.mxu0
      %v1595 = vadd.f32 0.0, %v1594
      %1596 = vmatmul.f32.gmra.mxu0 %v1482
      %v1597 = vpop.f32.mrf.mxu0
      %v1598 = vadd.f32 0.0, %v1597
      %1599 = vmatmul.f32.gmra.mxu0 %v1485
      %v1600 = vpop.f32.mrf.mxu0
      %v1601 = vadd.f32 0.0, %v1600
      %1602 = vmatmul.f32.gmra.mxu0 %v1488
      %v1603 = vpop.f32.mrf.mxu0
      %v1604 = vadd.f32 0.0, %v1603
      %1605 = vmatmul.f32.gmra.mxu0 %v1491
      %v1606 = vpop.f32.mrf.mxu0
      %v1607 = vadd.f32 0.0, %v1606
      %1608 = vdwg.mxu0
      %v1609 = vadd.f32 %v1331, %v1514
      %v1610 = vadd.f32 %v1332, %v1517
      %v1611 = vadd.f32 %v1333, %v1520
      %v1612 = vadd.f32 %v1334, %v1523
      %v1613 = vadd.f32 %v1335, %v1526
      %v1614 = vadd.f32 %v1336, %v1529
      %v1615 = vadd.f32 %v1337, %v1532
      %v1616 = vadd.f32 %v1338, %v1535
      %v1617 = vadd.f32 %v1339, %v1538
      %v1618 = vadd.f32 %v1340, %v1541
      %v1619 = vadd.f32 %v1341, %v1544
      %v1620 = vadd.f32 %v1342, %v1547
      %v1621 = vadd.f32 %v1343, %v1550
      %v1622 = vadd.f32 %v1344, %v1553
      %v1623 = vadd.f32 %v1345, %v1556
      %v1624 = vadd.f32 %v1346, %v1559
      %v1625 = vadd.f32 %v1347, %v1562
      %v1626 = vadd.f32 %v1348, %v1565
      %v1627 = vadd.f32 %v1349, %v1568
      %v1628 = vadd.f32 %v1350, %v1571
      %v1629 = vadd.f32 %v1351, %v1574
      %v1630 = vadd.f32 %v1352, %v1577
      %v1631 = vadd.f32 %v1353, %v1580
      %v1632 = vadd.f32 %v1354, %v1583
      %v1633 = vadd.f32 %v1355, %v1586
      %v1634 = vadd.f32 %v1356, %v1589
      %v1635 = vadd.f32 %v1357, %v1592
      %v1636 = vadd.f32 %v1358, %v1595
      %v1637 = vadd.f32 %v1359, %v1598
      %v1638 = vadd.f32 %v1360, %v1601
      %v1639 = vadd.f32 %v1361, %v1604
      %v1640 = vadd.f32 %v1362, %v1607
      %v1641 = vld [vmem:[%s203 + $0x2] sm:$0xff]
      %v1642 = vld [vmem:[%s203 + $0xa] sm:$0xff]
      %v1643 = vld [vmem:[%s203 + $0x1a] sm:$0xff]
      %v1644 = vld [vmem:[%s203 + $0x22] sm:$0xff]
      %v1645 = vld [vmem:[%s203 + $0x32] sm:$0xff]
      %v1646 = vld [vmem:[%s203 + $0x3a] sm:$0xff]
      %v1647 = vld [vmem:[%s203 + $0x4a] sm:$0xff]
      %v1648 = vld [vmem:[%s203 + $0x52] sm:$0xff]
      %v1649 = vld [vmem:[%s203 + $0x62] sm:$0xff]
      %v1650 = vld [vmem:[%s203 + $0x6a] sm:$0xff]
      %v1651 = vld [vmem:[%s203 + $0x7a] sm:$0xff]
      %v1652 = vld [vmem:[%s203 + $0x82] sm:$0xff]
      %v1653 = vld [vmem:[%s203 + $0x92] sm:$0xff]
      %v1654 = vld [vmem:[%s203 + $0x9a] sm:$0xff]
      %v1655 = vld [vmem:[%s203 + $0xaa] sm:$0xff]
      %v1656 = vld [vmem:[%s203 + $0xb2] sm:$0xff]
      %v1657 = vld [vmem:[%s203 + $0xc2] sm:$0xff]
      %v1658 = vld [vmem:[%s203 + $0xca] sm:$0xff]
      %v1659 = vld [vmem:[%s203 + $0xda] sm:$0xff]
      %v1660 = vld [vmem:[%s203 + $0xe2] sm:$0xff]
      %v1661 = vld [vmem:[%s203 + $0xf2] sm:$0xff]
      %v1662 = vld [vmem:[%s203 + $0xfa] sm:$0xff]
      %v1663 = vld [vmem:[%s203 + $0x10a] sm:$0xff]
      %v1664 = vld [vmem:[%s203 + $0x112] sm:$0xff]
      %v1665 = vld [vmem:[%s203 + $0x122] sm:$0xff]
      %v1666 = vld [vmem:[%s203 + $0x12a] sm:$0xff]
      %v1667 = vld [vmem:[%s203 + $0x13a] sm:$0xff]
      %v1668 = vld [vmem:[%s203 + $0x142] sm:$0xff]
      %v1669 = vld [vmem:[%s203 + $0x152] sm:$0xff]
      %v1670 = vld [vmem:[%s203 + $0x15a] sm:$0xff]
      %v1671 = vld [vmem:[%s203 + $0x16a] sm:$0xff]
      %v1672 = vld [vmem:[%s203 + $0x172] sm:$0xff]
      %s1673 = scalar_lea.vmem %s1, 20
      %v1674 = vld [vmem:[%s1673] sm:$0xf]
      %v1676 = vsel %vm204, %v1641, 0
      %v1679 = vsel %vm204, %v1642, 0
      %v1682 = vsel %vm204, %v1643, 0
      %v1685 = vsel %vm204, %v1644, 0
      %v1688 = vsel %vm204, %v1645, 0
      %v1691 = vsel %vm204, %v1646, 0
      %v1694 = vsel %vm204, %v1647, 0
      %v1697 = vsel %vm204, %v1648, 0
      %v1700 = vsel %vm204, %v1649, 0
      %v1703 = vsel %vm204, %v1650, 0
      %v1706 = vsel %vm204, %v1651, 0
      %v1709 = vsel %vm204, %v1652, 0
      %v1712 = vsel %vm204, %v1653, 0
      %v1715 = vsel %vm204, %v1654, 0
      %v1718 = vsel %vm204, %v1655, 0
      %v1721 = vsel %vm204, %v1656, 0
      %v1724 = vsel %vm204, %v1657, 0
      %v1727 = vsel %vm204, %v1658, 0
      %v1730 = vsel %vm204, %v1659, 0
      %v1733 = vsel %vm204, %v1660, 0
      %v1736 = vsel %vm204, %v1661, 0
      %v1739 = vsel %vm204, %v1662, 0
      %v1742 = vsel %vm204, %v1663, 0
      %v1745 = vsel %vm204, %v1664, 0
      %v1748 = vsel %vm204, %v1665, 0
      %v1751 = vsel %vm204, %v1666, 0
      %v1754 = vsel %vm204, %v1667, 0
      %v1757 = vsel %vm204, %v1668, 0
      %v1760 = vsel %vm204, %v1669, 0
      %v1763 = vsel %vm204, %v1670, 0
      %v1766 = vsel %vm204, %v1671, 0
      %v1769 = vsel %vm204, %v1672, 0
      %v1772 = vsel %vm478, %v1674, 0
      %1774 = vmatpush.msra.mxu0 0.0
      %1775 = vmatpush.msra.mxu0 0.0
      %1776 = vmatpush.msra.mxu0 0.0
      %1777 = vmatpush.msra.mxu0 0.0
      %1778 = vmatpush.msra.mxu0 0.0
      %1779 = vmatpush.msra.mxu0 0.0
      %1780 = vmatpush.msra.mxu0 0.0
      %1781 = vmatpush.msra.mxu0 0.0
      %1782 = vmatpush.msra.mxu0 0.0
      %1783 = vmatpush.msra.mxu0 0.0
      %1784 = vmatpush.msra.mxu0 0.0
      %1785 = vmatpush.msra.mxu0 0.0
      %1786 = vmatpush.msra.mxu0 0.0
      %1787 = vmatpush.msra.mxu0 0.0
      %1788 = vmatpush.msra.mxu0 0.0
      %1789 = vmatpush.msra.mxu0 %v1772
      %1790 = vmatmul.f32.gmra.mxu0 %v1676
      %v1791 = vpop.f32.mrf.mxu0
      %v1792 = vadd.f32 0.0, %v1791
      %1793 = vmatmul.f32.gmra.mxu0 %v1679
      %v1794 = vpop.f32.mrf.mxu0
      %v1795 = vadd.f32 0.0, %v1794
      %1796 = vmatmul.f32.gmra.mxu0 %v1682
      %v1797 = vpop.f32.mrf.mxu0
      %v1798 = vadd.f32 0.0, %v1797
      %1799 = vmatmul.f32.gmra.mxu0 %v1685
      %v1800 = vpop.f32.mrf.mxu0
      %v1801 = vadd.f32 0.0, %v1800
      %1802 = vmatmul.f32.gmra.mxu0 %v1688
      %v1803 = vpop.f32.mrf.mxu0
      %v1804 = vadd.f32 0.0, %v1803
      %1805 = vmatmul.f32.gmra.mxu0 %v1691
      %v1806 = vpop.f32.mrf.mxu0
      %v1807 = vadd.f32 0.0, %v1806
      %1808 = vmatmul.f32.gmra.mxu0 %v1694
      %v1809 = vpop.f32.mrf.mxu0
      %v1810 = vadd.f32 0.0, %v1809
      %1811 = vmatmul.f32.gmra.mxu0 %v1697
      %v1812 = vpop.f32.mrf.mxu0
      %v1813 = vadd.f32 0.0, %v1812
      %1814 = vmatmul.f32.gmra.mxu0 %v1700
      %v1815 = vpop.f32.mrf.mxu0
      %v1816 = vadd.f32 0.0, %v1815
      %1817 = vmatmul.f32.gmra.mxu0 %v1703
      %v1818 = vpop.f32.mrf.mxu0
      %v1819 = vadd.f32 0.0, %v1818
      %1820 = vmatmul.f32.gmra.mxu0 %v1706
      %v1821 = vpop.f32.mrf.mxu0
      %v1822 = vadd.f32 0.0, %v1821
      %1823 = vmatmul.f32.gmra.mxu0 %v1709
      %v1824 = vpop.f32.mrf.mxu0
      %v1825 = vadd.f32 0.0, %v1824
      %1826 = vmatmul.f32.gmra.mxu0 %v1712
      %v1827 = vpop.f32.mrf.mxu0
      %v1828 = vadd.f32 0.0, %v1827
      %1829 = vmatmul.f32.gmra.mxu0 %v1715
      %v1830 = vpop.f32.mrf.mxu0
      %v1831 = vadd.f32 0.0, %v1830
      %1832 = vmatmul.f32.gmra.mxu0 %v1718
      %v1833 = vpop.f32.mrf.mxu0
      %v1834 = vadd.f32 0.0, %v1833
      %1835 = vmatmul.f32.gmra.mxu0 %v1721
      %v1836 = vpop.f32.mrf.mxu0
      %v1837 = vadd.f32 0.0, %v1836
      %1838 = vmatmul.f32.gmra.mxu0 %v1724
      %v1839 = vpop.f32.mrf.mxu0
      %v1840 = vadd.f32 0.0, %v1839
      %1841 = vmatmul.f32.gmra.mxu0 %v1727
      %v1842 = vpop.f32.mrf.mxu0
      %v1843 = vadd.f32 0.0, %v1842
      %1844 = vmatmul.f32.gmra.mxu0 %v1730
      %v1845 = vpop.f32.mrf.mxu0
      %v1846 = vadd.f32 0.0, %v1845
      %1847 = vmatmul.f32.gmra.mxu0 %v1733
      %v1848 = vpop.f32.mrf.mxu0
      %v1849 = vadd.f32 0.0, %v1848
      %1850 = vmatmul.f32.gmra.mxu0 %v1736
      %v1851 = vpop.f32.mrf.mxu0
      %v1852 = vadd.f32 0.0, %v1851
      %1853 = vmatmul.f32.gmra.mxu0 %v1739
      %v1854 = vpop.f32.mrf.mxu0
      %v1855 = vadd.f32 0.0, %v1854
      %1856 = vmatmul.f32.gmra.mxu0 %v1742
      %v1857 = vpop.f32.mrf.mxu0
      %v1858 = vadd.f32 0.0, %v1857
      %1859 = vmatmul.f32.gmra.mxu0 %v1745
      %v1860 = vpop.f32.mrf.mxu0
      %v1861 = vadd.f32 0.0, %v1860
      %1862 = vmatmul.f32.gmra.mxu0 %v1748
      %v1863 = vpop.f32.mrf.mxu0
      %v1864 = vadd.f32 0.0, %v1863
      %1865 = vmatmul.f32.gmra.mxu0 %v1751
      %v1866 = vpop.f32.mrf.mxu0
      %v1867 = vadd.f32 0.0, %v1866
      %1868 = vmatmul.f32.gmra.mxu0 %v1754
      %v1869 = vpop.f32.mrf.mxu0
      %v1870 = vadd.f32 0.0, %v1869
      %1871 = vmatmul.f32.gmra.mxu0 %v1757
      %v1872 = vpop.f32.mrf.mxu0
      %v1873 = vadd.f32 0.0, %v1872
      %1874 = vmatmul.f32.gmra.mxu0 %v1760
      %v1875 = vpop.f32.mrf.mxu0
      %v1876 = vadd.f32 0.0, %v1875
      %1877 = vmatmul.f32.gmra.mxu0 %v1763
      %v1878 = vpop.f32.mrf.mxu0
      %v1879 = vadd.f32 0.0, %v1878
      %1880 = vmatmul.f32.gmra.mxu0 %v1766
      %v1881 = vpop.f32.mrf.mxu0
      %v1882 = vadd.f32 0.0, %v1881
      %1883 = vmatmul.f32.gmra.mxu0 %v1769
      %v1884 = vpop.f32.mrf.mxu0
      %v1885 = vadd.f32 0.0, %v1884
      %1886 = vdwg.mxu0
      %v1887 = vadd.f32 %v1609, %v1792
      %v1888 = vadd.f32 %v1610, %v1795
      %v1889 = vadd.f32 %v1611, %v1798
      %v1890 = vadd.f32 %v1612, %v1801
      %v1891 = vadd.f32 %v1613, %v1804
      %v1892 = vadd.f32 %v1614, %v1807
      %v1893 = vadd.f32 %v1615, %v1810
      %v1894 = vadd.f32 %v1616, %v1813
      %v1895 = vadd.f32 %v1617, %v1816
      %v1896 = vadd.f32 %v1618, %v1819
      %v1897 = vadd.f32 %v1619, %v1822
      %v1898 = vadd.f32 %v1620, %v1825
      %v1899 = vadd.f32 %v1621, %v1828
      %v1900 = vadd.f32 %v1622, %v1831
      %v1901 = vadd.f32 %v1623, %v1834
      %v1902 = vadd.f32 %v1624, %v1837
      %v1903 = vadd.f32 %v1625, %v1840
      %v1904 = vadd.f32 %v1626, %v1843
      %v1905 = vadd.f32 %v1627, %v1846
      %v1906 = vadd.f32 %v1628, %v1849
      %v1907 = vadd.f32 %v1629, %v1852
      %v1908 = vadd.f32 %v1630, %v1855
      %v1909 = vadd.f32 %v1631, %v1858
      %v1910 = vadd.f32 %v1632, %v1861
      %v1911 = vadd.f32 %v1633, %v1864
      %v1912 = vadd.f32 %v1634, %v1867
      %v1913 = vadd.f32 %v1635, %v1870
      %v1914 = vadd.f32 %v1636, %v1873
      %v1915 = vadd.f32 %v1637, %v1876
      %v1916 = vadd.f32 %v1638, %v1879
      %v1917 = vadd.f32 %v1639, %v1882
      %v1918 = vadd.f32 %v1640, %v1885
      %s1919 = scalar_lea.vmem [#allocation2], 48
      %v1920 = vld [vmem:[%s1919] sm:$0xff]
      %v1921 = vld [vmem:[%s1919 + $0x8] sm:$0xff]
      %v1922 = vld [vmem:[%s1919 + $0x18] sm:$0xff]
      %v1923 = vld [vmem:[%s1919 + $0x20] sm:$0xff]
      %v1924 = vld [vmem:[%s1919 + $0x30] sm:$0xff]
      %v1925 = vld [vmem:[%s1919 + $0x38] sm:$0xff]
      %v1926 = vld [vmem:[%s1919 + $0x48] sm:$0xff]
      %v1927 = vld [vmem:[%s1919 + $0x50] sm:$0xff]
      %v1928 = vld [vmem:[%s1919 + $0x60] sm:$0xff]
      %v1929 = vld [vmem:[%s1919 + $0x68] sm:$0xff]
      %v1930 = vld [vmem:[%s1919 + $0x78] sm:$0xff]
      %v1931 = vld [vmem:[%s1919 + $0x80] sm:$0xff]
      %v1932 = vld [vmem:[%s1919 + $0x90] sm:$0xff]
      %v1933 = vld [vmem:[%s1919 + $0x98] sm:$0xff]
      %v1934 = vld [vmem:[%s1919 + $0xa8] sm:$0xff]
      %v1935 = vld [vmem:[%s1919 + $0xb0] sm:$0xff]
      %v1936 = vld [vmem:[%s1919 + $0xc0] sm:$0xff]
      %v1937 = vld [vmem:[%s1919 + $0xc8] sm:$0xff]
      %v1938 = vld [vmem:[%s1919 + $0xd8] sm:$0xff]
      %v1939 = vld [vmem:[%s1919 + $0xe0] sm:$0xff]
      %v1940 = vld [vmem:[%s1919 + $0xf0] sm:$0xff]
      %v1941 = vld [vmem:[%s1919 + $0xf8] sm:$0xff]
      %v1942 = vld [vmem:[%s1919 + $0x108] sm:$0xff]
      %v1943 = vld [vmem:[%s1919 + $0x110] sm:$0xff]
      %v1944 = vld [vmem:[%s1919 + $0x120] sm:$0xff]
      %v1945 = vld [vmem:[%s1919 + $0x128] sm:$0xff]
      %v1946 = vld [vmem:[%s1919 + $0x138] sm:$0xff]
      %v1947 = vld [vmem:[%s1919 + $0x140] sm:$0xff]
      %v1948 = vld [vmem:[%s1919 + $0x150] sm:$0xff]
      %v1949 = vld [vmem:[%s1919 + $0x158] sm:$0xff]
      %v1950 = vld [vmem:[%s1919 + $0x168] sm:$0xff]
      %v1951 = vld [vmem:[%s1919 + $0x170] sm:$0xff]
      %s1952 = scalar_lea.vmem %s1, 24
      %v1953 = vld [vmem:[%s1952] sm:$0xf]
      %v1955 = vsel %vm204, %v1920, 0
      %v1958 = vsel %vm204, %v1921, 0
      %v1961 = vsel %vm204, %v1922, 0
      %v1964 = vsel %vm204, %v1923, 0
      %v1967 = vsel %vm204, %v1924, 0
      %v1970 = vsel %vm204, %v1925, 0
      %v1973 = vsel %vm204, %v1926, 0
      %v1976 = vsel %vm204, %v1927, 0
      %v1979 = vsel %vm204, %v1928, 0
      %v1982 = vsel %vm204, %v1929, 0
      %v1985 = vsel %vm204, %v1930, 0
      %v1988 = vsel %vm204, %v1931, 0
      %v1991 = vsel %vm204, %v1932, 0
      %v1994 = vsel %vm204, %v1933, 0
      %v1997 = vsel %vm204, %v1934, 0
      %v2000 = vsel %vm204, %v1935, 0
      %v2003 = vsel %vm204, %v1936, 0
      %v2006 = vsel %vm204, %v1937, 0
      %v2009 = vsel %vm204, %v1938, 0
      %v2012 = vsel %vm204, %v1939, 0
      %v2015 = vsel %vm204, %v1940, 0
      %v2018 = vsel %vm204, %v1941, 0
      %v2021 = vsel %vm204, %v1942, 0
      %v2024 = vsel %vm204, %v1943, 0
      %v2027 = vsel %vm204, %v1944, 0
      %v2030 = vsel %vm204, %v1945, 0
      %v2033 = vsel %vm204, %v1946, 0
      %v2036 = vsel %vm204, %v1947, 0
      %v2039 = vsel %vm204, %v1948, 0
      %v2042 = vsel %vm204, %v1949, 0
      %v2045 = vsel %vm204, %v1950, 0
      %v2048 = vsel %vm204, %v1951, 0
      %v2051 = vsel %vm478, %v1953, 0
      %2053 = vmatpush.msra.mxu0 0.0
      %2054 = vmatpush.msra.mxu0 0.0
      %2055 = vmatpush.msra.mxu0 0.0
      %2056 = vmatpush.msra.mxu0 0.0
      %2057 = vmatpush.msra.mxu0 0.0
      %2058 = vmatpush.msra.mxu0 0.0
      %2059 = vmatpush.msra.mxu0 0.0
      %2060 = vmatpush.msra.mxu0 0.0
      %2061 = vmatpush.msra.mxu0 0.0
      %2062 = vmatpush.msra.mxu0 0.0
      %2063 = vmatpush.msra.mxu0 0.0
      %2064 = vmatpush.msra.mxu0 0.0
      %2065 = vmatpush.msra.mxu0 0.0
      %2066 = vmatpush.msra.mxu0 0.0
      %2067 = vmatpush.msra.mxu0 0.0
      %2068 = vmatpush.msra.mxu0 %v2051
      %2069 = vmatmul.f32.gmra.mxu0 %v1955
      %v2070 = vpop.f32.mrf.mxu0
      %v2071 = vadd.f32 0.0, %v2070
      %2072 = vmatmul.f32.gmra.mxu0 %v1958
      %v2073 = vpop.f32.mrf.mxu0
      %v2074 = vadd.f32 0.0, %v2073
      %2075 = vmatmul.f32.gmra.mxu0 %v1961
      %v2076 = vpop.f32.mrf.mxu0
      %v2077 = vadd.f32 0.0, %v2076
      %2078 = vmatmul.f32.gmra.mxu0 %v1964
      %v2079 = vpop.f32.mrf.mxu0
      %v2080 = vadd.f32 0.0, %v2079
      %2081 = vmatmul.f32.gmra.mxu0 %v1967
      %v2082 = vpop.f32.mrf.mxu0
      %v2083 = vadd.f32 0.0, %v2082
      %2084 = vmatmul.f32.gmra.mxu0 %v1970
      %v2085 = vpop.f32.mrf.mxu0
      %v2086 = vadd.f32 0.0, %v2085
      %2087 = vmatmul.f32.gmra.mxu0 %v1973
      %v2088 = vpop.f32.mrf.mxu0
      %v2089 = vadd.f32 0.0, %v2088
      %2090 = vmatmul.f32.gmra.mxu0 %v1976
      %v2091 = vpop.f32.mrf.mxu0
      %v2092 = vadd.f32 0.0, %v2091
      %2093 = vmatmul.f32.gmra.mxu0 %v1979
      %v2094 = vpop.f32.mrf.mxu0
      %v2095 = vadd.f32 0.0, %v2094
      %2096 = vmatmul.f32.gmra.mxu0 %v1982
      %v2097 = vpop.f32.mrf.mxu0
      %v2098 = vadd.f32 0.0, %v2097
      %2099 = vmatmul.f32.gmra.mxu0 %v1985
      %v2100 = vpop.f32.mrf.mxu0
      %v2101 = vadd.f32 0.0, %v2100
      %2102 = vmatmul.f32.gmra.mxu0 %v1988
      %v2103 = vpop.f32.mrf.mxu0
      %v2104 = vadd.f32 0.0, %v2103
      %2105 = vmatmul.f32.gmra.mxu0 %v1991
      %v2106 = vpop.f32.mrf.mxu0
      %v2107 = vadd.f32 0.0, %v2106
      %2108 = vmatmul.f32.gmra.mxu0 %v1994
      %v2109 = vpop.f32.mrf.mxu0
      %v2110 = vadd.f32 0.0, %v2109
      %2111 = vmatmul.f32.gmra.mxu0 %v1997
      %v2112 = vpop.f32.mrf.mxu0
      %v2113 = vadd.f32 0.0, %v2112
      %2114 = vmatmul.f32.gmra.mxu0 %v2000
      %v2115 = vpop.f32.mrf.mxu0
      %v2116 = vadd.f32 0.0, %v2115
      %2117 = vmatmul.f32.gmra.mxu0 %v2003
      %v2118 = vpop.f32.mrf.mxu0
      %v2119 = vadd.f32 0.0, %v2118
      %2120 = vmatmul.f32.gmra.mxu0 %v2006
      %v2121 = vpop.f32.mrf.mxu0
      %v2122 = vadd.f32 0.0, %v2121
      %2123 = vmatmul.f32.gmra.mxu0 %v2009
      %v2124 = vpop.f32.mrf.mxu0
      %v2125 = vadd.f32 0.0, %v2124
      %2126 = vmatmul.f32.gmra.mxu0 %v2012
      %v2127 = vpop.f32.mrf.mxu0
      %v2128 = vadd.f32 0.0, %v2127
      %2129 = vmatmul.f32.gmra.mxu0 %v2015
      %v2130 = vpop.f32.mrf.mxu0
      %v2131 = vadd.f32 0.0, %v2130
      %2132 = vmatmul.f32.gmra.mxu0 %v2018
      %v2133 = vpop.f32.mrf.mxu0
      %v2134 = vadd.f32 0.0, %v2133
      %2135 = vmatmul.f32.gmra.mxu0 %v2021
      %v2136 = vpop.f32.mrf.mxu0
      %v2137 = vadd.f32 0.0, %v2136
      %2138 = vmatmul.f32.gmra.mxu0 %v2024
      %v2139 = vpop.f32.mrf.mxu0
      %v2140 = vadd.f32 0.0, %v2139
      %2141 = vmatmul.f32.gmra.mxu0 %v2027
      %v2142 = vpop.f32.mrf.mxu0
      %v2143 = vadd.f32 0.0, %v2142
      %2144 = vmatmul.f32.gmra.mxu0 %v2030
      %v2145 = vpop.f32.mrf.mxu0
      %v2146 = vadd.f32 0.0, %v2145
      %2147 = vmatmul.f32.gmra.mxu0 %v2033
      %v2148 = vpop.f32.mrf.mxu0
      %v2149 = vadd.f32 0.0, %v2148
      %2150 = vmatmul.f32.gmra.mxu0 %v2036
      %v2151 = vpop.f32.mrf.mxu0
      %v2152 = vadd.f32 0.0, %v2151
      %2153 = vmatmul.f32.gmra.mxu0 %v2039
      %v2154 = vpop.f32.mrf.mxu0
      %v2155 = vadd.f32 0.0, %v2154
      %2156 = vmatmul.f32.gmra.mxu0 %v2042
      %v2157 = vpop.f32.mrf.mxu0
      %v2158 = vadd.f32 0.0, %v2157
      %2159 = vmatmul.f32.gmra.mxu0 %v2045
      %v2160 = vpop.f32.mrf.mxu0
      %v2161 = vadd.f32 0.0, %v2160
      %2162 = vmatmul.f32.gmra.mxu0 %v2048
      %v2163 = vpop.f32.mrf.mxu0
      %v2164 = vadd.f32 0.0, %v2163
      %2165 = vdwg.mxu0
      %v2166 = vadd.f32 %v1887, %v2071
      %v2167 = vadd.f32 %v1888, %v2074
      %v2168 = vadd.f32 %v1889, %v2077
      %v2169 = vadd.f32 %v1890, %v2080
      %v2170 = vadd.f32 %v1891, %v2083
      %v2171 = vadd.f32 %v1892, %v2086
      %v2172 = vadd.f32 %v1893, %v2089
      %v2173 = vadd.f32 %v1894, %v2092
      %v2174 = vadd.f32 %v1895, %v2095
      %v2175 = vadd.f32 %v1896, %v2098
      %v2176 = vadd.f32 %v1897, %v2101
      %v2177 = vadd.f32 %v1898, %v2104
      %v2178 = vadd.f32 %v1899, %v2107
      %v2179 = vadd.f32 %v1900, %v2110
      %v2180 = vadd.f32 %v1901, %v2113
      %v2181 = vadd.f32 %v1902, %v2116
      %v2182 = vadd.f32 %v1903, %v2119
      %v2183 = vadd.f32 %v1904, %v2122
      %v2184 = vadd.f32 %v1905, %v2125
      %v2185 = vadd.f32 %v1906, %v2128
      %v2186 = vadd.f32 %v1907, %v2131
      %v2187 = vadd.f32 %v1908, %v2134
      %v2188 = vadd.f32 %v1909, %v2137
      %v2189 = vadd.f32 %v1910, %v2140
      %v2190 = vadd.f32 %v1911, %v2143
      %v2191 = vadd.f32 %v1912, %v2146
      %v2192 = vadd.f32 %v1913, %v2149
      %v2193 = vadd.f32 %v1914, %v2152
      %v2194 = vadd.f32 %v1915, %v2155
      %v2195 = vadd.f32 %v1916, %v2158
      %v2196 = vadd.f32 %v1917, %v2161
      %v2197 = vadd.f32 %v1918, %v2164
      %v2198 = vld [vmem:[%s1919 + $0x1] sm:$0xff]
      %v2199 = vld [vmem:[%s1919 + $0x9] sm:$0xff]
      %v2200 = vld [vmem:[%s1919 + $0x19] sm:$0xff]
      %v2201 = vld [vmem:[%s1919 + $0x21] sm:$0xff]
      %v2202 = vld [vmem:[%s1919 + $0x31] sm:$0xff]
      %v2203 = vld [vmem:[%s1919 + $0x39] sm:$0xff]
      %v2204 = vld [vmem:[%s1919 + $0x49] sm:$0xff]
      %v2205 = vld [vmem:[%s1919 + $0x51] sm:$0xff]
      %v2206 = vld [vmem:[%s1919 + $0x61] sm:$0xff]
      %v2207 = vld [vmem:[%s1919 + $0x69] sm:$0xff]
      %v2208 = vld [vmem:[%s1919 + $0x79] sm:$0xff]
      %v2209 = vld [vmem:[%s1919 + $0x81] sm:$0xff]
      %v2210 = vld [vmem:[%s1919 + $0x91] sm:$0xff]
      %v2211 = vld [vmem:[%s1919 + $0x99] sm:$0xff]
      %v2212 = vld [vmem:[%s1919 + $0xa9] sm:$0xff]
      %v2213 = vld [vmem:[%s1919 + $0xb1] sm:$0xff]
      %v2214 = vld [vmem:[%s1919 + $0xc1] sm:$0xff]
      %v2215 = vld [vmem:[%s1919 + $0xc9] sm:$0xff]
      %v2216 = vld [vmem:[%s1919 + $0xd9] sm:$0xff]
      %v2217 = vld [vmem:[%s1919 + $0xe1] sm:$0xff]
      %v2218 = vld [vmem:[%s1919 + $0xf1] sm:$0xff]
      %v2219 = vld [vmem:[%s1919 + $0xf9] sm:$0xff]
      %v2220 = vld [vmem:[%s1919 + $0x109] sm:$0xff]
      %v2221 = vld [vmem:[%s1919 + $0x111] sm:$0xff]
      %v2222 = vld [vmem:[%s1919 + $0x121] sm:$0xff]
      %v2223 = vld [vmem:[%s1919 + $0x129] sm:$0xff]
      %v2224 = vld [vmem:[%s1919 + $0x139] sm:$0xff]
      %v2225 = vld [vmem:[%s1919 + $0x141] sm:$0xff]
      %v2226 = vld [vmem:[%s1919 + $0x151] sm:$0xff]
      %v2227 = vld [vmem:[%s1919 + $0x159] sm:$0xff]
      %v2228 = vld [vmem:[%s1919 + $0x169] sm:$0xff]
      %v2229 = vld [vmem:[%s1919 + $0x171] sm:$0xff]
      %s2230 = scalar_lea.vmem %s1, 28
      %v2231 = vld [vmem:[%s2230] sm:$0xf]
      %v2233 = vsel %vm204, %v2198, 0
      %v2236 = vsel %vm204, %v2199, 0
      %v2239 = vsel %vm204, %v2200, 0
      %v2242 = vsel %vm204, %v2201, 0
      %v2245 = vsel %vm204, %v2202, 0
      %v2248 = vsel %vm204, %v2203, 0
      %v2251 = vsel %vm204, %v2204, 0
      %v2254 = vsel %vm204, %v2205, 0
      %v2257 = vsel %vm204, %v2206, 0
      %v2260 = vsel %vm204, %v2207, 0
      %v2263 = vsel %vm204, %v2208, 0
      %v2266 = vsel %vm204, %v2209, 0
      %v2269 = vsel %vm204, %v2210, 0
      %v2272 = vsel %vm204, %v2211, 0
      %v2275 = vsel %vm204, %v2212, 0
      %v2278 = vsel %vm204, %v2213, 0
      %v2281 = vsel %vm204, %v2214, 0
      %v2284 = vsel %vm204, %v2215, 0
      %v2287 = vsel %vm204, %v2216, 0
      %v2290 = vsel %vm204, %v2217, 0
      %v2293 = vsel %vm204, %v2218, 0
      %v2296 = vsel %vm204, %v2219, 0
      %v2299 = vsel %vm204, %v2220, 0
      %v2302 = vsel %vm204, %v2221, 0
      %v2305 = vsel %vm204, %v2222, 0
      %v2308 = vsel %vm204, %v2223, 0
      %v2311 = vsel %vm204, %v2224, 0
      %v2314 = vsel %vm204, %v2225, 0
      %v2317 = vsel %vm204, %v2226, 0
      %v2320 = vsel %vm204, %v2227, 0
      %v2323 = vsel %vm204, %v2228, 0
      %v2326 = vsel %vm204, %v2229, 0
      %v2329 = vsel %vm478, %v2231, 0
      %2331 = vmatpush.msra.mxu0 0.0
      %2332 = vmatpush.msra.mxu0 0.0
      %2333 = vmatpush.msra.mxu0 0.0
      %2334 = vmatpush.msra.mxu0 0.0
      %2335 = vmatpush.msra.mxu0 0.0
      %2336 = vmatpush.msra.mxu0 0.0
      %2337 = vmatpush.msra.mxu0 0.0
      %2338 = vmatpush.msra.mxu0 0.0
      %2339 = vmatpush.msra.mxu0 0.0
      %2340 = vmatpush.msra.mxu0 0.0
      %2341 = vmatpush.msra.mxu0 0.0
      %2342 = vmatpush.msra.mxu0 0.0
      %2343 = vmatpush.msra.mxu0 0.0
      %2344 = vmatpush.msra.mxu0 0.0
      %2345 = vmatpush.msra.mxu0 0.0
      %2346 = vmatpush.msra.mxu0 %v2329
      %2347 = vmatmul.f32.gmra.mxu0 %v2233
      %v2348 = vpop.f32.mrf.mxu0
      %v2349 = vadd.f32 0.0, %v2348
      %2350 = vmatmul.f32.gmra.mxu0 %v2236
      %v2351 = vpop.f32.mrf.mxu0
      %v2352 = vadd.f32 0.0, %v2351
      %2353 = vmatmul.f32.gmra.mxu0 %v2239
      %v2354 = vpop.f32.mrf.mxu0
      %v2355 = vadd.f32 0.0, %v2354
      %2356 = vmatmul.f32.gmra.mxu0 %v2242
      %v2357 = vpop.f32.mrf.mxu0
      %v2358 = vadd.f32 0.0, %v2357
      %2359 = vmatmul.f32.gmra.mxu0 %v2245
      %v2360 = vpop.f32.mrf.mxu0
      %v2361 = vadd.f32 0.0, %v2360
      %2362 = vmatmul.f32.gmra.mxu0 %v2248
      %v2363 = vpop.f32.mrf.mxu0
      %v2364 = vadd.f32 0.0, %v2363
      %2365 = vmatmul.f32.gmra.mxu0 %v2251
      %v2366 = vpop.f32.mrf.mxu0
      %v2367 = vadd.f32 0.0, %v2366
      %2368 = vmatmul.f32.gmra.mxu0 %v2254
      %v2369 = vpop.f32.mrf.mxu0
      %v2370 = vadd.f32 0.0, %v2369
      %2371 = vmatmul.f32.gmra.mxu0 %v2257
      %v2372 = vpop.f32.mrf.mxu0
      %v2373 = vadd.f32 0.0, %v2372
      %2374 = vmatmul.f32.gmra.mxu0 %v2260
      %v2375 = vpop.f32.mrf.mxu0
      %v2376 = vadd.f32 0.0, %v2375
      %2377 = vmatmul.f32.gmra.mxu0 %v2263
      %v2378 = vpop.f32.mrf.mxu0
      %v2379 = vadd.f32 0.0, %v2378
      %2380 = vmatmul.f32.gmra.mxu0 %v2266
      %v2381 = vpop.f32.mrf.mxu0
      %v2382 = vadd.f32 0.0, %v2381
      %2383 = vmatmul.f32.gmra.mxu0 %v2269
      %v2384 = vpop.f32.mrf.mxu0
      %v2385 = vadd.f32 0.0, %v2384
      %2386 = vmatmul.f32.gmra.mxu0 %v2272
      %v2387 = vpop.f32.mrf.mxu0
      %v2388 = vadd.f32 0.0, %v2387
      %2389 = vmatmul.f32.gmra.mxu0 %v2275
      %v2390 = vpop.f32.mrf.mxu0
      %v2391 = vadd.f32 0.0, %v2390
      %2392 = vmatmul.f32.gmra.mxu0 %v2278
      %v2393 = vpop.f32.mrf.mxu0
      %v2394 = vadd.f32 0.0, %v2393
      %2395 = vmatmul.f32.gmra.mxu0 %v2281
      %v2396 = vpop.f32.mrf.mxu0
      %v2397 = vadd.f32 0.0, %v2396
      %2398 = vmatmul.f32.gmra.mxu0 %v2284
      %v2399 = vpop.f32.mrf.mxu0
      %v2400 = vadd.f32 0.0, %v2399
      %2401 = vmatmul.f32.gmra.mxu0 %v2287
      %v2402 = vpop.f32.mrf.mxu0
      %v2403 = vadd.f32 0.0, %v2402
      %2404 = vmatmul.f32.gmra.mxu0 %v2290
      %v2405 = vpop.f32.mrf.mxu0
      %v2406 = vadd.f32 0.0, %v2405
      %2407 = vmatmul.f32.gmra.mxu0 %v2293
      %v2408 = vpop.f32.mrf.mxu0
      %v2409 = vadd.f32 0.0, %v2408
      %2410 = vmatmul.f32.gmra.mxu0 %v2296
      %v2411 = vpop.f32.mrf.mxu0
      %v2412 = vadd.f32 0.0, %v2411
      %2413 = vmatmul.f32.gmra.mxu0 %v2299
      %v2414 = vpop.f32.mrf.mxu0
      %v2415 = vadd.f32 0.0, %v2414
      %2416 = vmatmul.f32.gmra.mxu0 %v2302
      %v2417 = vpop.f32.mrf.mxu0
      %v2418 = vadd.f32 0.0, %v2417
      %2419 = vmatmul.f32.gmra.mxu0 %v2305
      %v2420 = vpop.f32.mrf.mxu0
      %v2421 = vadd.f32 0.0, %v2420
      %2422 = vmatmul.f32.gmra.mxu0 %v2308
      %v2423 = vpop.f32.mrf.mxu0
      %v2424 = vadd.f32 0.0, %v2423
      %2425 = vmatmul.f32.gmra.mxu0 %v2311
      %v2426 = vpop.f32.mrf.mxu0
      %v2427 = vadd.f32 0.0, %v2426
      %2428 = vmatmul.f32.gmra.mxu0 %v2314
      %v2429 = vpop.f32.mrf.mxu0
      %v2430 = vadd.f32 0.0, %v2429
      %2431 = vmatmul.f32.gmra.mxu0 %v2317
      %v2432 = vpop.f32.mrf.mxu0
      %v2433 = vadd.f32 0.0, %v2432
      %2434 = vmatmul.f32.gmra.mxu0 %v2320
      %v2435 = vpop.f32.mrf.mxu0
      %v2436 = vadd.f32 0.0, %v2435
      %2437 = vmatmul.f32.gmra.mxu0 %v2323
      %v2438 = vpop.f32.mrf.mxu0
      %v2439 = vadd.f32 0.0, %v2438
      %2440 = vmatmul.f32.gmra.mxu0 %v2326
      %v2441 = vpop.f32.mrf.mxu0
      %v2442 = vadd.f32 0.0, %v2441
      %2443 = vdwg.mxu0
      %v2444 = vadd.f32 %v2166, %v2349
      %v2445 = vadd.f32 %v2167, %v2352
      %v2446 = vadd.f32 %v2168, %v2355
      %v2447 = vadd.f32 %v2169, %v2358
      %v2448 = vadd.f32 %v2170, %v2361
      %v2449 = vadd.f32 %v2171, %v2364
      %v2450 = vadd.f32 %v2172, %v2367
      %v2451 = vadd.f32 %v2173, %v2370
      %v2452 = vadd.f32 %v2174, %v2373
      %v2453 = vadd.f32 %v2175, %v2376
      %v2454 = vadd.f32 %v2176, %v2379
      %v2455 = vadd.f32 %v2177, %v2382
      %v2456 = vadd.f32 %v2178, %v2385
      %v2457 = vadd.f32 %v2179, %v2388
      %v2458 = vadd.f32 %v2180, %v2391
      %v2459 = vadd.f32 %v2181, %v2394
      %v2460 = vadd.f32 %v2182, %v2397
      %v2461 = vadd.f32 %v2183, %v2400
      %v2462 = vadd.f32 %v2184, %v2403
      %v2463 = vadd.f32 %v2185, %v2406
      %v2464 = vadd.f32 %v2186, %v2409
      %v2465 = vadd.f32 %v2187, %v2412
      %v2466 = vadd.f32 %v2188, %v2415
      %v2467 = vadd.f32 %v2189, %v2418
      %v2468 = vadd.f32 %v2190, %v2421
      %v2469 = vadd.f32 %v2191, %v2424
      %v2470 = vadd.f32 %v2192, %v2427
      %v2471 = vadd.f32 %v2193, %v2430
      %v2472 = vadd.f32 %v2194, %v2433
      %v2473 = vadd.f32 %v2195, %v2436
      %v2474 = vadd.f32 %v2196, %v2439
      %v2475 = vadd.f32 %v2197, %v2442
      %v2476 = vld [vmem:[%s1919 + $0x2] sm:$0xff]
      %v2477 = vld [vmem:[%s1919 + $0xa] sm:$0xff]
      %v2478 = vld [vmem:[%s1919 + $0x1a] sm:$0xff]
      %v2479 = vld [vmem:[%s1919 + $0x22] sm:$0xff]
      %v2480 = vld [vmem:[%s1919 + $0x32] sm:$0xff]
      %v2481 = vld [vmem:[%s1919 + $0x3a] sm:$0xff]
      %v2482 = vld [vmem:[%s1919 + $0x4a] sm:$0xff]
      %v2483 = vld [vmem:[%s1919 + $0x52] sm:$0xff]
      %v2484 = vld [vmem:[%s1919 + $0x62] sm:$0xff]
      %v2485 = vld [vmem:[%s1919 + $0x6a] sm:$0xff]
      %v2486 = vld [vmem:[%s1919 + $0x7a] sm:$0xff]
      %v2487 = vld [vmem:[%s1919 + $0x82] sm:$0xff]
      %v2488 = vld [vmem:[%s1919 + $0x92] sm:$0xff]
      %v2489 = vld [vmem:[%s1919 + $0x9a] sm:$0xff]
      %v2490 = vld [vmem:[%s1919 + $0xaa] sm:$0xff]
      %v2491 = vld [vmem:[%s1919 + $0xb2] sm:$0xff]
      %v2492 = vld [vmem:[%s1919 + $0xc2] sm:$0xff]
      %v2493 = vld [vmem:[%s1919 + $0xca] sm:$0xff]
      %v2494 = vld [vmem:[%s1919 + $0xda] sm:$0xff]
      %v2495 = vld [vmem:[%s1919 + $0xe2] sm:$0xff]
      %v2496 = vld [vmem:[%s1919 + $0xf2] sm:$0xff]
      %v2497 = vld [vmem:[%s1919 + $0xfa] sm:$0xff]
      %v2498 = vld [vmem:[%s1919 + $0x10a] sm:$0xff]
      %v2499 = vld [vmem:[%s1919 + $0x112] sm:$0xff]
      %v2500 = vld [vmem:[%s1919 + $0x122] sm:$0xff]
      %v2501 = vld [vmem:[%s1919 + $0x12a] sm:$0xff]
      %v2502 = vld [vmem:[%s1919 + $0x13a] sm:$0xff]
      %v2503 = vld [vmem:[%s1919 + $0x142] sm:$0xff]
      %v2504 = vld [vmem:[%s1919 + $0x152] sm:$0xff]
      %v2505 = vld [vmem:[%s1919 + $0x15a] sm:$0xff]
      %v2506 = vld [vmem:[%s1919 + $0x16a] sm:$0xff]
      %v2507 = vld [vmem:[%s1919 + $0x172] sm:$0xff]
      %s2508 = scalar_lea.vmem %s1, 32
      %v2509 = vld [vmem:[%s2508] sm:$0xf]
      %v2511 = vsel %vm204, %v2476, 0
      %v2514 = vsel %vm204, %v2477, 0
      %v2517 = vsel %vm204, %v2478, 0
      %v2520 = vsel %vm204, %v2479, 0
      %v2523 = vsel %vm204, %v2480, 0
      %v2526 = vsel %vm204, %v2481, 0
      %v2529 = vsel %vm204, %v2482, 0
      %v2532 = vsel %vm204, %v2483, 0
      %v2535 = vsel %vm204, %v2484, 0
      %v2538 = vsel %vm204, %v2485, 0
      %v2541 = vsel %vm204, %v2486, 0
      %v2544 = vsel %vm204, %v2487, 0
      %v2547 = vsel %vm204, %v2488, 0
      %v2550 = vsel %vm204, %v2489, 0
      %v2553 = vsel %vm204, %v2490, 0
      %v2556 = vsel %vm204, %v2491, 0
      %v2559 = vsel %vm204, %v2492, 0
      %v2562 = vsel %vm204, %v2493, 0
      %v2565 = vsel %vm204, %v2494, 0
      %v2568 = vsel %vm204, %v2495, 0
      %v2571 = vsel %vm204, %v2496, 0
      %v2574 = vsel %vm204, %v2497, 0
      %v2577 = vsel %vm204, %v2498, 0
      %v2580 = vsel %vm204, %v2499, 0
      %v2583 = vsel %vm204, %v2500, 0
      %v2586 = vsel %vm204, %v2501, 0
      %v2589 = vsel %vm204, %v2502, 0
      %v2592 = vsel %vm204, %v2503, 0
      %v2595 = vsel %vm204, %v2504, 0
      %v2598 = vsel %vm204, %v2505, 0
      %v2601 = vsel %vm204, %v2506, 0
      %v2604 = vsel %vm204, %v2507, 0
      %v2607 = vsel %vm478, %v2509, 0
      %2609 = vmatpush.msra.mxu0 0.0
      %2610 = vmatpush.msra.mxu0 0.0
      %2611 = vmatpush.msra.mxu0 0.0
      %2612 = vmatpush.msra.mxu0 0.0
      %2613 = vmatpush.msra.mxu0 0.0
      %2614 = vmatpush.msra.mxu0 0.0
      %2615 = vmatpush.msra.mxu0 0.0
      %2616 = vmatpush.msra.mxu0 0.0
      %2617 = vmatpush.msra.mxu0 0.0
      %2618 = vmatpush.msra.mxu0 0.0
      %2619 = vmatpush.msra.mxu0 0.0
      %2620 = vmatpush.msra.mxu0 0.0
      %2621 = vmatpush.msra.mxu0 0.0
      %2622 = vmatpush.msra.mxu0 0.0
      %2623 = vmatpush.msra.mxu0 0.0
      %2624 = vmatpush.msra.mxu0 %v2607
      %2625 = vmatmul.f32.gmra.mxu0 %v2511
      %v2626 = vpop.f32.mrf.mxu0
      %v2627 = vadd.f32 0.0, %v2626
      %2628 = vmatmul.f32.gmra.mxu0 %v2514
      %v2629 = vpop.f32.mrf.mxu0
      %v2630 = vadd.f32 0.0, %v2629
      %2631 = vmatmul.f32.gmra.mxu0 %v2517
      %v2632 = vpop.f32.mrf.mxu0
      %v2633 = vadd.f32 0.0, %v2632
      %2634 = vmatmul.f32.gmra.mxu0 %v2520
      %v2635 = vpop.f32.mrf.mxu0
      %v2636 = vadd.f32 0.0, %v2635
      %2637 = vmatmul.f32.gmra.mxu0 %v2523
      %v2638 = vpop.f32.mrf.mxu0
      %v2639 = vadd.f32 0.0, %v2638
      %2640 = vmatmul.f32.gmra.mxu0 %v2526
      %v2641 = vpop.f32.mrf.mxu0
      %v2642 = vadd.f32 0.0, %v2641
      %2643 = vmatmul.f32.gmra.mxu0 %v2529
      %v2644 = vpop.f32.mrf.mxu0
      %v2645 = vadd.f32 0.0, %v2644
      %2646 = vmatmul.f32.gmra.mxu0 %v2532
      %v2647 = vpop.f32.mrf.mxu0
      %v2648 = vadd.f32 0.0, %v2647
      %2649 = vmatmul.f32.gmra.mxu0 %v2535
      %v2650 = vpop.f32.mrf.mxu0
      %v2651 = vadd.f32 0.0, %v2650
      %2652 = vmatmul.f32.gmra.mxu0 %v2538
      %v2653 = vpop.f32.mrf.mxu0
      %v2654 = vadd.f32 0.0, %v2653
      %2655 = vmatmul.f32.gmra.mxu0 %v2541
      %v2656 = vpop.f32.mrf.mxu0
      %v2657 = vadd.f32 0.0, %v2656
      %2658 = vmatmul.f32.gmra.mxu0 %v2544
      %v2659 = vpop.f32.mrf.mxu0
      %v2660 = vadd.f32 0.0, %v2659
      %2661 = vmatmul.f32.gmra.mxu0 %v2547
      %v2662 = vpop.f32.mrf.mxu0
      %v2663 = vadd.f32 0.0, %v2662
      %2664 = vmatmul.f32.gmra.mxu0 %v2550
      %v2665 = vpop.f32.mrf.mxu0
      %v2666 = vadd.f32 0.0, %v2665
      %2667 = vmatmul.f32.gmra.mxu0 %v2553
      %v2668 = vpop.f32.mrf.mxu0
      %v2669 = vadd.f32 0.0, %v2668
      %2670 = vmatmul.f32.gmra.mxu0 %v2556
      %v2671 = vpop.f32.mrf.mxu0
      %v2672 = vadd.f32 0.0, %v2671
      %2673 = vmatmul.f32.gmra.mxu0 %v2559
      %v2674 = vpop.f32.mrf.mxu0
      %v2675 = vadd.f32 0.0, %v2674
      %2676 = vmatmul.f32.gmra.mxu0 %v2562
      %v2677 = vpop.f32.mrf.mxu0
      %v2678 = vadd.f32 0.0, %v2677
      %2679 = vmatmul.f32.gmra.mxu0 %v2565
      %v2680 = vpop.f32.mrf.mxu0
      %v2681 = vadd.f32 0.0, %v2680
      %2682 = vmatmul.f32.gmra.mxu0 %v2568
      %v2683 = vpop.f32.mrf.mxu0
      %v2684 = vadd.f32 0.0, %v2683
      %2685 = vmatmul.f32.gmra.mxu0 %v2571
      %v2686 = vpop.f32.mrf.mxu0
      %v2687 = vadd.f32 0.0, %v2686
      %2688 = vmatmul.f32.gmra.mxu0 %v2574
      %v2689 = vpop.f32.mrf.mxu0
      %v2690 = vadd.f32 0.0, %v2689
      %2691 = vmatmul.f32.gmra.mxu0 %v2577
      %v2692 = vpop.f32.mrf.mxu0
      %v2693 = vadd.f32 0.0, %v2692
      %2694 = vmatmul.f32.gmra.mxu0 %v2580
      %v2695 = vpop.f32.mrf.mxu0
      %v2696 = vadd.f32 0.0, %v2695
      %2697 = vmatmul.f32.gmra.mxu0 %v2583
      %v2698 = vpop.f32.mrf.mxu0
      %v2699 = vadd.f32 0.0, %v2698
      %2700 = vmatmul.f32.gmra.mxu0 %v2586
      %v2701 = vpop.f32.mrf.mxu0
      %v2702 = vadd.f32 0.0, %v2701
      %2703 = vmatmul.f32.gmra.mxu0 %v2589
      %v2704 = vpop.f32.mrf.mxu0
      %v2705 = vadd.f32 0.0, %v2704
      %2706 = vmatmul.f32.gmra.mxu0 %v2592
      %v2707 = vpop.f32.mrf.mxu0
      %v2708 = vadd.f32 0.0, %v2707
      %2709 = vmatmul.f32.gmra.mxu0 %v2595
      %v2710 = vpop.f32.mrf.mxu0
      %v2711 = vadd.f32 0.0, %v2710
      %2712 = vmatmul.f32.gmra.mxu0 %v2598
      %v2713 = vpop.f32.mrf.mxu0
      %v2714 = vadd.f32 0.0, %v2713
      %2715 = vmatmul.f32.gmra.mxu0 %v2601
      %v2716 = vpop.f32.mrf.mxu0
      %v2717 = vadd.f32 0.0, %v2716
      %2718 = vmatmul.f32.gmra.mxu0 %v2604
      %v2719 = vpop.f32.mrf.mxu0
      %v2720 = vadd.f32 0.0, %v2719
      %2721 = vdwg.mxu0
      %v2722 = vadd.f32 %v2444, %v2627
      %v2723 = vadd.f32 %v2445, %v2630
      %v2724 = vadd.f32 %v2446, %v2633
      %v2725 = vadd.f32 %v2447, %v2636
      %v2726 = vadd.f32 %v2448, %v2639
      %v2727 = vadd.f32 %v2449, %v2642
      %v2728 = vadd.f32 %v2450, %v2645
      %v2729 = vadd.f32 %v2451, %v2648
      %v2730 = vadd.f32 %v2452, %v2651
      %v2731 = vadd.f32 %v2453, %v2654
      %v2732 = vadd.f32 %v2454, %v2657
      %v2733 = vadd.f32 %v2455, %v2660
      %v2734 = vadd.f32 %v2456, %v2663
      %v2735 = vadd.f32 %v2457, %v2666
      %v2736 = vadd.f32 %v2458, %v2669
      %v2737 = vadd.f32 %v2459, %v2672
      %v2738 = vadd.f32 %v2460, %v2675
      %v2739 = vadd.f32 %v2461, %v2678
      %v2740 = vadd.f32 %v2462, %v2681
      %v2741 = vadd.f32 %v2463, %v2684
      %v2742 = vadd.f32 %v2464, %v2687
      %v2743 = vadd.f32 %v2465, %v2690
      %v2744 = vadd.f32 %v2466, %v2693
      %v2745 = vadd.f32 %v2467, %v2696
      %v2746 = vadd.f32 %v2468, %v2699
      %v2747 = vadd.f32 %v2469, %v2702
      %v2748 = vadd.f32 %v2470, %v2705
      %v2749 = vadd.f32 %v2471, %v2708
      %v2750 = vadd.f32 %v2472, %v2711
      %v2751 = vadd.f32 %v2473, %v2714
      %v2752 = vadd.f32 %v2474, %v2717
      %v2753 = vadd.f32 %v2475, %v2720
      %v2754 = vsel %vm204, %v2722, 0.0
      %v2755 = vsel %vm204, %v2723, 0.0
      %v2756 = vadd.f32 %v2754, %v2755
      %v2757 = vsel %vm204, %v2724, 0.0
      %v2758 = vadd.f32 %v2756, %v2757
      %v2759 = vsel %vm204, %v2725, 0.0
      %v2760 = vadd.f32 %v2758, %v2759
      %v2761 = vsel %vm204, %v2726, 0.0
      %v2762 = vadd.f32 %v2760, %v2761
      %v2763 = vsel %vm204, %v2727, 0.0
      %v2764 = vadd.f32 %v2762, %v2763
      %v2765 = vsel %vm204, %v2728, 0.0
      %v2766 = vadd.f32 %v2764, %v2765
      %v2767 = vsel %vm204, %v2729, 0.0
      %v2768 = vadd.f32 %v2766, %v2767
      %v2769 = vsel %vm204, %v2730, 0.0
      %v2770 = vadd.f32 %v2768, %v2769
      %v2771 = vsel %vm204, %v2731, 0.0
      %v2772 = vadd.f32 %v2770, %v2771
      %v2773 = vsel %vm204, %v2732, 0.0
      %v2774 = vadd.f32 %v2772, %v2773
      %v2775 = vsel %vm204, %v2733, 0.0
      %v2776 = vadd.f32 %v2774, %v2775
      %v2777 = vsel %vm204, %v2734, 0.0
      %v2778 = vadd.f32 %v2776, %v2777
      %v2779 = vsel %vm204, %v2735, 0.0
      %v2780 = vadd.f32 %v2778, %v2779
      %v2781 = vsel %vm204, %v2736, 0.0
      %v2782 = vadd.f32 %v2780, %v2781
      %v2783 = vsel %vm204, %v2737, 0.0
      %v2784 = vadd.f32 %v2782, %v2783
      %v2785 = vsel %vm204, %v2738, 0.0
      %v2786 = vadd.f32 %v2784, %v2785
      %v2787 = vsel %vm204, %v2739, 0.0
      %v2788 = vadd.f32 %v2786, %v2787
      %v2789 = vsel %vm204, %v2740, 0.0
      %v2790 = vadd.f32 %v2788, %v2789
      %v2791 = vsel %vm204, %v2741, 0.0
      %v2792 = vadd.f32 %v2790, %v2791
      %v2793 = vsel %vm204, %v2742, 0.0
      %v2794 = vadd.f32 %v2792, %v2793
      %v2795 = vsel %vm204, %v2743, 0.0
      %v2796 = vadd.f32 %v2794, %v2795
      %v2797 = vsel %vm204, %v2744, 0.0
      %v2798 = vadd.f32 %v2796, %v2797
      %v2799 = vsel %vm204, %v2745, 0.0
      %v2800 = vadd.f32 %v2798, %v2799
      %v2801 = vsel %vm204, %v2746, 0.0
      %v2802 = vadd.f32 %v2800, %v2801
      %v2803 = vsel %vm204, %v2747, 0.0
      %v2804 = vadd.f32 %v2802, %v2803
      %v2805 = vsel %vm204, %v2748, 0.0
      %v2806 = vadd.f32 %v2804, %v2805
      %v2807 = vsel %vm204, %v2749, 0.0
      %v2808 = vadd.f32 %v2806, %v2807
      %v2809 = vsel %vm204, %v2750, 0.0
      %v2810 = vadd.f32 %v2808, %v2809
      %v2811 = vsel %vm204, %v2751, 0.0
      %v2812 = vadd.f32 %v2810, %v2811
      %v2813 = vsel %vm204, %v2752, 0.0
      %v2814 = vadd.f32 %v2812, %v2813
      %v2815 = vsel %vm204, %v2753, 0.0
      %v2816 = vadd.f32 %v2814, %v2815
      %v2817 = vrot.slane %v2816, 4
      %v2818 = vadd.f32 %v2816, %v2817
      %v2819 = vrot.slane %v2818, 2
      %v2820 = vadd.f32 %v2818, %v2819
      %v2821 = vrot.slane %v2820, 1
      %v2822 = vadd.f32 %v2820, %v2821
      %v2823 = vrcp.pop 256.0
      %v2824 = vmul.f32 256.0, %v2823
      %v2825 = vsub.f32 1.0, %v2824
      %v2826 = vmul.f32 %v2823, %v2825
      %v2827 = vadd.f32 %v2823, %v2826
      %vm2828 = vweird.f32 %v2823
      %v2829 = vsel %vm2828, %v2823, %v2827
      %v2830 = vmul.f32 %v2822, %v2829
      %v2831 = vsub.f32 %v2722, %v2830
      %v2832 = vsub.f32 %v2723, %v2830
      %v2833 = vsub.f32 %v2724, %v2830
      %v2834 = vsub.f32 %v2725, %v2830
      %v2835 = vsub.f32 %v2726, %v2830
      %v2836 = vsub.f32 %v2727, %v2830
      %v2837 = vsub.f32 %v2728, %v2830
      %v2838 = vsub.f32 %v2729, %v2830
      %v2839 = vsub.f32 %v2730, %v2830
      %v2840 = vsub.f32 %v2731, %v2830
      %v2841 = vsub.f32 %v2732, %v2830
      %v2842 = vsub.f32 %v2733, %v2830
      %v2843 = vsub.f32 %v2734, %v2830
      %v2844 = vsub.f32 %v2735, %v2830
      %v2845 = vsub.f32 %v2736, %v2830
      %v2846 = vsub.f32 %v2737, %v2830
      %v2847 = vsub.f32 %v2738, %v2830
      %v2848 = vsub.f32 %v2739, %v2830
      %v2849 = vsub.f32 %v2740, %v2830
      %v2850 = vsub.f32 %v2741, %v2830
      %v2851 = vsub.f32 %v2742, %v2830
      %v2852 = vsub.f32 %v2743, %v2830
      %v2853 = vsub.f32 %v2744, %v2830
      %v2854 = vsub.f32 %v2745, %v2830
      %v2855 = vsub.f32 %v2746, %v2830
      %v2856 = vsub.f32 %v2747, %v2830
      %v2857 = vsub.f32 %v2748, %v2830
      %v2858 = vsub.f32 %v2749, %v2830
      %v2859 = vsub.f32 %v2750, %v2830
      %v2860 = vsub.f32 %v2751, %v2830
      %v2861 = vsub.f32 %v2752, %v2830
      %v2862 = vsub.f32 %v2753, %v2830
      %v2863 = vmul.f32 %v2831, %v2831
      %v2864 = vmul.f32 %v2832, %v2832
      %v2865 = vmul.f32 %v2833, %v2833
      %v2866 = vmul.f32 %v2834, %v2834
      %v2867 = vmul.f32 %v2835, %v2835
      %v2868 = vmul.f32 %v2836, %v2836
      %v2869 = vmul.f32 %v2837, %v2837
      %v2870 = vmul.f32 %v2838, %v2838
      %v2871 = vmul.f32 %v2839, %v2839
      %v2872 = vmul.f32 %v2840, %v2840
      %v2873 = vmul.f32 %v2841, %v2841
      %v2874 = vmul.f32 %v2842, %v2842
      %v2875 = vmul.f32 %v2843, %v2843
      %v2876 = vmul.f32 %v2844, %v2844
      %v2877 = vmul.f32 %v2845, %v2845
      %v2878 = vmul.f32 %v2846, %v2846
      %v2879 = vmul.f32 %v2847, %v2847
      %v2880 = vmul.f32 %v2848, %v2848
      %v2881 = vmul.f32 %v2849, %v2849
      %v2882 = vmul.f32 %v2850, %v2850
      %v2883 = vmul.f32 %v2851, %v2851
      %v2884 = vmul.f32 %v2852, %v2852
      %v2885 = vmul.f32 %v2853, %v2853
      %v2886 = vmul.f32 %v2854, %v2854
      %v2887 = vmul.f32 %v2855, %v2855
      %v2888 = vmul.f32 %v2856, %v2856
      %v2889 = vmul.f32 %v2857, %v2857
      %v2890 = vmul.f32 %v2858, %v2858
      %v2891 = vmul.f32 %v2859, %v2859
      %v2892 = vmul.f32 %v2860, %v2860
      %v2893 = vmul.f32 %v2861, %v2861
      %v2894 = vmul.f32 %v2862, %v2862
      %v2895 = vsel %vm204, %v2863, 0.0
      %v2896 = vsel %vm204, %v2864, 0.0
      %v2897 = vadd.f32 %v2895, %v2896
      %v2898 = vsel %vm204, %v2865, 0.0
      %v2899 = vadd.f32 %v2897, %v2898
      %v2900 = vsel %vm204, %v2866, 0.0
      %v2901 = vadd.f32 %v2899, %v2900
      %v2902 = vsel %vm204, %v2867, 0.0
      %v2903 = vadd.f32 %v2901, %v2902
      %v2904 = vsel %vm204, %v2868, 0.0
      %v2905 = vadd.f32 %v2903, %v2904
      %v2906 = vsel %vm204, %v2869, 0.0
      %v2907 = vadd.f32 %v2905, %v2906
      %v2908 = vsel %vm204, %v2870, 0.0
      %v2909 = vadd.f32 %v2907, %v2908
      %v2910 = vsel %vm204, %v2871, 0.0
      %v2911 = vadd.f32 %v2909, %v2910
      %v2912 = vsel %vm204, %v2872, 0.0
      %v2913 = vadd.f32 %v2911, %v2912
      %v2914 = vsel %vm204, %v2873, 0.0
      %v2915 = vadd.f32 %v2913, %v2914
      %v2916 = vsel %vm204, %v2874, 0.0
      %v2917 = vadd.f32 %v2915, %v2916
      %v2918 = vsel %vm204, %v2875, 0.0
      %v2919 = vadd.f32 %v2917, %v2918
      %v2920 = vsel %vm204, %v2876, 0.0
      %v2921 = vadd.f32 %v2919, %v2920
      %v2922 = vsel %vm204, %v2877, 0.0
      %v2923 = vadd.f32 %v2921, %v2922
      %v2924 = vsel %vm204, %v2878, 0.0
      %v2925 = vadd.f32 %v2923, %v2924
      %v2926 = vsel %vm204, %v2879, 0.0
      %v2927 = vadd.f32 %v2925, %v2926
      %v2928 = vsel %vm204, %v2880, 0.0
      %v2929 = vadd.f32 %v2927, %v2928
      %v2930 = vsel %vm204, %v2881, 0.0
      %v2931 = vadd.f32 %v2929, %v2930
      %v2932 = vsel %vm204, %v2882, 0.0
      %v2933 = vadd.f32 %v2931, %v2932
      %v2934 = vsel %vm204, %v2883, 0.0
      %v2935 = vadd.f32 %v2933, %v2934
      %v2936 = vsel %vm204, %v2884, 0.0
      %v2937 = vadd.f32 %v2935, %v2936
      %v2938 = vsel %vm204, %v2885, 0.0
      %v2939 = vadd.f32 %v2937, %v2938
      %v2940 = vsel %vm204, %v2886, 0.0
      %v2941 = vadd.f32 %v2939, %v2940
      %v2942 = vsel %vm204, %v2887, 0.0
      %v2943 = vadd.f32 %v2941, %v2942
      %v2944 = vsel %vm204, %v2888, 0.0
      %v2945 = vadd.f32 %v2943, %v2944
      %v2946 = vsel %vm204, %v2889, 0.0
      %v2947 = vadd.f32 %v2945, %v2946
      %v2948 = vsel %vm204, %v2890, 0.0
      %v2949 = vadd.f32 %v2947, %v2948
      %v2950 = vsel %vm204, %v2891, 0.0
      %v2951 = vadd.f32 %v2949, %v2950
      %v2952 = vsel %vm204, %v2892, 0.0
      %v2953 = vadd.f32 %v2951, %v2952
      %v2954 = vsel %vm204, %v2893, 0.0
      %v2955 = vadd.f32 %v2953, %v2954
      %v2956 = vsel %vm204, %v2894, 0.0
      %v2957 = vadd.f32 %v2955, %v2956
      %v2958 = vrot.slane %v2957, 4
      %v2959 = vadd.f32 %v2957, %v2958
      %v2960 = vrot.slane %v2959, 2
      %v2961 = vadd.f32 %v2959, %v2960
      %v2962 = vrot.slane %v2961, 1
      %v2963 = vadd.f32 %v2961, %v2962
      %v2964 = vmul.f32 %v2963, %v2829
      %v2965 = vadd.f32 %v2964, 1e-05
      %v2966 = vrsqrt.pop %v2965
      %v2967 = vmul.f32 %v2966, %v2965
      %v2968 = vmul.f32 %v2967, %v2966
      %v2969 = vmul.f32 0.5, %v2968
      %v2970 = vsub.f32 1.5, %v2969
      %v2971 = vmul.f32 %v2966, %v2970
      %vm2972 = vweird.f32 %v2965
      %vm2973 = vweird.f32 %v2966
      %vm2974 = vmor %vm2972, %vm2973
      %v2975 = vsel %vm2974, %v2966, %v2971
      %v2976 = vmul.f32 %v2831, %v2975
      %v2977 = vmul.f32 %v2832, %v2975
      %v2978 = vmul.f32 %v2833, %v2975
      %v2979 = vmul.f32 %v2834, %v2975
      %v2980 = vmul.f32 %v2835, %v2975
      %v2981 = vmul.f32 %v2836, %v2975
      %v2982 = vmul.f32 %v2837, %v2975
      %v2983 = vmul.f32 %v2838, %v2975
      %v2984 = vmul.f32 %v2839, %v2975
      %v2985 = vmul.f32 %v2840, %v2975
      %v2986 = vmul.f32 %v2841, %v2975
      %v2987 = vmul.f32 %v2842, %v2975
      %v2988 = vmul.f32 %v2843, %v2975
      %v2989 = vmul.f32 %v2844, %v2975
      %v2990 = vmul.f32 %v2845, %v2975
      %v2991 = vmul.f32 %v2846, %v2975
      %v2992 = vmul.f32 %v2847, %v2975
      %v2993 = vmul.f32 %v2848, %v2975
      %v2994 = vmul.f32 %v2849, %v2975
      %v2995 = vmul.f32 %v2850, %v2975
      %v2996 = vmul.f32 %v2851, %v2975
      %v2997 = vmul.f32 %v2852, %v2975
      %v2998 = vmul.f32 %v2853, %v2975
      %v2999 = vmul.f32 %v2854, %v2975
      %v3000 = vmul.f32 %v2855, %v2975
      %v3001 = vmul.f32 %v2856, %v2975
      %v3002 = vmul.f32 %v2857, %v2975
      %v3003 = vmul.f32 %v2858, %v2975
      %v3004 = vmul.f32 %v2859, %v2975
      %v3005 = vmul.f32 %v2860, %v2975
      %v3006 = vmul.f32 %v2861, %v2975
      %v3007 = vmul.f32 %v2862, %v2975
      %v3008 = vmax.f32 %v2976, 0.0
      %v3009 = vmax.f32 %v2977, 0.0
      %v3010 = vmax.f32 %v2978, 0.0
      %v3011 = vmax.f32 %v2979, 0.0
      %v3012 = vmax.f32 %v2980, 0.0
      %v3013 = vmax.f32 %v2981, 0.0
      %v3014 = vmax.f32 %v2982, 0.0
      %v3015 = vmax.f32 %v2983, 0.0
      %v3016 = vmax.f32 %v2984, 0.0
      %v3017 = vmax.f32 %v2985, 0.0
      %v3018 = vmax.f32 %v2986, 0.0
      %v3019 = vmax.f32 %v2987, 0.0
      %v3020 = vmax.f32 %v2988, 0.0
      %v3021 = vmax.f32 %v2989, 0.0
      %v3022 = vmax.f32 %v2990, 0.0
      %v3023 = vmax.f32 %v2991, 0.0
      %v3024 = vmax.f32 %v2992, 0.0
      %v3025 = vmax.f32 %v2993, 0.0
      %v3026 = vmax.f32 %v2994, 0.0
      %v3027 = vmax.f32 %v2995, 0.0
      %v3028 = vmax.f32 %v2996, 0.0
      %v3029 = vmax.f32 %v2997, 0.0
      %v3030 = vmax.f32 %v2998, 0.0
      %v3031 = vmax.f32 %v2999, 0.0
      %v3032 = vmax.f32 %v3000, 0.0
      %v3033 = vmax.f32 %v3001, 0.0
      %v3034 = vmax.f32 %v3002, 0.0
      %v3035 = vmax.f32 %v3003, 0.0
      %v3036 = vmax.f32 %v3004, 0.0
      %v3037 = vmax.f32 %v3005, 0.0
      %v3038 = vmax.f32 %v3006, 0.0
      %v3039 = vmax.f32 %v3007, 0.0
      %3040 = vst.msk [vmem:[%s203 + $0x1] sm:$0xff] %vm204, %v3008
      %3041 = vst.msk [vmem:[%s203 + $0x9] sm:$0xff] %vm204, %v3009
      %3042 = vst.msk [vmem:[%s203 + $0x19] sm:$0xff] %vm204, %v3010
      %3043 = vst.msk [vmem:[%s203 + $0x21] sm:$0xff] %vm204, %v3011
      %3044 = vst.msk [vmem:[%s203 + $0x31] sm:$0xff] %vm204, %v3012
      %3045 = vst.msk [vmem:[%s203 + $0x39] sm:$0xff] %vm204, %v3013
      %3046 = vst.msk [vmem:[%s203 + $0x49] sm:$0xff] %vm204, %v3014
      %3047 = vst.msk [vmem:[%s203 + $0x51] sm:$0xff] %vm204, %v3015
      %3048 = vst.msk [vmem:[%s203 + $0x61] sm:$0xff] %vm204, %v3016
      %3049 = vst.msk [vmem:[%s203 + $0x69] sm:$0xff] %vm204, %v3017
      %3050 = vst.msk [vmem:[%s203 + $0x79] sm:$0xff] %vm204, %v3018
      %3051 = vst.msk [vmem:[%s203 + $0x81] sm:$0xff] %vm204, %v3019
      %3052 = vst.msk [vmem:[%s203 + $0x91] sm:$0xff] %vm204, %v3020
      %3053 = vst.msk [vmem:[%s203 + $0x99] sm:$0xff] %vm204, %v3021
      %3054 = vst.msk [vmem:[%s203 + $0xa9] sm:$0xff] %vm204, %v3022
      %3055 = vst.msk [vmem:[%s203 + $0xb1] sm:$0xff] %vm204, %v3023
      %3056 = vst.msk [vmem:[%s203 + $0xc1] sm:$0xff] %vm204, %v3024
      %3057 = vst.msk [vmem:[%s203 + $0xc9] sm:$0xff] %vm204, %v3025
      %3058 = vst.msk [vmem:[%s203 + $0xd9] sm:$0xff] %vm204, %v3026
      %3059 = vst.msk [vmem:[%s203 + $0xe1] sm:$0xff] %vm204, %v3027
      %3060 = vst.msk [vmem:[%s203 + $0xf1] sm:$0xff] %vm204, %v3028
      %3061 = vst.msk [vmem:[%s203 + $0xf9] sm:$0xff] %vm204, %v3029
      %3062 = vst.msk [vmem:[%s203 + $0x109] sm:$0xff] %vm204, %v3030
      %3063 = vst.msk [vmem:[%s203 + $0x111] sm:$0xff] %vm204, %v3031
      %3064 = vst.msk [vmem:[%s203 + $0x121] sm:$0xff] %vm204, %v3032
      %3065 = vst.msk [vmem:[%s203 + $0x129] sm:$0xff] %vm204, %v3033
      %3066 = vst.msk [vmem:[%s203 + $0x139] sm:$0xff] %vm204, %v3034
      %3067 = vst.msk [vmem:[%s203 + $0x141] sm:$0xff] %vm204, %v3035
      %3068 = vst.msk [vmem:[%s203 + $0x151] sm:$0xff] %vm204, %v3036
      %3069 = vst.msk [vmem:[%s203 + $0x159] sm:$0xff] %vm204, %v3037
      %3070 = vst.msk [vmem:[%s203 + $0x169] sm:$0xff] %vm204, %v3038
      %3071 = vst.msk [vmem:[%s203 + $0x171] sm:$0xff] %vm204, %v3039
      %3072 = vst.msk [vmem:[#allocation2 + $0x1] sm:$0xff] %vm204, %v3010
      %3073 = vst.msk [vmem:[#allocation2 + $0x9] sm:$0xff] %vm204, %v3011
      %3074 = vst.msk [vmem:[%s239 + $0x1] sm:$0xff] %vm204, %v3036
      %3075 = vst.msk [vmem:[%s239 + $0x9] sm:$0xff] %vm204, %v3037
      %v3076 = vld [vmem:[#allocation2 + $0x2] sm:$0x1]
      %v3077 = vld [vmem:[#allocation2 + $0x1a] sm:$0x1]
      %v3078 = vld [vmem:[#allocation2 + $0x32] sm:$0x1]
      %v3079 = vld [vmem:[#allocation2 + $0x4a] sm:$0x1]
      %v3080 = vld [vmem:[#allocation2 + $0x62] sm:$0x1]
      %v3081 = vld [vmem:[#allocation2 + $0x7a] sm:$0x1]
      %v3082 = vld [vmem:[#allocation2 + $0x92] sm:$0x1]
      %v3083 = vld [vmem:[#allocation2 + $0xaa] sm:$0x1]
      %v3084 = vld [vmem:[#allocation2 + $0xc2] sm:$0x1]
      %v3085 = vld [vmem:[#allocation2 + $0xda] sm:$0x1]
      %v3086 = vld [vmem:[#allocation2 + $0xf2] sm:$0x1]
      %v3087 = vld [vmem:[#allocation2 + $0x10a] sm:$0x1]
      %v3088 = vld [vmem:[#allocation2 + $0x122] sm:$0x1]
      %v3089 = vld [vmem:[#allocation2 + $0x13a] sm:$0x1]
      %v3090 = vld [vmem:[#allocation2 + $0x152] sm:$0x1]
      %v3091 = vld [vmem:[#allocation2 + $0x16a] sm:$0x1]
      %v3092 = vld [vmem:[#allocation2 + $0x182] sm:$0x1]
      %v3093 = vld [vmem:[#allocation2 + $0x19a] sm:$0x1]
      %3094 = vst.msk [vmem:[#allocation2] sm:$0x1] %vm260, %v3076
      %3095 = vst.msk [vmem:[#allocation2 + $0x18] sm:$0x1] %vm260, %v3077
      %3096 = vst.msk [vmem:[#allocation2 + $0x30] sm:$0x1] %vm260, %v3078
      %3097 = vst.msk [vmem:[#allocation2 + $0x48] sm:$0x1] %vm260, %v3079
      %3098 = vst.msk [vmem:[#allocation2 + $0x60] sm:$0x1] %vm260, %v3080
      %3099 = vst.msk [vmem:[#allocation2 + $0x78] sm:$0x1] %vm260, %v3081
      %3100 = vst.msk [vmem:[#allocation2 + $0x90] sm:$0x1] %vm260, %v3082
      %3101 = vst.msk [vmem:[#allocation2 + $0xa8] sm:$0x1] %vm260, %v3083
      %3102 = vst.msk [vmem:[#allocation2 + $0xc0] sm:$0x1] %vm260, %v3084
      %3103 = vst.msk [vmem:[#allocation2 + $0xd8] sm:$0x1] %vm260, %v3085
      %3104 = vst.msk [vmem:[#allocation2 + $0xf0] sm:$0x1] %vm260, %v3086
      %3105 = vst.msk [vmem:[#allocation2 + $0x108] sm:$0x1] %vm260, %v3087
      %3106 = vst.msk [vmem:[#allocation2 + $0x120] sm:$0x1] %vm260, %v3088
      %3107 = vst.msk [vmem:[#allocation2 + $0x138] sm:$0x1] %vm260, %v3089
      %3108 = vst.msk [vmem:[#allocation2 + $0x150] sm:$0x1] %vm260, %v3090
      %3109 = vst.msk [vmem:[#allocation2 + $0x168] sm:$0x1] %vm260, %v3091
      %3110 = vst.msk [vmem:[#allocation2 + $0x180] sm:$0x1] %vm260, %v3092
      %3111 = vst.msk [vmem:[#allocation2 + $0x198] sm:$0x1] %vm260, %v3093
      %v3112 = vld [vmem:[#allocation2 + $0xf] sm:$0x1]
      %v3113 = vld [vmem:[#allocation2 + $0x27] sm:$0x1]
      %v3114 = vld [vmem:[#allocation2 + $0x3f] sm:$0x1]
      %v3115 = vld [vmem:[#allocation2 + $0x57] sm:$0x1]
      %v3116 = vld [vmem:[#allocation2 + $0x6f] sm:$0x1]
      %v3117 = vld [vmem:[#allocation2 + $0x87] sm:$0x1]
      %v3118 = vld [vmem:[#allocation2 + $0x9f] sm:$0x1]
      %v3119 = vld [vmem:[#allocation2 + $0xb7] sm:$0x1]
      %v3120 = vld [vmem:[#allocation2 + $0xcf] sm:$0x1]
      %v3121 = vld [vmem:[#allocation2 + $0xe7] sm:$0x1]
      %v3122 = vld [vmem:[#allocation2 + $0xff] sm:$0x1]
      %v3123 = vld [vmem:[#allocation2 + $0x117] sm:$0x1]
      %v3124 = vld [vmem:[#allocation2 + $0x12f] sm:$0x1]
      %v3125 = vld [vmem:[#allocation2 + $0x147] sm:$0x1]
      %v3126 = vld [vmem:[#allocation2 + $0x15f] sm:$0x1]
      %v3127 = vld [vmem:[#allocation2 + $0x177] sm:$0x1]
      %v3128 = vld [vmem:[#allocation2 + $0x18f] sm:$0x1]
      %v3129 = vld [vmem:[#allocation2 + $0x1a7] sm:$0x1]
      %3130 = vst.msk [vmem:[#allocation2 + $0x11] sm:$0x1] %vm260, %v3112
      %3131 = vst.msk [vmem:[#allocation2 + $0x29] sm:$0x1] %vm260, %v3113
      %3132 = vst.msk [vmem:[#allocation2 + $0x41] sm:$0x1] %vm260, %v3114
      %3133 = vst.msk [vmem:[#allocation2 + $0x59] sm:$0x1] %vm260, %v3115
      %3134 = vst.msk [vmem:[#allocation2 + $0x71] sm:$0x1] %vm260, %v3116
      %3135 = vst.msk [vmem:[#allocation2 + $0x89] sm:$0x1] %vm260, %v3117
      %3136 = vst.msk [vmem:[#allocation2 + $0xa1] sm:$0x1] %vm260, %v3118
      %3137 = vst.msk [vmem:[#allocation2 + $0xb9] sm:$0x1] %vm260, %v3119
      %3138 = vst.msk [vmem:[#allocation2 + $0xd1] sm:$0x1] %vm260, %v3120
      %3139 = vst.msk [vmem:[#allocation2 + $0xe9] sm:$0x1] %vm260, %v3121
      %3140 = vst.msk [vmem:[#allocation2 + $0x101] sm:$0x1] %vm260, %v3122
      %3141 = vst.msk [vmem:[#allocation2 + $0x119] sm:$0x1] %vm260, %v3123
      %3142 = vst.msk [vmem:[#allocation2 + $0x131] sm:$0x1] %vm260, %v3124
      %3143 = vst.msk [vmem:[#allocation2 + $0x149] sm:$0x1] %vm260, %v3125
      %3144 = vst.msk [vmem:[#allocation2 + $0x161] sm:$0x1] %vm260, %v3126
      %3145 = vst.msk [vmem:[#allocation2 + $0x179] sm:$0x1] %vm260, %v3127
      %3146 = vst.msk [vmem:[#allocation2 + $0x191] sm:$0x1] %vm260, %v3128
      %3147 = vst.msk [vmem:[#allocation2 + $0x1a9] sm:$0x1] %vm260, %v3129
      %v3148 = vld [vmem:[#allocation2] sm:$0xff]
      %v3149 = vld [vmem:[#allocation2 + $0x8] sm:$0xff]
      %v3150 = vld [vmem:[#allocation2 + $0x18] sm:$0xff]
      %v3151 = vld [vmem:[#allocation2 + $0x20] sm:$0xff]
      %v3152 = vld [vmem:[#allocation2 + $0x30] sm:$0xff]
      %v3153 = vld [vmem:[#allocation2 + $0x38] sm:$0xff]
      %v3154 = vld [vmem:[#allocation2 + $0x48] sm:$0xff]
      %v3155 = vld [vmem:[#allocation2 + $0x50] sm:$0xff]
      %v3156 = vld [vmem:[#allocation2 + $0x60] sm:$0xff]
      %v3157 = vld [vmem:[#allocation2 + $0x68] sm:$0xff]
      %v3158 = vld [vmem:[#allocation2 + $0x78] sm:$0xff]
      %v3159 = vld [vmem:[#allocation2 + $0x80] sm:$0xff]
      %v3160 = vld [vmem:[#allocation2 + $0x90] sm:$0xff]
      %v3161 = vld [vmem:[#allocation2 + $0x98] sm:$0xff]
      %v3162 = vld [vmem:[#allocation2 + $0xa8] sm:$0xff]
      %v3163 = vld [vmem:[#allocation2 + $0xb0] sm:$0xff]
      %v3164 = vld [vmem:[#allocation2 + $0xc0] sm:$0xff]
      %v3165 = vld [vmem:[#allocation2 + $0xc8] sm:$0xff]
      %v3166 = vld [vmem:[#allocation2 + $0xd8] sm:$0xff]
      %v3167 = vld [vmem:[#allocation2 + $0xe0] sm:$0xff]
      %v3168 = vld [vmem:[#allocation2 + $0xf0] sm:$0xff]
      %v3169 = vld [vmem:[#allocation2 + $0xf8] sm:$0xff]
      %v3170 = vld [vmem:[#allocation2 + $0x108] sm:$0xff]
      %v3171 = vld [vmem:[#allocation2 + $0x110] sm:$0xff]
      %v3172 = vld [vmem:[#allocation2 + $0x120] sm:$0xff]
      %v3173 = vld [vmem:[#allocation2 + $0x128] sm:$0xff]
      %v3174 = vld [vmem:[#allocation2 + $0x138] sm:$0xff]
      %v3175 = vld [vmem:[#allocation2 + $0x140] sm:$0xff]
      %v3176 = vld [vmem:[#allocation2 + $0x150] sm:$0xff]
      %v3177 = vld [vmem:[#allocation2 + $0x158] sm:$0xff]
      %v3178 = vld [vmem:[#allocation2 + $0x168] sm:$0xff]
      %v3179 = vld [vmem:[#allocation2 + $0x170] sm:$0xff]
      %v3180 = vld [vmem:[%s2] sm:$0xf]
      %v3181 = vld [vmem:[#allocation2 + $0x1] sm:$0xff]
      %v3182 = vld [vmem:[#allocation2 + $0x9] sm:$0xff]
      %v3183 = vld [vmem:[#allocation2 + $0x19] sm:$0xff]
      %v3184 = vld [vmem:[#allocation2 + $0x21] sm:$0xff]
      %v3185 = vld [vmem:[#allocation2 + $0x31] sm:$0xff]
      %v3186 = vld [vmem:[#allocation2 + $0x39] sm:$0xff]
      %v3187 = vld [vmem:[#allocation2 + $0x49] sm:$0xff]
      %v3188 = vld [vmem:[#allocation2 + $0x51] sm:$0xff]
      %v3189 = vld [vmem:[#allocation2 + $0x61] sm:$0xff]
      %v3190 = vld [vmem:[#allocation2 + $0x69] sm:$0xff]
      %v3191 = vld [vmem:[#allocation2 + $0x79] sm:$0xff]
      %v3192 = vld [vmem:[#allocation2 + $0x81] sm:$0xff]
      %v3193 = vld [vmem:[#allocation2 + $0x91] sm:$0xff]
      %v3194 = vld [vmem:[#allocation2 + $0x99] sm:$0xff]
      %v3195 = vld [vmem:[#allocation2 + $0xa9] sm:$0xff]
      %v3196 = vld [vmem:[#allocation2 + $0xb1] sm:$0xff]
      %v3197 = vld [vmem:[#allocation2 + $0xc1] sm:$0xff]
      %v3198 = vld [vmem:[#allocation2 + $0xc9] sm:$0xff]
      %v3199 = vld [vmem:[#allocation2 + $0xd9] sm:$0xff]
      %v3200 = vld [vmem:[#allocation2 + $0xe1] sm:$0xff]
      %v3201 = vld [vmem:[#allocation2 + $0xf1] sm:$0xff]
      %v3202 = vld [vmem:[#allocation2 + $0xf9] sm:$0xff]
      %v3203 = vld [vmem:[#allocation2 + $0x109] sm:$0xff]
      %v3204 = vld [vmem:[#allocation2 + $0x111] sm:$0xff]
      %v3205 = vld [vmem:[#allocation2 + $0x121] sm:$0xff]
      %v3206 = vld [vmem:[#allocation2 + $0x129] sm:$0xff]
      %v3207 = vld [vmem:[#allocation2 + $0x139] sm:$0xff]
      %v3208 = vld [vmem:[#allocation2 + $0x141] sm:$0xff]
      %v3209 = vld [vmem:[#allocation2 + $0x151] sm:$0xff]
      %v3210 = vld [vmem:[#allocation2 + $0x159] sm:$0xff]
      %v3211 = vld [vmem:[#allocation2 + $0x169] sm:$0xff]
      %v3212 = vld [vmem:[#allocation2 + $0x171] sm:$0xff]
      %s3213 = scalar_lea.vmem %s2, 4
      %v3214 = vld [vmem:[%s3213] sm:$0xf]
      %v3216 = vsel %vm204, %v3181, 0
      %v3219 = vsel %vm204, %v3182, 0
      %v3222 = vsel %vm204, %v3183, 0
      %v3225 = vsel %vm204, %v3184, 0
      %v3228 = vsel %vm204, %v3185, 0
      %v3231 = vsel %vm204, %v3186, 0
      %v3234 = vsel %vm204, %v3187, 0
      %v3237 = vsel %vm204, %v3188, 0
      %v3240 = vsel %vm204, %v3189, 0
      %v3243 = vsel %vm204, %v3190, 0
      %v3246 = vsel %vm204, %v3191, 0
      %v3249 = vsel %vm204, %v3192, 0
      %v3252 = vsel %vm204, %v3193, 0
      %v3255 = vsel %vm204, %v3194, 0
      %v3258 = vsel %vm204, %v3195, 0
      %v3261 = vsel %vm204, %v3196, 0
      %v3264 = vsel %vm204, %v3197, 0
      %v3267 = vsel %vm204, %v3198, 0
      %v3270 = vsel %vm204, %v3199, 0
      %v3273 = vsel %vm204, %v3200, 0
      %v3276 = vsel %vm204, %v3201, 0
      %v3279 = vsel %vm204, %v3202, 0
      %v3282 = vsel %vm204, %v3203, 0
      %v3285 = vsel %vm204, %v3204, 0
      %v3288 = vsel %vm204, %v3205, 0
      %v3291 = vsel %vm204, %v3206, 0
      %v3294 = vsel %vm204, %v3207, 0
      %v3297 = vsel %vm204, %v3208, 0
      %v3300 = vsel %vm204, %v3209, 0
      %v3303 = vsel %vm204, %v3210, 0
      %v3306 = vsel %vm204, %v3211, 0
      %v3309 = vsel %vm204, %v3212, 0
      %v3312 = vsel %vm478, %v3214, 0
      %3314 = vmatpush.msra.mxu0 0.0
      %3315 = vmatpush.msra.mxu0 0.0
      %3316 = vmatpush.msra.mxu0 0.0
      %3317 = vmatpush.msra.mxu0 0.0
      %3318 = vmatpush.msra.mxu0 0.0
      %3319 = vmatpush.msra.mxu0 0.0
      %3320 = vmatpush.msra.mxu0 0.0
      %3321 = vmatpush.msra.mxu0 0.0
      %3322 = vmatpush.msra.mxu0 0.0
      %3323 = vmatpush.msra.mxu0 0.0
      %3324 = vmatpush.msra.mxu0 0.0
      %3325 = vmatpush.msra.mxu0 0.0
      %3326 = vmatpush.msra.mxu0 0.0
      %3327 = vmatpush.msra.mxu0 0.0
      %3328 = vmatpush.msra.mxu0 0.0
      %3329 = vmatpush.msra.mxu0 %v3312
      %3330 = vmatmul.f32.gmra.mxu0 %v3216
      %v3331 = vpop.f32.mrf.mxu0
      %v3332 = vadd.f32 0.0, %v3331
      %3333 = vmatmul.f32.gmra.mxu0 %v3219
      %v3334 = vpop.f32.mrf.mxu0
      %v3335 = vadd.f32 0.0, %v3334
      %3336 = vmatmul.f32.gmra.mxu0 %v3222
      %v3337 = vpop.f32.mrf.mxu0
      %v3338 = vadd.f32 0.0, %v3337
      %3339 = vmatmul.f32.gmra.mxu0 %v3225
      %v3340 = vpop.f32.mrf.mxu0
      %v3341 = vadd.f32 0.0, %v3340
      %3342 = vmatmul.f32.gmra.mxu0 %v3228
      %v3343 = vpop.f32.mrf.mxu0
      %v3344 = vadd.f32 0.0, %v3343
      %3345 = vmatmul.f32.gmra.mxu0 %v3231
      %v3346 = vpop.f32.mrf.mxu0
      %v3347 = vadd.f32 0.0, %v3346
      %3348 = vmatmul.f32.gmra.mxu0 %v3234
      %v3349 = vpop.f32.mrf.mxu0
      %v3350 = vadd.f32 0.0, %v3349
      %3351 = vmatmul.f32.gmra.mxu0 %v3237
      %v3352 = vpop.f32.mrf.mxu0
      %v3353 = vadd.f32 0.0, %v3352
      %3354 = vmatmul.f32.gmra.mxu0 %v3240
      %v3355 = vpop.f32.mrf.mxu0
      %v3356 = vadd.f32 0.0, %v3355
      %3357 = vmatmul.f32.gmra.mxu0 %v3243
      %v3358 = vpop.f32.mrf.mxu0
      %v3359 = vadd.f32 0.0, %v3358
      %3360 = vmatmul.f32.gmra.mxu0 %v3246
      %v3361 = vpop.f32.mrf.mxu0
      %v3362 = vadd.f32 0.0, %v3361
      %3363 = vmatmul.f32.gmra.mxu0 %v3249
      %v3364 = vpop.f32.mrf.mxu0
      %v3365 = vadd.f32 0.0, %v3364
      %3366 = vmatmul.f32.gmra.mxu0 %v3252
      %v3367 = vpop.f32.mrf.mxu0
      %v3368 = vadd.f32 0.0, %v3367
      %3369 = vmatmul.f32.gmra.mxu0 %v3255
      %v3370 = vpop.f32.mrf.mxu0
      %v3371 = vadd.f32 0.0, %v3370
      %3372 = vmatmul.f32.gmra.mxu0 %v3258
      %v3373 = vpop.f32.mrf.mxu0
      %v3374 = vadd.f32 0.0, %v3373
      %3375 = vmatmul.f32.gmra.mxu0 %v3261
      %v3376 = vpop.f32.mrf.mxu0
      %v3377 = vadd.f32 0.0, %v3376
      %3378 = vmatmul.f32.gmra.mxu0 %v3264
      %v3379 = vpop.f32.mrf.mxu0
      %v3380 = vadd.f32 0.0, %v3379
      %3381 = vmatmul.f32.gmra.mxu0 %v3267
      %v3382 = vpop.f32.mrf.mxu0
      %v3383 = vadd.f32 0.0, %v3382
      %3384 = vmatmul.f32.gmra.mxu0 %v3270
      %v3385 = vpop.f32.mrf.mxu0
      %v3386 = vadd.f32 0.0, %v3385
      %3387 = vmatmul.f32.gmra.mxu0 %v3273
      %v3388 = vpop.f32.mrf.mxu0
      %v3389 = vadd.f32 0.0, %v3388
      %3390 = vmatmul.f32.gmra.mxu0 %v3276
      %v3391 = vpop.f32.mrf.mxu0
      %v3392 = vadd.f32 0.0, %v3391
      %3393 = vmatmul.f32.gmra.mxu0 %v3279
      %v3394 = vpop.f32.mrf.mxu0
      %v3395 = vadd.f32 0.0, %v3394
      %3396 = vmatmul.f32.gmra.mxu0 %v3282
      %v3397 = vpop.f32.mrf.mxu0
      %v3398 = vadd.f32 0.0, %v3397
      %3399 = vmatmul.f32.gmra.mxu0 %v3285
      %v3400 = vpop.f32.mrf.mxu0
      %v3401 = vadd.f32 0.0, %v3400
      %3402 = vmatmul.f32.gmra.mxu0 %v3288
      %v3403 = vpop.f32.mrf.mxu0
      %v3404 = vadd.f32 0.0, %v3403
      %3405 = vmatmul.f32.gmra.mxu0 %v3291
      %v3406 = vpop.f32.mrf.mxu0
      %v3407 = vadd.f32 0.0, %v3406
      %3408 = vmatmul.f32.gmra.mxu0 %v3294
      %v3409 = vpop.f32.mrf.mxu0
      %v3410 = vadd.f32 0.0, %v3409
      %3411 = vmatmul.f32.gmra.mxu0 %v3297
      %v3412 = vpop.f32.mrf.mxu0
      %v3413 = vadd.f32 0.0, %v3412
      %3414 = vmatmul.f32.gmra.mxu0 %v3300
      %v3415 = vpop.f32.mrf.mxu0
      %v3416 = vadd.f32 0.0, %v3415
      %3417 = vmatmul.f32.gmra.mxu0 %v3303
      %v3418 = vpop.f32.mrf.mxu0
      %v3419 = vadd.f32 0.0, %v3418
      %3420 = vmatmul.f32.gmra.mxu0 %v3306
      %v3421 = vpop.f32.mrf.mxu0
      %v3422 = vadd.f32 0.0, %v3421
      %3423 = vmatmul.f32.gmra.mxu0 %v3309
      %v3424 = vpop.f32.mrf.mxu0
      %v3425 = vadd.f32 0.0, %v3424
      %3426 = vdwg.mxu0
      %v3428 = vsel %vm204, %v3148, 0
      %v3431 = vsel %vm204, %v3149, 0
      %v3434 = vsel %vm204, %v3150, 0
      %v3437 = vsel %vm204, %v3151, 0
      %v3440 = vsel %vm204, %v3152, 0
      %v3443 = vsel %vm204, %v3153, 0
      %v3446 = vsel %vm204, %v3154, 0
      %v3449 = vsel %vm204, %v3155, 0
      %v3452 = vsel %vm204, %v3156, 0
      %v3455 = vsel %vm204, %v3157, 0
      %v3458 = vsel %vm204, %v3158, 0
      %v3461 = vsel %vm204, %v3159, 0
      %v3464 = vsel %vm204, %v3160, 0
      %v3467 = vsel %vm204, %v3161, 0
      %v3470 = vsel %vm204, %v3162, 0
      %v3473 = vsel %vm204, %v3163, 0
      %v3476 = vsel %vm204, %v3164, 0
      %v3479 = vsel %vm204, %v3165, 0
      %v3482 = vsel %vm204, %v3166, 0
      %v3485 = vsel %vm204, %v3167, 0
      %v3488 = vsel %vm204, %v3168, 0
      %v3491 = vsel %vm204, %v3169, 0
      %v3494 = vsel %vm204, %v3170, 0
      %v3497 = vsel %vm204, %v3171, 0
      %v3500 = vsel %vm204, %v3172, 0
      %v3503 = vsel %vm204, %v3173, 0
      %v3506 = vsel %vm204, %v3174, 0
      %v3509 = vsel %vm204, %v3175, 0
      %v3512 = vsel %vm204, %v3176, 0
      %v3515 = vsel %vm204, %v3177, 0
      %v3518 = vsel %vm204, %v3178, 0
      %v3521 = vsel %vm204, %v3179, 0
      %v3524 = vsel %vm478, %v3180, 0
      %3526 = vmatpush.msra.mxu0 0.0
      %3527 = vmatpush.msra.mxu0 0.0
      %3528 = vmatpush.msra.mxu0 0.0
      %3529 = vmatpush.msra.mxu0 0.0
      %3530 = vmatpush.msra.mxu0 0.0
      %3531 = vmatpush.msra.mxu0 0.0
      %3532 = vmatpush.msra.mxu0 0.0
      %3533 = vmatpush.msra.mxu0 0.0
      %3534 = vmatpush.msra.mxu0 0.0
      %3535 = vmatpush.msra.mxu0 0.0
      %3536 = vmatpush.msra.mxu0 0.0
      %3537 = vmatpush.msra.mxu0 0.0
      %3538 = vmatpush.msra.mxu0 0.0
      %3539 = vmatpush.msra.mxu0 0.0
      %3540 = vmatpush.msra.mxu0 0.0
      %3541 = vmatpush.msra.mxu0 %v3524
      %3542 = vmatmul.f32.gmra.mxu0 %v3428
      %v3543 = vpop.f32.mrf.mxu0
      %v3544 = vadd.f32 %v3332, %v3543
      %3545 = vmatmul.f32.gmra.mxu0 %v3431
      %v3546 = vpop.f32.mrf.mxu0
      %v3547 = vadd.f32 %v3335, %v3546
      %3548 = vmatmul.f32.gmra.mxu0 %v3434
      %v3549 = vpop.f32.mrf.mxu0
      %v3550 = vadd.f32 %v3338, %v3549
      %3551 = vmatmul.f32.gmra.mxu0 %v3437
      %v3552 = vpop.f32.mrf.mxu0
      %v3553 = vadd.f32 %v3341, %v3552
      %3554 = vmatmul.f32.gmra.mxu0 %v3440
      %v3555 = vpop.f32.mrf.mxu0
      %v3556 = vadd.f32 %v3344, %v3555
      %3557 = vmatmul.f32.gmra.mxu0 %v3443
      %v3558 = vpop.f32.mrf.mxu0
      %v3559 = vadd.f32 %v3347, %v3558
      %3560 = vmatmul.f32.gmra.mxu0 %v3446
      %v3561 = vpop.f32.mrf.mxu0
      %v3562 = vadd.f32 %v3350, %v3561
      %3563 = vmatmul.f32.gmra.mxu0 %v3449
      %v3564 = vpop.f32.mrf.mxu0
      %v3565 = vadd.f32 %v3353, %v3564
      %3566 = vmatmul.f32.gmra.mxu0 %v3452
      %v3567 = vpop.f32.mrf.mxu0
      %v3568 = vadd.f32 %v3356, %v3567
      %3569 = vmatmul.f32.gmra.mxu0 %v3455
      %v3570 = vpop.f32.mrf.mxu0
      %v3571 = vadd.f32 %v3359, %v3570
      %3572 = vmatmul.f32.gmra.mxu0 %v3458
      %v3573 = vpop.f32.mrf.mxu0
      %v3574 = vadd.f32 %v3362, %v3573
      %3575 = vmatmul.f32.gmra.mxu0 %v3461
      %v3576 = vpop.f32.mrf.mxu0
      %v3577 = vadd.f32 %v3365, %v3576
      %3578 = vmatmul.f32.gmra.mxu0 %v3464
      %v3579 = vpop.f32.mrf.mxu0
      %v3580 = vadd.f32 %v3368, %v3579
      %3581 = vmatmul.f32.gmra.mxu0 %v3467
      %v3582 = vpop.f32.mrf.mxu0
      %v3583 = vadd.f32 %v3371, %v3582
      %3584 = vmatmul.f32.gmra.mxu0 %v3470
      %v3585 = vpop.f32.mrf.mxu0
      %v3586 = vadd.f32 %v3374, %v3585
      %3587 = vmatmul.f32.gmra.mxu0 %v3473
      %v3588 = vpop.f32.mrf.mxu0
      %v3589 = vadd.f32 %v3377, %v3588
      %3590 = vmatmul.f32.gmra.mxu0 %v3476
      %v3591 = vpop.f32.mrf.mxu0
      %v3592 = vadd.f32 %v3380, %v3591
      %3593 = vmatmul.f32.gmra.mxu0 %v3479
      %v3594 = vpop.f32.mrf.mxu0
      %v3595 = vadd.f32 %v3383, %v3594
      %3596 = vmatmul.f32.gmra.mxu0 %v3482
      %v3597 = vpop.f32.mrf.mxu0
      %v3598 = vadd.f32 %v3386, %v3597
      %3599 = vmatmul.f32.gmra.mxu0 %v3485
      %v3600 = vpop.f32.mrf.mxu0
      %v3601 = vadd.f32 %v3389, %v3600
      %3602 = vmatmul.f32.gmra.mxu0 %v3488
      %v3603 = vpop.f32.mrf.mxu0
      %v3604 = vadd.f32 %v3392, %v3603
      %3605 = vmatmul.f32.gmra.mxu0 %v3491
      %v3606 = vpop.f32.mrf.mxu0
      %v3607 = vadd.f32 %v3395, %v3606
      %3608 = vmatmul.f32.gmra.mxu0 %v3494
      %v3609 = vpop.f32.mrf.mxu0
      %v3610 = vadd.f32 %v3398, %v3609
      %3611 = vmatmul.f32.gmra.mxu0 %v3497
      %v3612 = vpop.f32.mrf.mxu0
      %v3613 = vadd.f32 %v3401, %v3612
      %3614 = vmatmul.f32.gmra.mxu0 %v3500
      %v3615 = vpop.f32.mrf.mxu0
      %v3616 = vadd.f32 %v3404, %v3615
      %3617 = vmatmul.f32.gmra.mxu0 %v3503
      %v3618 = vpop.f32.mrf.mxu0
      %v3619 = vadd.f32 %v3407, %v3618
      %3620 = vmatmul.f32.gmra.mxu0 %v3506
      %v3621 = vpop.f32.mrf.mxu0
      %v3622 = vadd.f32 %v3410, %v3621
      %3623 = vmatmul.f32.gmra.mxu0 %v3509
      %v3624 = vpop.f32.mrf.mxu0
      %v3625 = vadd.f32 %v3413, %v3624
      %3626 = vmatmul.f32.gmra.mxu0 %v3512
      %v3627 = vpop.f32.mrf.mxu0
      %v3628 = vadd.f32 %v3416, %v3627
      %3629 = vmatmul.f32.gmra.mxu0 %v3515
      %v3630 = vpop.f32.mrf.mxu0
      %v3631 = vadd.f32 %v3419, %v3630
      %3632 = vmatmul.f32.gmra.mxu0 %v3518
      %v3633 = vpop.f32.mrf.mxu0
      %v3634 = vadd.f32 %v3422, %v3633
      %3635 = vmatmul.f32.gmra.mxu0 %v3521
      %v3636 = vpop.f32.mrf.mxu0
      %v3637 = vadd.f32 %v3425, %v3636
      %3638 = vdwg.mxu0
      %v3639 = vld [vmem:[#allocation2 + $0x2] sm:$0xff]
      %v3640 = vld [vmem:[#allocation2 + $0xa] sm:$0xff]
      %v3641 = vld [vmem:[#allocation2 + $0x1a] sm:$0xff]
      %v3642 = vld [vmem:[#allocation2 + $0x22] sm:$0xff]
      %v3643 = vld [vmem:[#allocation2 + $0x32] sm:$0xff]
      %v3644 = vld [vmem:[#allocation2 + $0x3a] sm:$0xff]
      %v3645 = vld [vmem:[#allocation2 + $0x4a] sm:$0xff]
      %v3646 = vld [vmem:[#allocation2 + $0x52] sm:$0xff]
      %v3647 = vld [vmem:[#allocation2 + $0x62] sm:$0xff]
      %v3648 = vld [vmem:[#allocation2 + $0x6a] sm:$0xff]
      %v3649 = vld [vmem:[#allocation2 + $0x7a] sm:$0xff]
      %v3650 = vld [vmem:[#allocation2 + $0x82] sm:$0xff]
      %v3651 = vld [vmem:[#allocation2 + $0x92] sm:$0xff]
      %v3652 = vld [vmem:[#allocation2 + $0x9a] sm:$0xff]
      %v3653 = vld [vmem:[#allocation2 + $0xaa] sm:$0xff]
      %v3654 = vld [vmem:[#allocation2 + $0xb2] sm:$0xff]
      %v3655 = vld [vmem:[#allocation2 + $0xc2] sm:$0xff]
      %v3656 = vld [vmem:[#allocation2 + $0xca] sm:$0xff]
      %v3657 = vld [vmem:[#allocation2 + $0xda] sm:$0xff]
      %v3658 = vld [vmem:[#allocation2 + $0xe2] sm:$0xff]
      %v3659 = vld [vmem:[#allocation2 + $0xf2] sm:$0xff]
      %v3660 = vld [vmem:[#allocation2 + $0xfa] sm:$0xff]
      %v3661 = vld [vmem:[#allocation2 + $0x10a] sm:$0xff]
      %v3662 = vld [vmem:[#allocation2 + $0x112] sm:$0xff]
      %v3663 = vld [vmem:[#allocation2 + $0x122] sm:$0xff]
      %v3664 = vld [vmem:[#allocation2 + $0x12a] sm:$0xff]
      %v3665 = vld [vmem:[#allocation2 + $0x13a] sm:$0xff]
      %v3666 = vld [vmem:[#allocation2 + $0x142] sm:$0xff]
      %v3667 = vld [vmem:[#allocation2 + $0x152] sm:$0xff]
      %v3668 = vld [vmem:[#allocation2 + $0x15a] sm:$0xff]
      %v3669 = vld [vmem:[#allocation2 + $0x16a] sm:$0xff]
      %v3670 = vld [vmem:[#allocation2 + $0x172] sm:$0xff]
      %s3671 = scalar_lea.vmem %s2, 8
      %v3672 = vld [vmem:[%s3671] sm:$0xf]
      %v3674 = vsel %vm204, %v3639, 0
      %v3677 = vsel %vm204, %v3640, 0
      %v3680 = vsel %vm204, %v3641, 0
      %v3683 = vsel %vm204, %v3642, 0
      %v3686 = vsel %vm204, %v3643, 0
      %v3689 = vsel %vm204, %v3644, 0
      %v3692 = vsel %vm204, %v3645, 0
      %v3695 = vsel %vm204, %v3646, 0
      %v3698 = vsel %vm204, %v3647, 0
      %v3701 = vsel %vm204, %v3648, 0
      %v3704 = vsel %vm204, %v3649, 0
      %v3707 = vsel %vm204, %v3650, 0
      %v3710 = vsel %vm204, %v3651, 0
      %v3713 = vsel %vm204, %v3652, 0
      %v3716 = vsel %vm204, %v3653, 0
      %v3719 = vsel %vm204, %v3654, 0
      %v3722 = vsel %vm204, %v3655, 0
      %v3725 = vsel %vm204, %v3656, 0
      %v3728 = vsel %vm204, %v3657, 0
      %v3731 = vsel %vm204, %v3658, 0
      %v3734 = vsel %vm204, %v3659, 0
      %v3737 = vsel %vm204, %v3660, 0
      %v3740 = vsel %vm204, %v3661, 0
      %v3743 = vsel %vm204, %v3662, 0
      %v3746 = vsel %vm204, %v3663, 0
      %v3749 = vsel %vm204, %v3664, 0
      %v3752 = vsel %vm204, %v3665, 0
      %v3755 = vsel %vm204, %v3666, 0
      %v3758 = vsel %vm204, %v3667, 0
      %v3761 = vsel %vm204, %v3668, 0
      %v3764 = vsel %vm204, %v3669, 0
      %v3767 = vsel %vm204, %v3670, 0
      %v3770 = vsel %vm478, %v3672, 0
      %3772 = vmatpush.msra.mxu0 0.0
      %3773 = vmatpush.msra.mxu0 0.0
      %3774 = vmatpush.msra.mxu0 0.0
      %3775 = vmatpush.msra.mxu0 0.0
      %3776 = vmatpush.msra.mxu0 0.0
      %3777 = vmatpush.msra.mxu0 0.0
      %3778 = vmatpush.msra.mxu0 0.0
      %3779 = vmatpush.msra.mxu0 0.0
      %3780 = vmatpush.msra.mxu0 0.0
      %3781 = vmatpush.msra.mxu0 0.0
      %3782 = vmatpush.msra.mxu0 0.0
      %3783 = vmatpush.msra.mxu0 0.0
      %3784 = vmatpush.msra.mxu0 0.0
      %3785 = vmatpush.msra.mxu0 0.0
      %3786 = vmatpush.msra.mxu0 0.0
      %3787 = vmatpush.msra.mxu0 %v3770
      %3788 = vmatmul.f32.gmra.mxu0 %v3674
      %v3789 = vpop.f32.mrf.mxu0
      %v3790 = vadd.f32 0.0, %v3789
      %3791 = vmatmul.f32.gmra.mxu0 %v3677
      %v3792 = vpop.f32.mrf.mxu0
      %v3793 = vadd.f32 0.0, %v3792
      %3794 = vmatmul.f32.gmra.mxu0 %v3680
      %v3795 = vpop.f32.mrf.mxu0
      %v3796 = vadd.f32 0.0, %v3795
      %3797 = vmatmul.f32.gmra.mxu0 %v3683
      %v3798 = vpop.f32.mrf.mxu0
      %v3799 = vadd.f32 0.0, %v3798
      %3800 = vmatmul.f32.gmra.mxu0 %v3686
      %v3801 = vpop.f32.mrf.mxu0
      %v3802 = vadd.f32 0.0, %v3801
      %3803 = vmatmul.f32.gmra.mxu0 %v3689
      %v3804 = vpop.f32.mrf.mxu0
      %v3805 = vadd.f32 0.0, %v3804
      %3806 = vmatmul.f32.gmra.mxu0 %v3692
      %v3807 = vpop.f32.mrf.mxu0
      %v3808 = vadd.f32 0.0, %v3807
      %3809 = vmatmul.f32.gmra.mxu0 %v3695
      %v3810 = vpop.f32.mrf.mxu0
      %v3811 = vadd.f32 0.0, %v3810
      %3812 = vmatmul.f32.gmra.mxu0 %v3698
      %v3813 = vpop.f32.mrf.mxu0
      %v3814 = vadd.f32 0.0, %v3813
      %3815 = vmatmul.f32.gmra.mxu0 %v3701
      %v3816 = vpop.f32.mrf.mxu0
      %v3817 = vadd.f32 0.0, %v3816
      %3818 = vmatmul.f32.gmra.mxu0 %v3704
      %v3819 = vpop.f32.mrf.mxu0
      %v3820 = vadd.f32 0.0, %v3819
      %3821 = vmatmul.f32.gmra.mxu0 %v3707
      %v3822 = vpop.f32.mrf.mxu0
      %v3823 = vadd.f32 0.0, %v3822
      %3824 = vmatmul.f32.gmra.mxu0 %v3710
      %v3825 = vpop.f32.mrf.mxu0
      %v3826 = vadd.f32 0.0, %v3825
      %3827 = vmatmul.f32.gmra.mxu0 %v3713
      %v3828 = vpop.f32.mrf.mxu0
      %v3829 = vadd.f32 0.0, %v3828
      %3830 = vmatmul.f32.gmra.mxu0 %v3716
      %v3831 = vpop.f32.mrf.mxu0
      %v3832 = vadd.f32 0.0, %v3831
      %3833 = vmatmul.f32.gmra.mxu0 %v3719
      %v3834 = vpop.f32.mrf.mxu0
      %v3835 = vadd.f32 0.0, %v3834
      %3836 = vmatmul.f32.gmra.mxu0 %v3722
      %v3837 = vpop.f32.mrf.mxu0
      %v3838 = vadd.f32 0.0, %v3837
      %3839 = vmatmul.f32.gmra.mxu0 %v3725
      %v3840 = vpop.f32.mrf.mxu0
      %v3841 = vadd.f32 0.0, %v3840
      %3842 = vmatmul.f32.gmra.mxu0 %v3728
      %v3843 = vpop.f32.mrf.mxu0
      %v3844 = vadd.f32 0.0, %v3843
      %3845 = vmatmul.f32.gmra.mxu0 %v3731
      %v3846 = vpop.f32.mrf.mxu0
      %v3847 = vadd.f32 0.0, %v3846
      %3848 = vmatmul.f32.gmra.mxu0 %v3734
      %v3849 = vpop.f32.mrf.mxu0
      %v3850 = vadd.f32 0.0, %v3849
      %3851 = vmatmul.f32.gmra.mxu0 %v3737
      %v3852 = vpop.f32.mrf.mxu0
      %v3853 = vadd.f32 0.0, %v3852
      %3854 = vmatmul.f32.gmra.mxu0 %v3740
      %v3855 = vpop.f32.mrf.mxu0
      %v3856 = vadd.f32 0.0, %v3855
      %3857 = vmatmul.f32.gmra.mxu0 %v3743
      %v3858 = vpop.f32.mrf.mxu0
      %v3859 = vadd.f32 0.0, %v3858
      %3860 = vmatmul.f32.gmra.mxu0 %v3746
      %v3861 = vpop.f32.mrf.mxu0
      %v3862 = vadd.f32 0.0, %v3861
      %3863 = vmatmul.f32.gmra.mxu0 %v3749
      %v3864 = vpop.f32.mrf.mxu0
      %v3865 = vadd.f32 0.0, %v3864
      %3866 = vmatmul.f32.gmra.mxu0 %v3752
      %v3867 = vpop.f32.mrf.mxu0
      %v3868 = vadd.f32 0.0, %v3867
      %3869 = vmatmul.f32.gmra.mxu0 %v3755
      %v3870 = vpop.f32.mrf.mxu0
      %v3871 = vadd.f32 0.0, %v3870
      %3872 = vmatmul.f32.gmra.mxu0 %v3758
      %v3873 = vpop.f32.mrf.mxu0
      %v3874 = vadd.f32 0.0, %v3873
      %3875 = vmatmul.f32.gmra.mxu0 %v3761
      %v3876 = vpop.f32.mrf.mxu0
      %v3877 = vadd.f32 0.0, %v3876
      %3878 = vmatmul.f32.gmra.mxu0 %v3764
      %v3879 = vpop.f32.mrf.mxu0
      %v3880 = vadd.f32 0.0, %v3879
      %3881 = vmatmul.f32.gmra.mxu0 %v3767
      %v3882 = vpop.f32.mrf.mxu0
      %v3883 = vadd.f32 0.0, %v3882
      %3884 = vdwg.mxu0
      %v3885 = vadd.f32 %v3544, %v3790
      %v3886 = vadd.f32 %v3547, %v3793
      %v3887 = vadd.f32 %v3550, %v3796
      %v3888 = vadd.f32 %v3553, %v3799
      %v3889 = vadd.f32 %v3556, %v3802
      %v3890 = vadd.f32 %v3559, %v3805
      %v3891 = vadd.f32 %v3562, %v3808
      %v3892 = vadd.f32 %v3565, %v3811
      %v3893 = vadd.f32 %v3568, %v3814
      %v3894 = vadd.f32 %v3571, %v3817
      %v3895 = vadd.f32 %v3574, %v3820
      %v3896 = vadd.f32 %v3577, %v3823
      %v3897 = vadd.f32 %v3580, %v3826
      %v3898 = vadd.f32 %v3583, %v3829
      %v3899 = vadd.f32 %v3586, %v3832
      %v3900 = vadd.f32 %v3589, %v3835
      %v3901 = vadd.f32 %v3592, %v3838
      %v3902 = vadd.f32 %v3595, %v3841
      %v3903 = vadd.f32 %v3598, %v3844
      %v3904 = vadd.f32 %v3601, %v3847
      %v3905 = vadd.f32 %v3604, %v3850
      %v3906 = vadd.f32 %v3607, %v3853
      %v3907 = vadd.f32 %v3610, %v3856
      %v3908 = vadd.f32 %v3613, %v3859
      %v3909 = vadd.f32 %v3616, %v3862
      %v3910 = vadd.f32 %v3619, %v3865
      %v3911 = vadd.f32 %v3622, %v3868
      %v3912 = vadd.f32 %v3625, %v3871
      %v3913 = vadd.f32 %v3628, %v3874
      %v3914 = vadd.f32 %v3631, %v3877
      %v3915 = vadd.f32 %v3634, %v3880
      %v3916 = vadd.f32 %v3637, %v3883
      %v3917 = vld [vmem:[%s203] sm:$0xff]
      %v3918 = vld [vmem:[%s203 + $0x8] sm:$0xff]
      %v3919 = vld [vmem:[%s203 + $0x18] sm:$0xff]
      %v3920 = vld [vmem:[%s203 + $0x20] sm:$0xff]
      %v3921 = vld [vmem:[%s203 + $0x30] sm:$0xff]
      %v3922 = vld [vmem:[%s203 + $0x38] sm:$0xff]
      %v3923 = vld [vmem:[%s203 + $0x48] sm:$0xff]
      %v3924 = vld [vmem:[%s203 + $0x50] sm:$0xff]
      %v3925 = vld [vmem:[%s203 + $0x60] sm:$0xff]
      %v3926 = vld [vmem:[%s203 + $0x68] sm:$0xff]
      %v3927 = vld [vmem:[%s203 + $0x78] sm:$0xff]
      %v3928 = vld [vmem:[%s203 + $0x80] sm:$0xff]
      %v3929 = vld [vmem:[%s203 + $0x90] sm:$0xff]
      %v3930 = vld [vmem:[%s203 + $0x98] sm:$0xff]
      %v3931 = vld [vmem:[%s203 + $0xa8] sm:$0xff]
      %v3932 = vld [vmem:[%s203 + $0xb0] sm:$0xff]
      %v3933 = vld [vmem:[%s203 + $0xc0] sm:$0xff]
      %v3934 = vld [vmem:[%s203 + $0xc8] sm:$0xff]
      %v3935 = vld [vmem:[%s203 + $0xd8] sm:$0xff]
      %v3936 = vld [vmem:[%s203 + $0xe0] sm:$0xff]
      %v3937 = vld [vmem:[%s203 + $0xf0] sm:$0xff]
      %v3938 = vld [vmem:[%s203 + $0xf8] sm:$0xff]
      %v3939 = vld [vmem:[%s203 + $0x108] sm:$0xff]
      %v3940 = vld [vmem:[%s203 + $0x110] sm:$0xff]
      %v3941 = vld [vmem:[%s203 + $0x120] sm:$0xff]
      %v3942 = vld [vmem:[%s203 + $0x128] sm:$0xff]
      %v3943 = vld [vmem:[%s203 + $0x138] sm:$0xff]
      %v3944 = vld [vmem:[%s203 + $0x140] sm:$0xff]
      %v3945 = vld [vmem:[%s203 + $0x150] sm:$0xff]
      %v3946 = vld [vmem:[%s203 + $0x158] sm:$0xff]
      %v3947 = vld [vmem:[%s203 + $0x168] sm:$0xff]
      %v3948 = vld [vmem:[%s203 + $0x170] sm:$0xff]
      %s3949 = scalar_lea.vmem %s2, 12
      %v3950 = vld [vmem:[%s3949] sm:$0xf]
      %v3952 = vsel %vm204, %v3917, 0
      %v3955 = vsel %vm204, %v3918, 0
      %v3958 = vsel %vm204, %v3919, 0
      %v3961 = vsel %vm204, %v3920, 0
      %v3964 = vsel %vm204, %v3921, 0
      %v3967 = vsel %vm204, %v3922, 0
      %v3970 = vsel %vm204, %v3923, 0
      %v3973 = vsel %vm204, %v3924, 0
      %v3976 = vsel %vm204, %v3925, 0
      %v3979 = vsel %vm204, %v3926, 0
      %v3982 = vsel %vm204, %v3927, 0
      %v3985 = vsel %vm204, %v3928, 0
      %v3988 = vsel %vm204, %v3929, 0
      %v3991 = vsel %vm204, %v3930, 0
      %v3994 = vsel %vm204, %v3931, 0
      %v3997 = vsel %vm204, %v3932, 0
      %v4000 = vsel %vm204, %v3933, 0
      %v4003 = vsel %vm204, %v3934, 0
      %v4006 = vsel %vm204, %v3935, 0
      %v4009 = vsel %vm204, %v3936, 0
      %v4012 = vsel %vm204, %v3937, 0
      %v4015 = vsel %vm204, %v3938, 0
      %v4018 = vsel %vm204, %v3939, 0
      %v4021 = vsel %vm204, %v3940, 0
      %v4024 = vsel %vm204, %v3941, 0
      %v4027 = vsel %vm204, %v3942, 0
      %v4030 = vsel %vm204, %v3943, 0
      %v4033 = vsel %vm204, %v3944, 0
      %v4036 = vsel %vm204, %v3945, 0
      %v4039 = vsel %vm204, %v3946, 0
      %v4042 = vsel %vm204, %v3947, 0
      %v4045 = vsel %vm204, %v3948, 0
      %v4048 = vsel %vm478, %v3950, 0
      %4050 = vmatpush.msra.mxu0 0.0
      %4051 = vmatpush.msra.mxu0 0.0
      %4052 = vmatpush.msra.mxu0 0.0
      %4053 = vmatpush.msra.mxu0 0.0
      %4054 = vmatpush.msra.mxu0 0.0
      %4055 = vmatpush.msra.mxu0 0.0
      %4056 = vmatpush.msra.mxu0 0.0
      %4057 = vmatpush.msra.mxu0 0.0
      %4058 = vmatpush.msra.mxu0 0.0
      %4059 = vmatpush.msra.mxu0 0.0
      %4060 = vmatpush.msra.mxu0 0.0
      %4061 = vmatpush.msra.mxu0 0.0
      %4062 = vmatpush.msra.mxu0 0.0
      %4063 = vmatpush.msra.mxu0 0.0
      %4064 = vmatpush.msra.mxu0 0.0
      %4065 = vmatpush.msra.mxu0 %v4048
      %4066 = vmatmul.f32.gmra.mxu0 %v3952
      %v4067 = vpop.f32.mrf.mxu0
      %v4068 = vadd.f32 0.0, %v4067
      %4069 = vmatmul.f32.gmra.mxu0 %v3955
      %v4070 = vpop.f32.mrf.mxu0
      %v4071 = vadd.f32 0.0, %v4070
      %4072 = vmatmul.f32.gmra.mxu0 %v3958
      %v4073 = vpop.f32.mrf.mxu0
      %v4074 = vadd.f32 0.0, %v4073
      %4075 = vmatmul.f32.gmra.mxu0 %v3961
      %v4076 = vpop.f32.mrf.mxu0
      %v4077 = vadd.f32 0.0, %v4076
      %4078 = vmatmul.f32.gmra.mxu0 %v3964
      %v4079 = vpop.f32.mrf.mxu0
      %v4080 = vadd.f32 0.0, %v4079
      %4081 = vmatmul.f32.gmra.mxu0 %v3967
      %v4082 = vpop.f32.mrf.mxu0
      %v4083 = vadd.f32 0.0, %v4082
      %4084 = vmatmul.f32.gmra.mxu0 %v3970
      %v4085 = vpop.f32.mrf.mxu0
      %v4086 = vadd.f32 0.0, %v4085
      %4087 = vmatmul.f32.gmra.mxu0 %v3973
      %v4088 = vpop.f32.mrf.mxu0
      %v4089 = vadd.f32 0.0, %v4088
      %4090 = vmatmul.f32.gmra.mxu0 %v3976
      %v4091 = vpop.f32.mrf.mxu0
      %v4092 = vadd.f32 0.0, %v4091
      %4093 = vmatmul.f32.gmra.mxu0 %v3979
      %v4094 = vpop.f32.mrf.mxu0
      %v4095 = vadd.f32 0.0, %v4094
      %4096 = vmatmul.f32.gmra.mxu0 %v3982
      %v4097 = vpop.f32.mrf.mxu0
      %v4098 = vadd.f32 0.0, %v4097
      %4099 = vmatmul.f32.gmra.mxu0 %v3985
      %v4100 = vpop.f32.mrf.mxu0
      %v4101 = vadd.f32 0.0, %v4100
      %4102 = vmatmul.f32.gmra.mxu0 %v3988
      %v4103 = vpop.f32.mrf.mxu0
      %v4104 = vadd.f32 0.0, %v4103
      %4105 = vmatmul.f32.gmra.mxu0 %v3991
      %v4106 = vpop.f32.mrf.mxu0
      %v4107 = vadd.f32 0.0, %v4106
      %4108 = vmatmul.f32.gmra.mxu0 %v3994
      %v4109 = vpop.f32.mrf.mxu0
      %v4110 = vadd.f32 0.0, %v4109
      %4111 = vmatmul.f32.gmra.mxu0 %v3997
      %v4112 = vpop.f32.mrf.mxu0
      %v4113 = vadd.f32 0.0, %v4112
      %4114 = vmatmul.f32.gmra.mxu0 %v4000
      %v4115 = vpop.f32.mrf.mxu0
      %v4116 = vadd.f32 0.0, %v4115
      %4117 = vmatmul.f32.gmra.mxu0 %v4003
      %v4118 = vpop.f32.mrf.mxu0
      %v4119 = vadd.f32 0.0, %v4118
      %4120 = vmatmul.f32.gmra.mxu0 %v4006
      %v4121 = vpop.f32.mrf.mxu0
      %v4122 = vadd.f32 0.0, %v4121
      %4123 = vmatmul.f32.gmra.mxu0 %v4009
      %v4124 = vpop.f32.mrf.mxu0
      %v4125 = vadd.f32 0.0, %v4124
      %4126 = vmatmul.f32.gmra.mxu0 %v4012
      %v4127 = vpop.f32.mrf.mxu0
      %v4128 = vadd.f32 0.0, %v4127
      %4129 = vmatmul.f32.gmra.mxu0 %v4015
      %v4130 = vpop.f32.mrf.mxu0
      %v4131 = vadd.f32 0.0, %v4130
      %4132 = vmatmul.f32.gmra.mxu0 %v4018
      %v4133 = vpop.f32.mrf.mxu0
      %v4134 = vadd.f32 0.0, %v4133
      %4135 = vmatmul.f32.gmra.mxu0 %v4021
      %v4136 = vpop.f32.mrf.mxu0
      %v4137 = vadd.f32 0.0, %v4136
      %4138 = vmatmul.f32.gmra.mxu0 %v4024
      %v4139 = vpop.f32.mrf.mxu0
      %v4140 = vadd.f32 0.0, %v4139
      %4141 = vmatmul.f32.gmra.mxu0 %v4027
      %v4142 = vpop.f32.mrf.mxu0
      %v4143 = vadd.f32 0.0, %v4142
      %4144 = vmatmul.f32.gmra.mxu0 %v4030
      %v4145 = vpop.f32.mrf.mxu0
      %v4146 = vadd.f32 0.0, %v4145
      %4147 = vmatmul.f32.gmra.mxu0 %v4033
      %v4148 = vpop.f32.mrf.mxu0
      %v4149 = vadd.f32 0.0, %v4148
      %4150 = vmatmul.f32.gmra.mxu0 %v4036
      %v4151 = vpop.f32.mrf.mxu0
      %v4152 = vadd.f32 0.0, %v4151
      %4153 = vmatmul.f32.gmra.mxu0 %v4039
      %v4154 = vpop.f32.mrf.mxu0
      %v4155 = vadd.f32 0.0, %v4154
      %4156 = vmatmul.f32.gmra.mxu0 %v4042
      %v4157 = vpop.f32.mrf.mxu0
      %v4158 = vadd.f32 0.0, %v4157
      %4159 = vmatmul.f32.gmra.mxu0 %v4045
      %v4160 = vpop.f32.mrf.mxu0
      %v4161 = vadd.f32 0.0, %v4160
      %4162 = vdwg.mxu0
      %v4163 = vadd.f32 %v3885, %v4068
      %v4164 = vadd.f32 %v3886, %v4071
      %v4165 = vadd.f32 %v3887, %v4074
      %v4166 = vadd.f32 %v3888, %v4077
      %v4167 = vadd.f32 %v3889, %v4080
      %v4168 = vadd.f32 %v3890, %v4083
      %v4169 = vadd.f32 %v3891, %v4086
      %v4170 = vadd.f32 %v3892, %v4089
      %v4171 = vadd.f32 %v3893, %v4092
      %v4172 = vadd.f32 %v3894, %v4095
      %v4173 = vadd.f32 %v3895, %v4098
      %v4174 = vadd.f32 %v3896, %v4101
      %v4175 = vadd.f32 %v3897, %v4104
      %v4176 = vadd.f32 %v3898, %v4107
      %v4177 = vadd.f32 %v3899, %v4110
      %v4178 = vadd.f32 %v3900, %v4113
      %v4179 = vadd.f32 %v3901, %v4116
      %v4180 = vadd.f32 %v3902, %v4119
      %v4181 = vadd.f32 %v3903, %v4122
      %v4182 = vadd.f32 %v3904, %v4125
      %v4183 = vadd.f32 %v3905, %v4128
      %v4184 = vadd.f32 %v3906, %v4131
      %v4185 = vadd.f32 %v3907, %v4134
      %v4186 = vadd.f32 %v3908, %v4137
      %v4187 = vadd.f32 %v3909, %v4140
      %v4188 = vadd.f32 %v3910, %v4143
      %v4189 = vadd.f32 %v3911, %v4146
      %v4190 = vadd.f32 %v3912, %v4149
      %v4191 = vadd.f32 %v3913, %v4152
      %v4192 = vadd.f32 %v3914, %v4155
      %v4193 = vadd.f32 %v3915, %v4158
      %v4194 = vadd.f32 %v3916, %v4161
      %v4195 = vld [vmem:[%s203 + $0x1] sm:$0xff]
      %v4196 = vld [vmem:[%s203 + $0x9] sm:$0xff]
      %v4197 = vld [vmem:[%s203 + $0x19] sm:$0xff]
      %v4198 = vld [vmem:[%s203 + $0x21] sm:$0xff]
      %v4199 = vld [vmem:[%s203 + $0x31] sm:$0xff]
      %v4200 = vld [vmem:[%s203 + $0x39] sm:$0xff]
      %v4201 = vld [vmem:[%s203 + $0x49] sm:$0xff]
      %v4202 = vld [vmem:[%s203 + $0x51] sm:$0xff]
      %v4203 = vld [vmem:[%s203 + $0x61] sm:$0xff]
      %v4204 = vld [vmem:[%s203 + $0x69] sm:$0xff]
      %v4205 = vld [vmem:[%s203 + $0x79] sm:$0xff]
      %v4206 = vld [vmem:[%s203 + $0x81] sm:$0xff]
      %v4207 = vld [vmem:[%s203 + $0x91] sm:$0xff]
      %v4208 = vld [vmem:[%s203 + $0x99] sm:$0xff]
      %v4209 = vld [vmem:[%s203 + $0xa9] sm:$0xff]
      %v4210 = vld [vmem:[%s203 + $0xb1] sm:$0xff]
      %v4211 = vld [vmem:[%s203 + $0xc1] sm:$0xff]
      %v4212 = vld [vmem:[%s203 + $0xc9] sm:$0xff]
      %v4213 = vld [vmem:[%s203 + $0xd9] sm:$0xff]
      %v4214 = vld [vmem:[%s203 + $0xe1] sm:$0xff]
      %v4215 = vld [vmem:[%s203 + $0xf1] sm:$0xff]
      %v4216 = vld [vmem:[%s203 + $0xf9] sm:$0xff]
      %v4217 = vld [vmem:[%s203 + $0x109] sm:$0xff]
      %v4218 = vld [vmem:[%s203 + $0x111] sm:$0xff]
      %v4219 = vld [vmem:[%s203 + $0x121] sm:$0xff]
      %v4220 = vld [vmem:[%s203 + $0x129] sm:$0xff]
      %v4221 = vld [vmem:[%s203 + $0x139] sm:$0xff]
      %v4222 = vld [vmem:[%s203 + $0x141] sm:$0xff]
      %v4223 = vld [vmem:[%s203 + $0x151] sm:$0xff]
      %v4224 = vld [vmem:[%s203 + $0x159] sm:$0xff]
      %v4225 = vld [vmem:[%s203 + $0x169] sm:$0xff]
      %v4226 = vld [vmem:[%s203 + $0x171] sm:$0xff]
      %s4227 = scalar_lea.vmem %s2, 16
      %v4228 = vld [vmem:[%s4227] sm:$0xf]
      %v4230 = vsel %vm204, %v4195, 0
      %v4233 = vsel %vm204, %v4196, 0
      %v4236 = vsel %vm204, %v4197, 0
      %v4239 = vsel %vm204, %v4198, 0
      %v4242 = vsel %vm204, %v4199, 0
      %v4245 = vsel %vm204, %v4200, 0
      %v4248 = vsel %vm204, %v4201, 0
      %v4251 = vsel %vm204, %v4202, 0
      %v4254 = vsel %vm204, %v4203, 0
      %v4257 = vsel %vm204, %v4204, 0
      %v4260 = vsel %vm204, %v4205, 0
      %v4263 = vsel %vm204, %v4206, 0
      %v4266 = vsel %vm204, %v4207, 0
      %v4269 = vsel %vm204, %v4208, 0
      %v4272 = vsel %vm204, %v4209, 0
      %v4275 = vsel %vm204, %v4210, 0
      %v4278 = vsel %vm204, %v4211, 0
      %v4281 = vsel %vm204, %v4212, 0
      %v4284 = vsel %vm204, %v4213, 0
      %v4287 = vsel %vm204, %v4214, 0
      %v4290 = vsel %vm204, %v4215, 0
      %v4293 = vsel %vm204, %v4216, 0
      %v4296 = vsel %vm204, %v4217, 0
      %v4299 = vsel %vm204, %v4218, 0
      %v4302 = vsel %vm204, %v4219, 0
      %v4305 = vsel %vm204, %v4220, 0
      %v4308 = vsel %vm204, %v4221, 0
      %v4311 = vsel %vm204, %v4222, 0
      %v4314 = vsel %vm204, %v4223, 0
      %v4317 = vsel %vm204, %v4224, 0
      %v4320 = vsel %vm204, %v4225, 0
      %v4323 = vsel %vm204, %v4226, 0
      %v4326 = vsel %vm478, %v4228, 0
      %4328 = vmatpush.msra.mxu0 0.0
      %4329 = vmatpush.msra.mxu0 0.0
      %4330 = vmatpush.msra.mxu0 0.0
      %4331 = vmatpush.msra.mxu0 0.0
      %4332 = vmatpush.msra.mxu0 0.0
      %4333 = vmatpush.msra.mxu0 0.0
      %4334 = vmatpush.msra.mxu0 0.0
      %4335 = vmatpush.msra.mxu0 0.0
      %4336 = vmatpush.msra.mxu0 0.0
      %4337 = vmatpush.msra.mxu0 0.0
      %4338 = vmatpush.msra.mxu0 0.0
      %4339 = vmatpush.msra.mxu0 0.0
      %4340 = vmatpush.msra.mxu0 0.0
      %4341 = vmatpush.msra.mxu0 0.0
      %4342 = vmatpush.msra.mxu0 0.0
      %4343 = vmatpush.msra.mxu0 %v4326
      %4344 = vmatmul.f32.gmra.mxu0 %v4230
      %v4345 = vpop.f32.mrf.mxu0
      %v4346 = vadd.f32 0.0, %v4345
      %4347 = vmatmul.f32.gmra.mxu0 %v4233
      %v4348 = vpop.f32.mrf.mxu0
      %v4349 = vadd.f32 0.0, %v4348
      %4350 = vmatmul.f32.gmra.mxu0 %v4236
      %v4351 = vpop.f32.mrf.mxu0
      %v4352 = vadd.f32 0.0, %v4351
      %4353 = vmatmul.f32.gmra.mxu0 %v4239
      %v4354 = vpop.f32.mrf.mxu0
      %v4355 = vadd.f32 0.0, %v4354
      %4356 = vmatmul.f32.gmra.mxu0 %v4242
      %v4357 = vpop.f32.mrf.mxu0
      %v4358 = vadd.f32 0.0, %v4357
      %4359 = vmatmul.f32.gmra.mxu0 %v4245
      %v4360 = vpop.f32.mrf.mxu0
      %v4361 = vadd.f32 0.0, %v4360
      %4362 = vmatmul.f32.gmra.mxu0 %v4248
      %v4363 = vpop.f32.mrf.mxu0
      %v4364 = vadd.f32 0.0, %v4363
      %4365 = vmatmul.f32.gmra.mxu0 %v4251
      %v4366 = vpop.f32.mrf.mxu0
      %v4367 = vadd.f32 0.0, %v4366
      %4368 = vmatmul.f32.gmra.mxu0 %v4254
      %v4369 = vpop.f32.mrf.mxu0
      %v4370 = vadd.f32 0.0, %v4369
      %4371 = vmatmul.f32.gmra.mxu0 %v4257
      %v4372 = vpop.f32.mrf.mxu0
      %v4373 = vadd.f32 0.0, %v4372
      %4374 = vmatmul.f32.gmra.mxu0 %v4260
      %v4375 = vpop.f32.mrf.mxu0
      %v4376 = vadd.f32 0.0, %v4375
      %4377 = vmatmul.f32.gmra.mxu0 %v4263
      %v4378 = vpop.f32.mrf.mxu0
      %v4379 = vadd.f32 0.0, %v4378
      %4380 = vmatmul.f32.gmra.mxu0 %v4266
      %v4381 = vpop.f32.mrf.mxu0
      %v4382 = vadd.f32 0.0, %v4381
      %4383 = vmatmul.f32.gmra.mxu0 %v4269
      %v4384 = vpop.f32.mrf.mxu0
      %v4385 = vadd.f32 0.0, %v4384
      %4386 = vmatmul.f32.gmra.mxu0 %v4272
      %v4387 = vpop.f32.mrf.mxu0
      %v4388 = vadd.f32 0.0, %v4387
      %4389 = vmatmul.f32.gmra.mxu0 %v4275
      %v4390 = vpop.f32.mrf.mxu0
      %v4391 = vadd.f32 0.0, %v4390
      %4392 = vmatmul.f32.gmra.mxu0 %v4278
      %v4393 = vpop.f32.mrf.mxu0
      %v4394 = vadd.f32 0.0, %v4393
      %4395 = vmatmul.f32.gmra.mxu0 %v4281
      %v4396 = vpop.f32.mrf.mxu0
      %v4397 = vadd.f32 0.0, %v4396
      %4398 = vmatmul.f32.gmra.mxu0 %v4284
      %v4399 = vpop.f32.mrf.mxu0
      %v4400 = vadd.f32 0.0, %v4399
      %4401 = vmatmul.f32.gmra.mxu0 %v4287
      %v4402 = vpop.f32.mrf.mxu0
      %v4403 = vadd.f32 0.0, %v4402
      %4404 = vmatmul.f32.gmra.mxu0 %v4290
      %v4405 = vpop.f32.mrf.mxu0
      %v4406 = vadd.f32 0.0, %v4405
      %4407 = vmatmul.f32.gmra.mxu0 %v4293
      %v4408 = vpop.f32.mrf.mxu0
      %v4409 = vadd.f32 0.0, %v4408
      %4410 = vmatmul.f32.gmra.mxu0 %v4296
      %v4411 = vpop.f32.mrf.mxu0
      %v4412 = vadd.f32 0.0, %v4411
      %4413 = vmatmul.f32.gmra.mxu0 %v4299
      %v4414 = vpop.f32.mrf.mxu0
      %v4415 = vadd.f32 0.0, %v4414
      %4416 = vmatmul.f32.gmra.mxu0 %v4302
      %v4417 = vpop.f32.mrf.mxu0
      %v4418 = vadd.f32 0.0, %v4417
      %4419 = vmatmul.f32.gmra.mxu0 %v4305
      %v4420 = vpop.f32.mrf.mxu0
      %v4421 = vadd.f32 0.0, %v4420
      %4422 = vmatmul.f32.gmra.mxu0 %v4308
      %v4423 = vpop.f32.mrf.mxu0
      %v4424 = vadd.f32 0.0, %v4423
      %4425 = vmatmul.f32.gmra.mxu0 %v4311
      %v4426 = vpop.f32.mrf.mxu0
      %v4427 = vadd.f32 0.0, %v4426
      %4428 = vmatmul.f32.gmra.mxu0 %v4314
      %v4429 = vpop.f32.mrf.mxu0
      %v4430 = vadd.f32 0.0, %v4429
      %4431 = vmatmul.f32.gmra.mxu0 %v4317
      %v4432 = vpop.f32.mrf.mxu0
      %v4433 = vadd.f32 0.0, %v4432
      %4434 = vmatmul.f32.gmra.mxu0 %v4320
      %v4435 = vpop.f32.mrf.mxu0
      %v4436 = vadd.f32 0.0, %v4435
      %4437 = vmatmul.f32.gmra.mxu0 %v4323
      %v4438 = vpop.f32.mrf.mxu0
      %v4439 = vadd.f32 0.0, %v4438
      %4440 = vdwg.mxu0
      %v4441 = vadd.f32 %v4163, %v4346
      %v4442 = vadd.f32 %v4164, %v4349
      %v4443 = vadd.f32 %v4165, %v4352
      %v4444 = vadd.f32 %v4166, %v4355
      %v4445 = vadd.f32 %v4167, %v4358
      %v4446 = vadd.f32 %v4168, %v4361
      %v4447 = vadd.f32 %v4169, %v4364
      %v4448 = vadd.f32 %v4170, %v4367
      %v4449 = vadd.f32 %v4171, %v4370
      %v4450 = vadd.f32 %v4172, %v4373
      %v4451 = vadd.f32 %v4173, %v4376
      %v4452 = vadd.f32 %v4174, %v4379
      %v4453 = vadd.f32 %v4175, %v4382
      %v4454 = vadd.f32 %v4176, %v4385
      %v4455 = vadd.f32 %v4177, %v4388
      %v4456 = vadd.f32 %v4178, %v4391
      %v4457 = vadd.f32 %v4179, %v4394
      %v4458 = vadd.f32 %v4180, %v4397
      %v4459 = vadd.f32 %v4181, %v4400
      %v4460 = vadd.f32 %v4182, %v4403
      %v4461 = vadd.f32 %v4183, %v4406
      %v4462 = vadd.f32 %v4184, %v4409
      %v4463 = vadd.f32 %v4185, %v4412
      %v4464 = vadd.f32 %v4186, %v4415
      %v4465 = vadd.f32 %v4187, %v4418
      %v4466 = vadd.f32 %v4188, %v4421
      %v4467 = vadd.f32 %v4189, %v4424
      %v4468 = vadd.f32 %v4190, %v4427
      %v4469 = vadd.f32 %v4191, %v4430
      %v4470 = vadd.f32 %v4192, %v4433
      %v4471 = vadd.f32 %v4193, %v4436
      %v4472 = vadd.f32 %v4194, %v4439
      %v4473 = vld [vmem:[%s203 + $0x2] sm:$0xff]
      %v4474 = vld [vmem:[%s203 + $0xa] sm:$0xff]
      %v4475 = vld [vmem:[%s203 + $0x1a] sm:$0xff]
      %v4476 = vld [vmem:[%s203 + $0x22] sm:$0xff]
      %v4477 = vld [vmem:[%s203 + $0x32] sm:$0xff]
      %v4478 = vld [vmem:[%s203 + $0x3a] sm:$0xff]
      %v4479 = vld [vmem:[%s203 + $0x4a] sm:$0xff]
      %v4480 = vld [vmem:[%s203 + $0x52] sm:$0xff]
      %v4481 = vld [vmem:[%s203 + $0x62] sm:$0xff]
      %v4482 = vld [vmem:[%s203 + $0x6a] sm:$0xff]
      %v4483 = vld [vmem:[%s203 + $0x7a] sm:$0xff]
      %v4484 = vld [vmem:[%s203 + $0x82] sm:$0xff]
      %v4485 = vld [vmem:[%s203 + $0x92] sm:$0xff]
      %v4486 = vld [vmem:[%s203 + $0x9a] sm:$0xff]
      %v4487 = vld [vmem:[%s203 + $0xaa] sm:$0xff]
      %v4488 = vld [vmem:[%s203 + $0xb2] sm:$0xff]
      %v4489 = vld [vmem:[%s203 + $0xc2] sm:$0xff]
      %v4490 = vld [vmem:[%s203 + $0xca] sm:$0xff]
      %v4491 = vld [vmem:[%s203 + $0xda] sm:$0xff]
      %v4492 = vld [vmem:[%s203 + $0xe2] sm:$0xff]
      %v4493 = vld [vmem:[%s203 + $0xf2] sm:$0xff]
      %v4494 = vld [vmem:[%s203 + $0xfa] sm:$0xff]
      %v4495 = vld [vmem:[%s203 + $0x10a] sm:$0xff]
      %v4496 = vld [vmem:[%s203 + $0x112] sm:$0xff]
      %v4497 = vld [vmem:[%s203 + $0x122] sm:$0xff]
      %v4498 = vld [vmem:[%s203 + $0x12a] sm:$0xff]
      %v4499 = vld [vmem:[%s203 + $0x13a] sm:$0xff]
      %v4500 = vld [vmem:[%s203 + $0x142] sm:$0xff]
      %v4501 = vld [vmem:[%s203 + $0x152] sm:$0xff]
      %v4502 = vld [vmem:[%s203 + $0x15a] sm:$0xff]
      %v4503 = vld [vmem:[%s203 + $0x16a] sm:$0xff]
      %v4504 = vld [vmem:[%s203 + $0x172] sm:$0xff]
      %s4505 = scalar_lea.vmem %s2, 20
      %v4506 = vld [vmem:[%s4505] sm:$0xf]
      %v4508 = vsel %vm204, %v4473, 0
      %v4511 = vsel %vm204, %v4474, 0
      %v4514 = vsel %vm204, %v4475, 0
      %v4517 = vsel %vm204, %v4476, 0
      %v4520 = vsel %vm204, %v4477, 0
      %v4523 = vsel %vm204, %v4478, 0
      %v4526 = vsel %vm204, %v4479, 0
      %v4529 = vsel %vm204, %v4480, 0
      %v4532 = vsel %vm204, %v4481, 0
      %v4535 = vsel %vm204, %v4482, 0
      %v4538 = vsel %vm204, %v4483, 0
      %v4541 = vsel %vm204, %v4484, 0
      %v4544 = vsel %vm204, %v4485, 0
      %v4547 = vsel %vm204, %v4486, 0
      %v4550 = vsel %vm204, %v4487, 0
      %v4553 = vsel %vm204, %v4488, 0
      %v4556 = vsel %vm204, %v4489, 0
      %v4559 = vsel %vm204, %v4490, 0
      %v4562 = vsel %vm204, %v4491, 0
      %v4565 = vsel %vm204, %v4492, 0
      %v4568 = vsel %vm204, %v4493, 0
      %v4571 = vsel %vm204, %v4494, 0
      %v4574 = vsel %vm204, %v4495, 0
      %v4577 = vsel %vm204, %v4496, 0
      %v4580 = vsel %vm204, %v4497, 0
      %v4583 = vsel %vm204, %v4498, 0
      %v4586 = vsel %vm204, %v4499, 0
      %v4589 = vsel %vm204, %v4500, 0
      %v4592 = vsel %vm204, %v4501, 0
      %v4595 = vsel %vm204, %v4502, 0
      %v4598 = vsel %vm204, %v4503, 0
      %v4601 = vsel %vm204, %v4504, 0
      %v4604 = vsel %vm478, %v4506, 0
      %4606 = vmatpush.msra.mxu0 0.0
      %4607 = vmatpush.msra.mxu0 0.0
      %4608 = vmatpush.msra.mxu0 0.0
      %4609 = vmatpush.msra.mxu0 0.0
      %4610 = vmatpush.msra.mxu0 0.0
      %4611 = vmatpush.msra.mxu0 0.0
      %4612 = vmatpush.msra.mxu0 0.0
      %4613 = vmatpush.msra.mxu0 0.0
      %4614 = vmatpush.msra.mxu0 0.0
      %4615 = vmatpush.msra.mxu0 0.0
      %4616 = vmatpush.msra.mxu0 0.0
      %4617 = vmatpush.msra.mxu0 0.0
      %4618 = vmatpush.msra.mxu0 0.0
      %4619 = vmatpush.msra.mxu0 0.0
      %4620 = vmatpush.msra.mxu0 0.0
      %4621 = vmatpush.msra.mxu0 %v4604
      %4622 = vmatmul.f32.gmra.mxu0 %v4508
      %v4623 = vpop.f32.mrf.mxu0
      %v4624 = vadd.f32 0.0, %v4623
      %4625 = vmatmul.f32.gmra.mxu0 %v4511
      %v4626 = vpop.f32.mrf.mxu0
      %v4627 = vadd.f32 0.0, %v4626
      %4628 = vmatmul.f32.gmra.mxu0 %v4514
      %v4629 = vpop.f32.mrf.mxu0
      %v4630 = vadd.f32 0.0, %v4629
      %4631 = vmatmul.f32.gmra.mxu0 %v4517
      %v4632 = vpop.f32.mrf.mxu0
      %v4633 = vadd.f32 0.0, %v4632
      %4634 = vmatmul.f32.gmra.mxu0 %v4520
      %v4635 = vpop.f32.mrf.mxu0
      %v4636 = vadd.f32 0.0, %v4635
      %4637 = vmatmul.f32.gmra.mxu0 %v4523
      %v4638 = vpop.f32.mrf.mxu0
      %v4639 = vadd.f32 0.0, %v4638
      %4640 = vmatmul.f32.gmra.mxu0 %v4526
      %v4641 = vpop.f32.mrf.mxu0
      %v4642 = vadd.f32 0.0, %v4641
      %4643 = vmatmul.f32.gmra.mxu0 %v4529
      %v4644 = vpop.f32.mrf.mxu0
      %v4645 = vadd.f32 0.0, %v4644
      %4646 = vmatmul.f32.gmra.mxu0 %v4532
      %v4647 = vpop.f32.mrf.mxu0
      %v4648 = vadd.f32 0.0, %v4647
      %4649 = vmatmul.f32.gmra.mxu0 %v4535
      %v4650 = vpop.f32.mrf.mxu0
      %v4651 = vadd.f32 0.0, %v4650
      %4652 = vmatmul.f32.gmra.mxu0 %v4538
      %v4653 = vpop.f32.mrf.mxu0
      %v4654 = vadd.f32 0.0, %v4653
      %4655 = vmatmul.f32.gmra.mxu0 %v4541
      %v4656 = vpop.f32.mrf.mxu0
      %v4657 = vadd.f32 0.0, %v4656
      %4658 = vmatmul.f32.gmra.mxu0 %v4544
      %v4659 = vpop.f32.mrf.mxu0
      %v4660 = vadd.f32 0.0, %v4659
      %4661 = vmatmul.f32.gmra.mxu0 %v4547
      %v4662 = vpop.f32.mrf.mxu0
      %v4663 = vadd.f32 0.0, %v4662
      %4664 = vmatmul.f32.gmra.mxu0 %v4550
      %v4665 = vpop.f32.mrf.mxu0
      %v4666 = vadd.f32 0.0, %v4665
      %4667 = vmatmul.f32.gmra.mxu0 %v4553
      %v4668 = vpop.f32.mrf.mxu0
      %v4669 = vadd.f32 0.0, %v4668
      %4670 = vmatmul.f32.gmra.mxu0 %v4556
      %v4671 = vpop.f32.mrf.mxu0
      %v4672 = vadd.f32 0.0, %v4671
      %4673 = vmatmul.f32.gmra.mxu0 %v4559
      %v4674 = vpop.f32.mrf.mxu0
      %v4675 = vadd.f32 0.0, %v4674
      %4676 = vmatmul.f32.gmra.mxu0 %v4562
      %v4677 = vpop.f32.mrf.mxu0
      %v4678 = vadd.f32 0.0, %v4677
      %4679 = vmatmul.f32.gmra.mxu0 %v4565
      %v4680 = vpop.f32.mrf.mxu0
      %v4681 = vadd.f32 0.0, %v4680
      %4682 = vmatmul.f32.gmra.mxu0 %v4568
      %v4683 = vpop.f32.mrf.mxu0
      %v4684 = vadd.f32 0.0, %v4683
      %4685 = vmatmul.f32.gmra.mxu0 %v4571
      %v4686 = vpop.f32.mrf.mxu0
      %v4687 = vadd.f32 0.0, %v4686
      %4688 = vmatmul.f32.gmra.mxu0 %v4574
      %v4689 = vpop.f32.mrf.mxu0
      %v4690 = vadd.f32 0.0, %v4689
      %4691 = vmatmul.f32.gmra.mxu0 %v4577
      %v4692 = vpop.f32.mrf.mxu0
      %v4693 = vadd.f32 0.0, %v4692
      %4694 = vmatmul.f32.gmra.mxu0 %v4580
      %v4695 = vpop.f32.mrf.mxu0
      %v4696 = vadd.f32 0.0, %v4695
      %4697 = vmatmul.f32.gmra.mxu0 %v4583
      %v4698 = vpop.f32.mrf.mxu0
      %v4699 = vadd.f32 0.0, %v4698
      %4700 = vmatmul.f32.gmra.mxu0 %v4586
      %v4701 = vpop.f32.mrf.mxu0
      %v4702 = vadd.f32 0.0, %v4701
      %4703 = vmatmul.f32.gmra.mxu0 %v4589
      %v4704 = vpop.f32.mrf.mxu0
      %v4705 = vadd.f32 0.0, %v4704
      %4706 = vmatmul.f32.gmra.mxu0 %v4592
      %v4707 = vpop.f32.mrf.mxu0
      %v4708 = vadd.f32 0.0, %v4707
      %4709 = vmatmul.f32.gmra.mxu0 %v4595
      %v4710 = vpop.f32.mrf.mxu0
      %v4711 = vadd.f32 0.0, %v4710
      %4712 = vmatmul.f32.gmra.mxu0 %v4598
      %v4713 = vpop.f32.mrf.mxu0
      %v4714 = vadd.f32 0.0, %v4713
      %4715 = vmatmul.f32.gmra.mxu0 %v4601
      %v4716 = vpop.f32.mrf.mxu0
      %v4717 = vadd.f32 0.0, %v4716
      %4718 = vdwg.mxu0
      %v4719 = vadd.f32 %v4441, %v4624
      %v4720 = vadd.f32 %v4442, %v4627
      %v4721 = vadd.f32 %v4443, %v4630
      %v4722 = vadd.f32 %v4444, %v4633
      %v4723 = vadd.f32 %v4445, %v4636
      %v4724 = vadd.f32 %v4446, %v4639
      %v4725 = vadd.f32 %v4447, %v4642
      %v4726 = vadd.f32 %v4448, %v4645
      %v4727 = vadd.f32 %v4449, %v4648
      %v4728 = vadd.f32 %v4450, %v4651
      %v4729 = vadd.f32 %v4451, %v4654
      %v4730 = vadd.f32 %v4452, %v4657
      %v4731 = vadd.f32 %v4453, %v4660
      %v4732 = vadd.f32 %v4454, %v4663
      %v4733 = vadd.f32 %v4455, %v4666
      %v4734 = vadd.f32 %v4456, %v4669
      %v4735 = vadd.f32 %v4457, %v4672
      %v4736 = vadd.f32 %v4458, %v4675
      %v4737 = vadd.f32 %v4459, %v4678
      %v4738 = vadd.f32 %v4460, %v4681
      %v4739 = vadd.f32 %v4461, %v4684
      %v4740 = vadd.f32 %v4462, %v4687
      %v4741 = vadd.f32 %v4463, %v4690
      %v4742 = vadd.f32 %v4464, %v4693
      %v4743 = vadd.f32 %v4465, %v4696
      %v4744 = vadd.f32 %v4466, %v4699
      %v4745 = vadd.f32 %v4467, %v4702
      %v4746 = vadd.f32 %v4468, %v4705
      %v4747 = vadd.f32 %v4469, %v4708
      %v4748 = vadd.f32 %v4470, %v4711
      %v4749 = vadd.f32 %v4471, %v4714
      %v4750 = vadd.f32 %v4472, %v4717
      %v4751 = vld [vmem:[%s1919] sm:$0xff]
      %v4752 = vld [vmem:[%s1919 + $0x8] sm:$0xff]
      %v4753 = vld [vmem:[%s1919 + $0x18] sm:$0xff]
      %v4754 = vld [vmem:[%s1919 + $0x20] sm:$0xff]
      %v4755 = vld [vmem:[%s1919 + $0x30] sm:$0xff]
      %v4756 = vld [vmem:[%s1919 + $0x38] sm:$0xff]
      %v4757 = vld [vmem:[%s1919 + $0x48] sm:$0xff]
      %v4758 = vld [vmem:[%s1919 + $0x50] sm:$0xff]
      %v4759 = vld [vmem:[%s1919 + $0x60] sm:$0xff]
      %v4760 = vld [vmem:[%s1919 + $0x68] sm:$0xff]
      %v4761 = vld [vmem:[%s1919 + $0x78] sm:$0xff]
      %v4762 = vld [vmem:[%s1919 + $0x80] sm:$0xff]
      %v4763 = vld [vmem:[%s1919 + $0x90] sm:$0xff]
      %v4764 = vld [vmem:[%s1919 + $0x98] sm:$0xff]
      %v4765 = vld [vmem:[%s1919 + $0xa8] sm:$0xff]
      %v4766 = vld [vmem:[%s1919 + $0xb0] sm:$0xff]
      %v4767 = vld [vmem:[%s1919 + $0xc0] sm:$0xff]
      %v4768 = vld [vmem:[%s1919 + $0xc8] sm:$0xff]
      %v4769 = vld [vmem:[%s1919 + $0xd8] sm:$0xff]
      %v4770 = vld [vmem:[%s1919 + $0xe0] sm:$0xff]
      %v4771 = vld [vmem:[%s1919 + $0xf0] sm:$0xff]
      %v4772 = vld [vmem:[%s1919 + $0xf8] sm:$0xff]
      %v4773 = vld [vmem:[%s1919 + $0x108] sm:$0xff]
      %v4774 = vld [vmem:[%s1919 + $0x110] sm:$0xff]
      %v4775 = vld [vmem:[%s1919 + $0x120] sm:$0xff]
      %v4776 = vld [vmem:[%s1919 + $0x128] sm:$0xff]
      %v4777 = vld [vmem:[%s1919 + $0x138] sm:$0xff]
      %v4778 = vld [vmem:[%s1919 + $0x140] sm:$0xff]
      %v4779 = vld [vmem:[%s1919 + $0x150] sm:$0xff]
      %v4780 = vld [vmem:[%s1919 + $0x158] sm:$0xff]
      %v4781 = vld [vmem:[%s1919 + $0x168] sm:$0xff]
      %v4782 = vld [vmem:[%s1919 + $0x170] sm:$0xff]
      %s4783 = scalar_lea.vmem %s2, 24
      %v4784 = vld [vmem:[%s4783] sm:$0xf]
      %v4786 = vsel %vm204, %v4751, 0
      %v4789 = vsel %vm204, %v4752, 0
      %v4792 = vsel %vm204, %v4753, 0
      %v4795 = vsel %vm204, %v4754, 0
      %v4798 = vsel %vm204, %v4755, 0
      %v4801 = vsel %vm204, %v4756, 0
      %v4804 = vsel %vm204, %v4757, 0
      %v4807 = vsel %vm204, %v4758, 0
      %v4810 = vsel %vm204, %v4759, 0
      %v4813 = vsel %vm204, %v4760, 0
      %v4816 = vsel %vm204, %v4761, 0
      %v4819 = vsel %vm204, %v4762, 0
      %v4822 = vsel %vm204, %v4763, 0
      %v4825 = vsel %vm204, %v4764, 0
      %v4828 = vsel %vm204, %v4765, 0
      %v4831 = vsel %vm204, %v4766, 0
      %v4834 = vsel %vm204, %v4767, 0
      %v4837 = vsel %vm204, %v4768, 0
      %v4840 = vsel %vm204, %v4769, 0
      %v4843 = vsel %vm204, %v4770, 0
      %v4846 = vsel %vm204, %v4771, 0
      %v4849 = vsel %vm204, %v4772, 0
      %v4852 = vsel %vm204, %v4773, 0
      %v4855 = vsel %vm204, %v4774, 0
      %v4858 = vsel %vm204, %v4775, 0
      %v4861 = vsel %vm204, %v4776, 0
      %v4864 = vsel %vm204, %v4777, 0
      %v4867 = vsel %vm204, %v4778, 0
      %v4870 = vsel %vm204, %v4779, 0
      %v4873 = vsel %vm204, %v4780, 0
      %v4876 = vsel %vm204, %v4781, 0
      %v4879 = vsel %vm204, %v4782, 0
      %v4882 = vsel %vm478, %v4784, 0
      %4884 = vmatpush.msra.mxu0 0.0
      %4885 = vmatpush.msra.mxu0 0.0
      %4886 = vmatpush.msra.mxu0 0.0
      %4887 = vmatpush.msra.mxu0 0.0
      %4888 = vmatpush.msra.mxu0 0.0
      %4889 = vmatpush.msra.mxu0 0.0
      %4890 = vmatpush.msra.mxu0 0.0
      %4891 = vmatpush.msra.mxu0 0.0
      %4892 = vmatpush.msra.mxu0 0.0
      %4893 = vmatpush.msra.mxu0 0.0
      %4894 = vmatpush.msra.mxu0 0.0
      %4895 = vmatpush.msra.mxu0 0.0
      %4896 = vmatpush.msra.mxu0 0.0
      %4897 = vmatpush.msra.mxu0 0.0
      %4898 = vmatpush.msra.mxu0 0.0
      %4899 = vmatpush.msra.mxu0 %v4882
      %4900 = vmatmul.f32.gmra.mxu0 %v4786
      %v4901 = vpop.f32.mrf.mxu0
      %v4902 = vadd.f32 0.0, %v4901
      %4903 = vmatmul.f32.gmra.mxu0 %v4789
      %v4904 = vpop.f32.mrf.mxu0
      %v4905 = vadd.f32 0.0, %v4904
      %4906 = vmatmul.f32.gmra.mxu0 %v4792
      %v4907 = vpop.f32.mrf.mxu0
      %v4908 = vadd.f32 0.0, %v4907
      %4909 = vmatmul.f32.gmra.mxu0 %v4795
      %v4910 = vpop.f32.mrf.mxu0
      %v4911 = vadd.f32 0.0, %v4910
      %4912 = vmatmul.f32.gmra.mxu0 %v4798
      %v4913 = vpop.f32.mrf.mxu0
      %v4914 = vadd.f32 0.0, %v4913
      %4915 = vmatmul.f32.gmra.mxu0 %v4801
      %v4916 = vpop.f32.mrf.mxu0
      %v4917 = vadd.f32 0.0, %v4916
      %4918 = vmatmul.f32.gmra.mxu0 %v4804
      %v4919 = vpop.f32.mrf.mxu0
      %v4920 = vadd.f32 0.0, %v4919
      %4921 = vmatmul.f32.gmra.mxu0 %v4807
      %v4922 = vpop.f32.mrf.mxu0
      %v4923 = vadd.f32 0.0, %v4922
      %4924 = vmatmul.f32.gmra.mxu0 %v4810
      %v4925 = vpop.f32.mrf.mxu0
      %v4926 = vadd.f32 0.0, %v4925
      %4927 = vmatmul.f32.gmra.mxu0 %v4813
      %v4928 = vpop.f32.mrf.mxu0
      %v4929 = vadd.f32 0.0, %v4928
      %4930 = vmatmul.f32.gmra.mxu0 %v4816
      %v4931 = vpop.f32.mrf.mxu0
      %v4932 = vadd.f32 0.0, %v4931
      %4933 = vmatmul.f32.gmra.mxu0 %v4819
      %v4934 = vpop.f32.mrf.mxu0
      %v4935 = vadd.f32 0.0, %v4934
      %4936 = vmatmul.f32.gmra.mxu0 %v4822
      %v4937 = vpop.f32.mrf.mxu0
      %v4938 = vadd.f32 0.0, %v4937
      %4939 = vmatmul.f32.gmra.mxu0 %v4825
      %v4940 = vpop.f32.mrf.mxu0
      %v4941 = vadd.f32 0.0, %v4940
      %4942 = vmatmul.f32.gmra.mxu0 %v4828
      %v4943 = vpop.f32.mrf.mxu0
      %v4944 = vadd.f32 0.0, %v4943
      %4945 = vmatmul.f32.gmra.mxu0 %v4831
      %v4946 = vpop.f32.mrf.mxu0
      %v4947 = vadd.f32 0.0, %v4946
      %4948 = vmatmul.f32.gmra.mxu0 %v4834
      %v4949 = vpop.f32.mrf.mxu0
      %v4950 = vadd.f32 0.0, %v4949
      %4951 = vmatmul.f32.gmra.mxu0 %v4837
      %v4952 = vpop.f32.mrf.mxu0
      %v4953 = vadd.f32 0.0, %v4952
      %4954 = vmatmul.f32.gmra.mxu0 %v4840
      %v4955 = vpop.f32.mrf.mxu0
      %v4956 = vadd.f32 0.0, %v4955
      %4957 = vmatmul.f32.gmra.mxu0 %v4843
      %v4958 = vpop.f32.mrf.mxu0
      %v4959 = vadd.f32 0.0, %v4958
      %4960 = vmatmul.f32.gmra.mxu0 %v4846
      %v4961 = vpop.f32.mrf.mxu0
      %v4962 = vadd.f32 0.0, %v4961
      %4963 = vmatmul.f32.gmra.mxu0 %v4849
      %v4964 = vpop.f32.mrf.mxu0
      %v4965 = vadd.f32 0.0, %v4964
      %4966 = vmatmul.f32.gmra.mxu0 %v4852
      %v4967 = vpop.f32.mrf.mxu0
      %v4968 = vadd.f32 0.0, %v4967
      %4969 = vmatmul.f32.gmra.mxu0 %v4855
      %v4970 = vpop.f32.mrf.mxu0
      %v4971 = vadd.f32 0.0, %v4970
      %4972 = vmatmul.f32.gmra.mxu0 %v4858
      %v4973 = vpop.f32.mrf.mxu0
      %v4974 = vadd.f32 0.0, %v4973
      %4975 = vmatmul.f32.gmra.mxu0 %v4861
      %v4976 = vpop.f32.mrf.mxu0
      %v4977 = vadd.f32 0.0, %v4976
      %4978 = vmatmul.f32.gmra.mxu0 %v4864
      %v4979 = vpop.f32.mrf.mxu0
      %v4980 = vadd.f32 0.0, %v4979
      %4981 = vmatmul.f32.gmra.mxu0 %v4867
      %v4982 = vpop.f32.mrf.mxu0
      %v4983 = vadd.f32 0.0, %v4982
      %4984 = vmatmul.f32.gmra.mxu0 %v4870
      %v4985 = vpop.f32.mrf.mxu0
      %v4986 = vadd.f32 0.0, %v4985
      %4987 = vmatmul.f32.gmra.mxu0 %v4873
      %v4988 = vpop.f32.mrf.mxu0
      %v4989 = vadd.f32 0.0, %v4988
      %4990 = vmatmul.f32.gmra.mxu0 %v4876
      %v4991 = vpop.f32.mrf.mxu0
      %v4992 = vadd.f32 0.0, %v4991
      %4993 = vmatmul.f32.gmra.mxu0 %v4879
      %v4994 = vpop.f32.mrf.mxu0
      %v4995 = vadd.f32 0.0, %v4994
      %4996 = vdwg.mxu0
      %v4997 = vadd.f32 %v4719, %v4902
      %v4998 = vadd.f32 %v4720, %v4905
      %v4999 = vadd.f32 %v4721, %v4908
      %v5000 = vadd.f32 %v4722, %v4911
      %v5001 = vadd.f32 %v4723, %v4914
      %v5002 = vadd.f32 %v4724, %v4917
      %v5003 = vadd.f32 %v4725, %v4920
      %v5004 = vadd.f32 %v4726, %v4923
      %v5005 = vadd.f32 %v4727, %v4926
      %v5006 = vadd.f32 %v4728, %v4929
      %v5007 = vadd.f32 %v4729, %v4932
      %v5008 = vadd.f32 %v4730, %v4935
      %v5009 = vadd.f32 %v4731, %v4938
      %v5010 = vadd.f32 %v4732, %v4941
      %v5011 = vadd.f32 %v4733, %v4944
      %v5012 = vadd.f32 %v4734, %v4947
      %v5013 = vadd.f32 %v4735, %v4950
      %v5014 = vadd.f32 %v4736, %v4953
      %v5015 = vadd.f32 %v4737, %v4956
      %v5016 = vadd.f32 %v4738, %v4959
      %v5017 = vadd.f32 %v4739, %v4962
      %v5018 = vadd.f32 %v4740, %v4965
      %v5019 = vadd.f32 %v4741, %v4968
      %v5020 = vadd.f32 %v4742, %v4971
      %v5021 = vadd.f32 %v4743, %v4974
      %v5022 = vadd.f32 %v4744, %v4977
      %v5023 = vadd.f32 %v4745, %v4980
      %v5024 = vadd.f32 %v4746, %v4983
      %v5025 = vadd.f32 %v4747, %v4986
      %v5026 = vadd.f32 %v4748, %v4989
      %v5027 = vadd.f32 %v4749, %v4992
      %v5028 = vadd.f32 %v4750, %v4995
      %v5029 = vld [vmem:[%s1919 + $0x1] sm:$0xff]
      %v5030 = vld [vmem:[%s1919 + $0x9] sm:$0xff]
      %v5031 = vld [vmem:[%s1919 + $0x19] sm:$0xff]
      %v5032 = vld [vmem:[%s1919 + $0x21] sm:$0xff]
      %v5033 = vld [vmem:[%s1919 + $0x31] sm:$0xff]
      %v5034 = vld [vmem:[%s1919 + $0x39] sm:$0xff]
      %v5035 = vld [vmem:[%s1919 + $0x49] sm:$0xff]
      %v5036 = vld [vmem:[%s1919 + $0x51] sm:$0xff]
      %v5037 = vld [vmem:[%s1919 + $0x61] sm:$0xff]
      %v5038 = vld [vmem:[%s1919 + $0x69] sm:$0xff]
      %v5039 = vld [vmem:[%s1919 + $0x79] sm:$0xff]
      %v5040 = vld [vmem:[%s1919 + $0x81] sm:$0xff]
      %v5041 = vld [vmem:[%s1919 + $0x91] sm:$0xff]
      %v5042 = vld [vmem:[%s1919 + $0x99] sm:$0xff]
      %v5043 = vld [vmem:[%s1919 + $0xa9] sm:$0xff]
      %v5044 = vld [vmem:[%s1919 + $0xb1] sm:$0xff]
      %v5045 = vld [vmem:[%s1919 + $0xc1] sm:$0xff]
      %v5046 = vld [vmem:[%s1919 + $0xc9] sm:$0xff]
      %v5047 = vld [vmem:[%s1919 + $0xd9] sm:$0xff]
      %v5048 = vld [vmem:[%s1919 + $0xe1] sm:$0xff]
      %v5049 = vld [vmem:[%s1919 + $0xf1] sm:$0xff]
      %v5050 = vld [vmem:[%s1919 + $0xf9] sm:$0xff]
      %v5051 = vld [vmem:[%s1919 + $0x109] sm:$0xff]
      %v5052 = vld [vmem:[%s1919 + $0x111] sm:$0xff]
      %v5053 = vld [vmem:[%s1919 + $0x121] sm:$0xff]
      %v5054 = vld [vmem:[%s1919 + $0x129] sm:$0xff]
      %v5055 = vld [vmem:[%s1919 + $0x139] sm:$0xff]
      %v5056 = vld [vmem:[%s1919 + $0x141] sm:$0xff]
      %v5057 = vld [vmem:[%s1919 + $0x151] sm:$0xff]
      %v5058 = vld [vmem:[%s1919 + $0x159] sm:$0xff]
      %v5059 = vld [vmem:[%s1919 + $0x169] sm:$0xff]
      %v5060 = vld [vmem:[%s1919 + $0x171] sm:$0xff]
      %s5061 = scalar_lea.vmem %s2, 28
      %v5062 = vld [vmem:[%s5061] sm:$0xf]
      %v5064 = vsel %vm204, %v5029, 0
      %v5067 = vsel %vm204, %v5030, 0
      %v5070 = vsel %vm204, %v5031, 0
      %v5073 = vsel %vm204, %v5032, 0
      %v5076 = vsel %vm204, %v5033, 0
      %v5079 = vsel %vm204, %v5034, 0
      %v5082 = vsel %vm204, %v5035, 0
      %v5085 = vsel %vm204, %v5036, 0
      %v5088 = vsel %vm204, %v5037, 0
      %v5091 = vsel %vm204, %v5038, 0
      %v5094 = vsel %vm204, %v5039, 0
      %v5097 = vsel %vm204, %v5040, 0
      %v5100 = vsel %vm204, %v5041, 0
      %v5103 = vsel %vm204, %v5042, 0
      %v5106 = vsel %vm204, %v5043, 0
      %v5109 = vsel %vm204, %v5044, 0
      %v5112 = vsel %vm204, %v5045, 0
      %v5115 = vsel %vm204, %v5046, 0
      %v5118 = vsel %vm204, %v5047, 0
      %v5121 = vsel %vm204, %v5048, 0
      %v5124 = vsel %vm204, %v5049, 0
      %v5127 = vsel %vm204, %v5050, 0
      %v5130 = vsel %vm204, %v5051, 0
      %v5133 = vsel %vm204, %v5052, 0
      %v5136 = vsel %vm204, %v5053, 0
      %v5139 = vsel %vm204, %v5054, 0
      %v5142 = vsel %vm204, %v5055, 0
      %v5145 = vsel %vm204, %v5056, 0
      %v5148 = vsel %vm204, %v5057, 0
      %v5151 = vsel %vm204, %v5058, 0
      %v5154 = vsel %vm204, %v5059, 0
      %v5157 = vsel %vm204, %v5060, 0
      %v5160 = vsel %vm478, %v5062, 0
      %5162 = vmatpush.msra.mxu0 0.0
      %5163 = vmatpush.msra.mxu0 0.0
      %5164 = vmatpush.msra.mxu0 0.0
      %5165 = vmatpush.msra.mxu0 0.0
      %5166 = vmatpush.msra.mxu0 0.0
      %5167 = vmatpush.msra.mxu0 0.0
      %5168 = vmatpush.msra.mxu0 0.0
      %5169 = vmatpush.msra.mxu0 0.0
      %5170 = vmatpush.msra.mxu0 0.0
      %5171 = vmatpush.msra.mxu0 0.0
      %5172 = vmatpush.msra.mxu0 0.0
      %5173 = vmatpush.msra.mxu0 0.0
      %5174 = vmatpush.msra.mxu0 0.0
      %5175 = vmatpush.msra.mxu0 0.0
      %5176 = vmatpush.msra.mxu0 0.0
      %5177 = vmatpush.msra.mxu0 %v5160
      %5178 = vmatmul.f32.gmra.mxu0 %v5064
      %v5179 = vpop.f32.mrf.mxu0
      %v5180 = vadd.f32 0.0, %v5179
      %5181 = vmatmul.f32.gmra.mxu0 %v5067
      %v5182 = vpop.f32.mrf.mxu0
      %v5183 = vadd.f32 0.0, %v5182
      %5184 = vmatmul.f32.gmra.mxu0 %v5070
      %v5185 = vpop.f32.mrf.mxu0
      %v5186 = vadd.f32 0.0, %v5185
      %5187 = vmatmul.f32.gmra.mxu0 %v5073
      %v5188 = vpop.f32.mrf.mxu0
      %v5189 = vadd.f32 0.0, %v5188
      %5190 = vmatmul.f32.gmra.mxu0 %v5076
      %v5191 = vpop.f32.mrf.mxu0
      %v5192 = vadd.f32 0.0, %v5191
      %5193 = vmatmul.f32.gmra.mxu0 %v5079
      %v5194 = vpop.f32.mrf.mxu0
      %v5195 = vadd.f32 0.0, %v5194
      %5196 = vmatmul.f32.gmra.mxu0 %v5082
      %v5197 = vpop.f32.mrf.mxu0
      %v5198 = vadd.f32 0.0, %v5197
      %5199 = vmatmul.f32.gmra.mxu0 %v5085
      %v5200 = vpop.f32.mrf.mxu0
      %v5201 = vadd.f32 0.0, %v5200
      %5202 = vmatmul.f32.gmra.mxu0 %v5088
      %v5203 = vpop.f32.mrf.mxu0
      %v5204 = vadd.f32 0.0, %v5203
      %5205 = vmatmul.f32.gmra.mxu0 %v5091
      %v5206 = vpop.f32.mrf.mxu0
      %v5207 = vadd.f32 0.0, %v5206
      %5208 = vmatmul.f32.gmra.mxu0 %v5094
      %v5209 = vpop.f32.mrf.mxu0
      %v5210 = vadd.f32 0.0, %v5209
      %5211 = vmatmul.f32.gmra.mxu0 %v5097
      %v5212 = vpop.f32.mrf.mxu0
      %v5213 = vadd.f32 0.0, %v5212
      %5214 = vmatmul.f32.gmra.mxu0 %v5100
      %v5215 = vpop.f32.mrf.mxu0
      %v5216 = vadd.f32 0.0, %v5215
      %5217 = vmatmul.f32.gmra.mxu0 %v5103
      %v5218 = vpop.f32.mrf.mxu0
      %v5219 = vadd.f32 0.0, %v5218
      %5220 = vmatmul.f32.gmra.mxu0 %v5106
      %v5221 = vpop.f32.mrf.mxu0
      %v5222 = vadd.f32 0.0, %v5221
      %5223 = vmatmul.f32.gmra.mxu0 %v5109
      %v5224 = vpop.f32.mrf.mxu0
      %v5225 = vadd.f32 0.0, %v5224
      %5226 = vmatmul.f32.gmra.mxu0 %v5112
      %v5227 = vpop.f32.mrf.mxu0
      %v5228 = vadd.f32 0.0, %v5227
      %5229 = vmatmul.f32.gmra.mxu0 %v5115
      %v5230 = vpop.f32.mrf.mxu0
      %v5231 = vadd.f32 0.0, %v5230
      %5232 = vmatmul.f32.gmra.mxu0 %v5118
      %v5233 = vpop.f32.mrf.mxu0
      %v5234 = vadd.f32 0.0, %v5233
      %5235 = vmatmul.f32.gmra.mxu0 %v5121
      %v5236 = vpop.f32.mrf.mxu0
      %v5237 = vadd.f32 0.0, %v5236
      %5238 = vmatmul.f32.gmra.mxu0 %v5124
      %v5239 = vpop.f32.mrf.mxu0
      %v5240 = vadd.f32 0.0, %v5239
      %5241 = vmatmul.f32.gmra.mxu0 %v5127
      %v5242 = vpop.f32.mrf.mxu0
      %v5243 = vadd.f32 0.0, %v5242
      %5244 = vmatmul.f32.gmra.mxu0 %v5130
      %v5245 = vpop.f32.mrf.mxu0
      %v5246 = vadd.f32 0.0, %v5245
      %5247 = vmatmul.f32.gmra.mxu0 %v5133
      %v5248 = vpop.f32.mrf.mxu0
      %v5249 = vadd.f32 0.0, %v5248
      %5250 = vmatmul.f32.gmra.mxu0 %v5136
      %v5251 = vpop.f32.mrf.mxu0
      %v5252 = vadd.f32 0.0, %v5251
      %5253 = vmatmul.f32.gmra.mxu0 %v5139
      %v5254 = vpop.f32.mrf.mxu0
      %v5255 = vadd.f32 0.0, %v5254
      %5256 = vmatmul.f32.gmra.mxu0 %v5142
      %v5257 = vpop.f32.mrf.mxu0
      %v5258 = vadd.f32 0.0, %v5257
      %5259 = vmatmul.f32.gmra.mxu0 %v5145
      %v5260 = vpop.f32.mrf.mxu0
      %v5261 = vadd.f32 0.0, %v5260
      %5262 = vmatmul.f32.gmra.mxu0 %v5148
      %v5263 = vpop.f32.mrf.mxu0
      %v5264 = vadd.f32 0.0, %v5263
      %5265 = vmatmul.f32.gmra.mxu0 %v5151
      %v5266 = vpop.f32.mrf.mxu0
      %v5267 = vadd.f32 0.0, %v5266
      %5268 = vmatmul.f32.gmra.mxu0 %v5154
      %v5269 = vpop.f32.mrf.mxu0
      %v5270 = vadd.f32 0.0, %v5269
      %5271 = vmatmul.f32.gmra.mxu0 %v5157
      %v5272 = vpop.f32.mrf.mxu0
      %v5273 = vadd.f32 0.0, %v5272
      %5274 = vdwg.mxu0
      %v5275 = vadd.f32 %v4997, %v5180
      %v5276 = vadd.f32 %v4998, %v5183
      %v5277 = vadd.f32 %v4999, %v5186
      %v5278 = vadd.f32 %v5000, %v5189
      %v5279 = vadd.f32 %v5001, %v5192
      %v5280 = vadd.f32 %v5002, %v5195
      %v5281 = vadd.f32 %v5003, %v5198
      %v5282 = vadd.f32 %v5004, %v5201
      %v5283 = vadd.f32 %v5005, %v5204
      %v5284 = vadd.f32 %v5006, %v5207
      %v5285 = vadd.f32 %v5007, %v5210
      %v5286 = vadd.f32 %v5008, %v5213
      %v5287 = vadd.f32 %v5009, %v5216
      %v5288 = vadd.f32 %v5010, %v5219
      %v5289 = vadd.f32 %v5011, %v5222
      %v5290 = vadd.f32 %v5012, %v5225
      %v5291 = vadd.f32 %v5013, %v5228
      %v5292 = vadd.f32 %v5014, %v5231
      %v5293 = vadd.f32 %v5015, %v5234
      %v5294 = vadd.f32 %v5016, %v5237
      %v5295 = vadd.f32 %v5017, %v5240
      %v5296 = vadd.f32 %v5018, %v5243
      %v5297 = vadd.f32 %v5019, %v5246
      %v5298 = vadd.f32 %v5020, %v5249
      %v5299 = vadd.f32 %v5021, %v5252
      %v5300 = vadd.f32 %v5022, %v5255
      %v5301 = vadd.f32 %v5023, %v5258
      %v5302 = vadd.f32 %v5024, %v5261
      %v5303 = vadd.f32 %v5025, %v5264
      %v5304 = vadd.f32 %v5026, %v5267
      %v5305 = vadd.f32 %v5027, %v5270
      %v5306 = vadd.f32 %v5028, %v5273
      %v5307 = vld [vmem:[%s1919 + $0x2] sm:$0xff]
      %v5308 = vld [vmem:[%s1919 + $0xa] sm:$0xff]
      %v5309 = vld [vmem:[%s1919 + $0x1a] sm:$0xff]
      %v5310 = vld [vmem:[%s1919 + $0x22] sm:$0xff]
      %v5311 = vld [vmem:[%s1919 + $0x32] sm:$0xff]
      %v5312 = vld [vmem:[%s1919 + $0x3a] sm:$0xff]
      %v5313 = vld [vmem:[%s1919 + $0x4a] sm:$0xff]
      %v5314 = vld [vmem:[%s1919 + $0x52] sm:$0xff]
      %v5315 = vld [vmem:[%s1919 + $0x62] sm:$0xff]
      %v5316 = vld [vmem:[%s1919 + $0x6a] sm:$0xff]
      %v5317 = vld [vmem:[%s1919 + $0x7a] sm:$0xff]
      %v5318 = vld [vmem:[%s1919 + $0x82] sm:$0xff]
      %v5319 = vld [vmem:[%s1919 + $0x92] sm:$0xff]
      %v5320 = vld [vmem:[%s1919 + $0x9a] sm:$0xff]
      %v5321 = vld [vmem:[%s1919 + $0xaa] sm:$0xff]
      %v5322 = vld [vmem:[%s1919 + $0xb2] sm:$0xff]
      %v5323 = vld [vmem:[%s1919 + $0xc2] sm:$0xff]
      %v5324 = vld [vmem:[%s1919 + $0xca] sm:$0xff]
      %v5325 = vld [vmem:[%s1919 + $0xda] sm:$0xff]
      %v5326 = vld [vmem:[%s1919 + $0xe2] sm:$0xff]
      %v5327 = vld [vmem:[%s1919 + $0xf2] sm:$0xff]
      %v5328 = vld [vmem:[%s1919 + $0xfa] sm:$0xff]
      %v5329 = vld [vmem:[%s1919 + $0x10a] sm:$0xff]
      %v5330 = vld [vmem:[%s1919 + $0x112] sm:$0xff]
      %v5331 = vld [vmem:[%s1919 + $0x122] sm:$0xff]
      %v5332 = vld [vmem:[%s1919 + $0x12a] sm:$0xff]
      %v5333 = vld [vmem:[%s1919 + $0x13a] sm:$0xff]
      %v5334 = vld [vmem:[%s1919 + $0x142] sm:$0xff]
      %v5335 = vld [vmem:[%s1919 + $0x152] sm:$0xff]
      %v5336 = vld [vmem:[%s1919 + $0x15a] sm:$0xff]
      %v5337 = vld [vmem:[%s1919 + $0x16a] sm:$0xff]
      %v5338 = vld [vmem:[%s1919 + $0x172] sm:$0xff]
      %s5339 = scalar_lea.vmem %s2, 32
      %v5340 = vld [vmem:[%s5339] sm:$0xf]
      %v5342 = vsel %vm204, %v5307, 0
      %v5345 = vsel %vm204, %v5308, 0
      %v5348 = vsel %vm204, %v5309, 0
      %v5351 = vsel %vm204, %v5310, 0
      %v5354 = vsel %vm204, %v5311, 0
      %v5357 = vsel %vm204, %v5312, 0
      %v5360 = vsel %vm204, %v5313, 0
      %v5363 = vsel %vm204, %v5314, 0
      %v5366 = vsel %vm204, %v5315, 0
      %v5369 = vsel %vm204, %v5316, 0
      %v5372 = vsel %vm204, %v5317, 0
      %v5375 = vsel %vm204, %v5318, 0
      %v5378 = vsel %vm204, %v5319, 0
      %v5381 = vsel %vm204, %v5320, 0
      %v5384 = vsel %vm204, %v5321, 0
      %v5387 = vsel %vm204, %v5322, 0
      %v5390 = vsel %vm204, %v5323, 0
      %v5393 = vsel %vm204, %v5324, 0
      %v5396 = vsel %vm204, %v5325, 0
      %v5399 = vsel %vm204, %v5326, 0
      %v5402 = vsel %vm204, %v5327, 0
      %v5405 = vsel %vm204, %v5328, 0
      %v5408 = vsel %vm204, %v5329, 0
      %v5411 = vsel %vm204, %v5330, 0
      %v5414 = vsel %vm204, %v5331, 0
      %v5417 = vsel %vm204, %v5332, 0
      %v5420 = vsel %vm204, %v5333, 0
      %v5423 = vsel %vm204, %v5334, 0
      %v5426 = vsel %vm204, %v5335, 0
      %v5429 = vsel %vm204, %v5336, 0
      %v5432 = vsel %vm204, %v5337, 0
      %v5435 = vsel %vm204, %v5338, 0
      %v5438 = vsel %vm478, %v5340, 0
      %5440 = vmatpush.msra.mxu0 0.0
      %5441 = vmatpush.msra.mxu0 0.0
      %5442 = vmatpush.msra.mxu0 0.0
      %5443 = vmatpush.msra.mxu0 0.0
      %5444 = vmatpush.msra.mxu0 0.0
      %5445 = vmatpush.msra.mxu0 0.0
      %5446 = vmatpush.msra.mxu0 0.0
      %5447 = vmatpush.msra.mxu0 0.0
      %5448 = vmatpush.msra.mxu0 0.0
      %5449 = vmatpush.msra.mxu0 0.0
      %5450 = vmatpush.msra.mxu0 0.0
      %5451 = vmatpush.msra.mxu0 0.0
      %5452 = vmatpush.msra.mxu0 0.0
      %5453 = vmatpush.msra.mxu0 0.0
      %5454 = vmatpush.msra.mxu0 0.0
      %5455 = vmatpush.msra.mxu0 %v5438
      %5456 = vmatmul.f32.gmra.mxu0 %v5342
      %v5457 = vpop.f32.mrf.mxu0
      %v5458 = vadd.f32 0.0, %v5457
      %5459 = vmatmul.f32.gmra.mxu0 %v5345
      %v5460 = vpop.f32.mrf.mxu0
      %v5461 = vadd.f32 0.0, %v5460
      %5462 = vmatmul.f32.gmra.mxu0 %v5348
      %v5463 = vpop.f32.mrf.mxu0
      %v5464 = vadd.f32 0.0, %v5463
      %5465 = vmatmul.f32.gmra.mxu0 %v5351
      %v5466 = vpop.f32.mrf.mxu0
      %v5467 = vadd.f32 0.0, %v5466
      %5468 = vmatmul.f32.gmra.mxu0 %v5354
      %v5469 = vpop.f32.mrf.mxu0
      %v5470 = vadd.f32 0.0, %v5469
      %5471 = vmatmul.f32.gmra.mxu0 %v5357
      %v5472 = vpop.f32.mrf.mxu0
      %v5473 = vadd.f32 0.0, %v5472
      %5474 = vmatmul.f32.gmra.mxu0 %v5360
      %v5475 = vpop.f32.mrf.mxu0
      %v5476 = vadd.f32 0.0, %v5475
      %5477 = vmatmul.f32.gmra.mxu0 %v5363
      %v5478 = vpop.f32.mrf.mxu0
      %v5479 = vadd.f32 0.0, %v5478
      %5480 = vmatmul.f32.gmra.mxu0 %v5366
      %v5481 = vpop.f32.mrf.mxu0
      %v5482 = vadd.f32 0.0, %v5481
      %5483 = vmatmul.f32.gmra.mxu0 %v5369
      %v5484 = vpop.f32.mrf.mxu0
      %v5485 = vadd.f32 0.0, %v5484
      %5486 = vmatmul.f32.gmra.mxu0 %v5372
      %v5487 = vpop.f32.mrf.mxu0
      %v5488 = vadd.f32 0.0, %v5487
      %5489 = vmatmul.f32.gmra.mxu0 %v5375
      %v5490 = vpop.f32.mrf.mxu0
      %v5491 = vadd.f32 0.0, %v5490
      %5492 = vmatmul.f32.gmra.mxu0 %v5378
      %v5493 = vpop.f32.mrf.mxu0
      %v5494 = vadd.f32 0.0, %v5493
      %5495 = vmatmul.f32.gmra.mxu0 %v5381
      %v5496 = vpop.f32.mrf.mxu0
      %v5497 = vadd.f32 0.0, %v5496
      %5498 = vmatmul.f32.gmra.mxu0 %v5384
      %v5499 = vpop.f32.mrf.mxu0
      %v5500 = vadd.f32 0.0, %v5499
      %5501 = vmatmul.f32.gmra.mxu0 %v5387
      %v5502 = vpop.f32.mrf.mxu0
      %v5503 = vadd.f32 0.0, %v5502
      %5504 = vmatmul.f32.gmra.mxu0 %v5390
      %v5505 = vpop.f32.mrf.mxu0
      %v5506 = vadd.f32 0.0, %v5505
      %5507 = vmatmul.f32.gmra.mxu0 %v5393
      %v5508 = vpop.f32.mrf.mxu0
      %v5509 = vadd.f32 0.0, %v5508
      %5510 = vmatmul.f32.gmra.mxu0 %v5396
      %v5511 = vpop.f32.mrf.mxu0
      %v5512 = vadd.f32 0.0, %v5511
      %5513 = vmatmul.f32.gmra.mxu0 %v5399
      %v5514 = vpop.f32.mrf.mxu0
      %v5515 = vadd.f32 0.0, %v5514
      %5516 = vmatmul.f32.gmra.mxu0 %v5402
      %v5517 = vpop.f32.mrf.mxu0
      %v5518 = vadd.f32 0.0, %v5517
      %5519 = vmatmul.f32.gmra.mxu0 %v5405
      %v5520 = vpop.f32.mrf.mxu0
      %v5521 = vadd.f32 0.0, %v5520
      %5522 = vmatmul.f32.gmra.mxu0 %v5408
      %v5523 = vpop.f32.mrf.mxu0
      %v5524 = vadd.f32 0.0, %v5523
      %5525 = vmatmul.f32.gmra.mxu0 %v5411
      %v5526 = vpop.f32.mrf.mxu0
      %v5527 = vadd.f32 0.0, %v5526
      %5528 = vmatmul.f32.gmra.mxu0 %v5414
      %v5529 = vpop.f32.mrf.mxu0
      %v5530 = vadd.f32 0.0, %v5529
      %5531 = vmatmul.f32.gmra.mxu0 %v5417
      %v5532 = vpop.f32.mrf.mxu0
      %v5533 = vadd.f32 0.0, %v5532
      %5534 = vmatmul.f32.gmra.mxu0 %v5420
      %v5535 = vpop.f32.mrf.mxu0
      %v5536 = vadd.f32 0.0, %v5535
      %5537 = vmatmul.f32.gmra.mxu0 %v5423
      %v5538 = vpop.f32.mrf.mxu0
      %v5539 = vadd.f32 0.0, %v5538
      %5540 = vmatmul.f32.gmra.mxu0 %v5426
      %v5541 = vpop.f32.mrf.mxu0
      %v5542 = vadd.f32 0.0, %v5541
      %5543 = vmatmul.f32.gmra.mxu0 %v5429
      %v5544 = vpop.f32.mrf.mxu0
      %v5545 = vadd.f32 0.0, %v5544
      %5546 = vmatmul.f32.gmra.mxu0 %v5432
      %v5547 = vpop.f32.mrf.mxu0
      %v5548 = vadd.f32 0.0, %v5547
      %5549 = vmatmul.f32.gmra.mxu0 %v5435
      %v5550 = vpop.f32.mrf.mxu0
      %v5551 = vadd.f32 0.0, %v5550
      %5552 = vdwg.mxu0
      %v5553 = vadd.f32 %v5275, %v5458
      %v5554 = vadd.f32 %v5276, %v5461
      %v5555 = vadd.f32 %v5277, %v5464
      %v5556 = vadd.f32 %v5278, %v5467
      %v5557 = vadd.f32 %v5279, %v5470
      %v5558 = vadd.f32 %v5280, %v5473
      %v5559 = vadd.f32 %v5281, %v5476
      %v5560 = vadd.f32 %v5282, %v5479
      %v5561 = vadd.f32 %v5283, %v5482
      %v5562 = vadd.f32 %v5284, %v5485
      %v5563 = vadd.f32 %v5285, %v5488
      %v5564 = vadd.f32 %v5286, %v5491
      %v5565 = vadd.f32 %v5287, %v5494
      %v5566 = vadd.f32 %v5288, %v5497
      %v5567 = vadd.f32 %v5289, %v5500
      %v5568 = vadd.f32 %v5290, %v5503
      %v5569 = vadd.f32 %v5291, %v5506
      %v5570 = vadd.f32 %v5292, %v5509
      %v5571 = vadd.f32 %v5293, %v5512
      %v5572 = vadd.f32 %v5294, %v5515
      %v5573 = vadd.f32 %v5295, %v5518
      %v5574 = vadd.f32 %v5296, %v5521
      %v5575 = vadd.f32 %v5297, %v5524
      %v5576 = vadd.f32 %v5298, %v5527
      %v5577 = vadd.f32 %v5299, %v5530
      %v5578 = vadd.f32 %v5300, %v5533
      %v5579 = vadd.f32 %v5301, %v5536
      %v5580 = vadd.f32 %v5302, %v5539
      %v5581 = vadd.f32 %v5303, %v5542
      %v5582 = vadd.f32 %v5304, %v5545
      %v5583 = vadd.f32 %v5305, %v5548
      %v5584 = vadd.f32 %v5306, %v5551
      %v5585 = vsel %vm204, %v5553, 0.0
      %v5586 = vsel %vm204, %v5554, 0.0
      %v5587 = vadd.f32 %v5585, %v5586
      %v5588 = vsel %vm204, %v5555, 0.0
      %v5589 = vadd.f32 %v5587, %v5588
      %v5590 = vsel %vm204, %v5556, 0.0
      %v5591 = vadd.f32 %v5589, %v5590
      %v5592 = vsel %vm204, %v5557, 0.0
      %v5593 = vadd.f32 %v5591, %v5592
      %v5594 = vsel %vm204, %v5558, 0.0
      %v5595 = vadd.f32 %v5593, %v5594
      %v5596 = vsel %vm204, %v5559, 0.0
      %v5597 = vadd.f32 %v5595, %v5596
      %v5598 = vsel %vm204, %v5560, 0.0
      %v5599 = vadd.f32 %v5597, %v5598
      %v5600 = vsel %vm204, %v5561, 0.0
      %v5601 = vadd.f32 %v5599, %v5600
      %v5602 = vsel %vm204, %v5562, 0.0
      %v5603 = vadd.f32 %v5601, %v5602
      %v5604 = vsel %vm204, %v5563, 0.0
      %v5605 = vadd.f32 %v5603, %v5604
      %v5606 = vsel %vm204, %v5564, 0.0
      %v5607 = vadd.f32 %v5605, %v5606
      %v5608 = vsel %vm204, %v5565, 0.0
      %v5609 = vadd.f32 %v5607, %v5608
      %v5610 = vsel %vm204, %v5566, 0.0
      %v5611 = vadd.f32 %v5609, %v5610
      %v5612 = vsel %vm204, %v5567, 0.0
      %v5613 = vadd.f32 %v5611, %v5612
      %v5614 = vsel %vm204, %v5568, 0.0
      %v5615 = vadd.f32 %v5613, %v5614
      %v5616 = vsel %vm204, %v5569, 0.0
      %v5617 = vadd.f32 %v5615, %v5616
      %v5618 = vsel %vm204, %v5570, 0.0
      %v5619 = vadd.f32 %v5617, %v5618
      %v5620 = vsel %vm204, %v5571, 0.0
      %v5621 = vadd.f32 %v5619, %v5620
      %v5622 = vsel %vm204, %v5572, 0.0
      %v5623 = vadd.f32 %v5621, %v5622
      %v5624 = vsel %vm204, %v5573, 0.0
      %v5625 = vadd.f32 %v5623, %v5624
      %v5626 = vsel %vm204, %v5574, 0.0
      %v5627 = vadd.f32 %v5625, %v5626
      %v5628 = vsel %vm204, %v5575, 0.0
      %v5629 = vadd.f32 %v5627, %v5628
      %v5630 = vsel %vm204, %v5576, 0.0
      %v5631 = vadd.f32 %v5629, %v5630
      %v5632 = vsel %vm204, %v5577, 0.0
      %v5633 = vadd.f32 %v5631, %v5632
      %v5634 = vsel %vm204, %v5578, 0.0
      %v5635 = vadd.f32 %v5633, %v5634
      %v5636 = vsel %vm204, %v5579, 0.0
      %v5637 = vadd.f32 %v5635, %v5636
      %v5638 = vsel %vm204, %v5580, 0.0
      %v5639 = vadd.f32 %v5637, %v5638
      %v5640 = vsel %vm204, %v5581, 0.0
      %v5641 = vadd.f32 %v5639, %v5640
      %v5642 = vsel %vm204, %v5582, 0.0
      %v5643 = vadd.f32 %v5641, %v5642
      %v5644 = vsel %vm204, %v5583, 0.0
      %v5645 = vadd.f32 %v5643, %v5644
      %v5646 = vsel %vm204, %v5584, 0.0
      %v5647 = vadd.f32 %v5645, %v5646
      %v5648 = vrot.slane %v5647, 4
      %v5649 = vadd.f32 %v5647, %v5648
      %v5650 = vrot.slane %v5649, 2
      %v5651 = vadd.f32 %v5649, %v5650
      %v5652 = vrot.slane %v5651, 1
      %v5653 = vadd.f32 %v5651, %v5652
      %v5654 = vmul.f32 %v5653, %v2829
      %v5655 = vsub.f32 %v5553, %v5654
      %v5656 = vsub.f32 %v5554, %v5654
      %v5657 = vsub.f32 %v5555, %v5654
      %v5658 = vsub.f32 %v5556, %v5654
      %v5659 = vsub.f32 %v5557, %v5654
      %v5660 = vsub.f32 %v5558, %v5654
      %v5661 = vsub.f32 %v5559, %v5654
      %v5662 = vsub.f32 %v5560, %v5654
      %v5663 = vsub.f32 %v5561, %v5654
      %v5664 = vsub.f32 %v5562, %v5654
      %v5665 = vsub.f32 %v5563, %v5654
      %v5666 = vsub.f32 %v5564, %v5654
      %v5667 = vsub.f32 %v5565, %v5654
      %v5668 = vsub.f32 %v5566, %v5654
      %v5669 = vsub.f32 %v5567, %v5654
      %v5670 = vsub.f32 %v5568, %v5654
      %v5671 = vsub.f32 %v5569, %v5654
      %v5672 = vsub.f32 %v5570, %v5654
      %v5673 = vsub.f32 %v5571, %v5654
      %v5674 = vsub.f32 %v5572, %v5654
      %v5675 = vsub.f32 %v5573, %v5654
      %v5676 = vsub.f32 %v5574, %v5654
      %v5677 = vsub.f32 %v5575, %v5654
      %v5678 = vsub.f32 %v5576, %v5654
      %v5679 = vsub.f32 %v5577, %v5654
      %v5680 = vsub.f32 %v5578, %v5654
      %v5681 = vsub.f32 %v5579, %v5654
      %v5682 = vsub.f32 %v5580, %v5654
      %v5683 = vsub.f32 %v5581, %v5654
      %v5684 = vsub.f32 %v5582, %v5654
      %v5685 = vsub.f32 %v5583, %v5654
      %v5686 = vsub.f32 %v5584, %v5654
      %v5687 = vmul.f32 %v5655, %v5655
      %v5688 = vmul.f32 %v5656, %v5656
      %v5689 = vmul.f32 %v5657, %v5657
      %v5690 = vmul.f32 %v5658, %v5658
      %v5691 = vmul.f32 %v5659, %v5659
      %v5692 = vmul.f32 %v5660, %v5660
      %v5693 = vmul.f32 %v5661, %v5661
      %v5694 = vmul.f32 %v5662, %v5662
      %v5695 = vmul.f32 %v5663, %v5663
      %v5696 = vmul.f32 %v5664, %v5664
      %v5697 = vmul.f32 %v5665, %v5665
      %v5698 = vmul.f32 %v5666, %v5666
      %v5699 = vmul.f32 %v5667, %v5667
      %v5700 = vmul.f32 %v5668, %v5668
      %v5701 = vmul.f32 %v5669, %v5669
      %v5702 = vmul.f32 %v5670, %v5670
      %v5703 = vmul.f32 %v5671, %v5671
      %v5704 = vmul.f32 %v5672, %v5672
      %v5705 = vmul.f32 %v5673, %v5673
      %v5706 = vmul.f32 %v5674, %v5674
      %v5707 = vmul.f32 %v5675, %v5675
      %v5708 = vmul.f32 %v5676, %v5676
      %v5709 = vmul.f32 %v5677, %v5677
      %v5710 = vmul.f32 %v5678, %v5678
      %v5711 = vmul.f32 %v5679, %v5679
      %v5712 = vmul.f32 %v5680, %v5680
      %v5713 = vmul.f32 %v5681, %v5681
      %v5714 = vmul.f32 %v5682, %v5682
      %v5715 = vmul.f32 %v5683, %v5683
      %v5716 = vmul.f32 %v5684, %v5684
      %v5717 = vmul.f32 %v5685, %v5685
      %v5718 = vmul.f32 %v5686, %v5686
      %v5719 = vsel %vm204, %v5687, 0.0
      %v5720 = vsel %vm204, %v5688, 0.0
      %v5721 = vadd.f32 %v5719, %v5720
      %v5722 = vsel %vm204, %v5689, 0.0
      %v5723 = vadd.f32 %v5721, %v5722
      %v5724 = vsel %vm204, %v5690, 0.0
      %v5725 = vadd.f32 %v5723, %v5724
      %v5726 = vsel %vm204, %v5691, 0.0
      %v5727 = vadd.f32 %v5725, %v5726
      %v5728 = vsel %vm204, %v5692, 0.0
      %v5729 = vadd.f32 %v5727, %v5728
      %v5730 = vsel %vm204, %v5693, 0.0
      %v5731 = vadd.f32 %v5729, %v5730
      %v5732 = vsel %vm204, %v5694, 0.0
      %v5733 = vadd.f32 %v5731, %v5732
      %v5734 = vsel %vm204, %v5695, 0.0
      %v5735 = vadd.f32 %v5733, %v5734
      %v5736 = vsel %vm204, %v5696, 0.0
      %v5737 = vadd.f32 %v5735, %v5736
      %v5738 = vsel %vm204, %v5697, 0.0
      %v5739 = vadd.f32 %v5737, %v5738
      %v5740 = vsel %vm204, %v5698, 0.0
      %v5741 = vadd.f32 %v5739, %v5740
      %v5742 = vsel %vm204, %v5699, 0.0
      %v5743 = vadd.f32 %v5741, %v5742
      %v5744 = vsel %vm204, %v5700, 0.0
      %v5745 = vadd.f32 %v5743, %v5744
      %v5746 = vsel %vm204, %v5701, 0.0
      %v5747 = vadd.f32 %v5745, %v5746
      %v5748 = vsel %vm204, %v5702, 0.0
      %v5749 = vadd.f32 %v5747, %v5748
      %v5750 = vsel %vm204, %v5703, 0.0
      %v5751 = vadd.f32 %v5749, %v5750
      %v5752 = vsel %vm204, %v5704, 0.0
      %v5753 = vadd.f32 %v5751, %v5752
      %v5754 = vsel %vm204, %v5705, 0.0
      %v5755 = vadd.f32 %v5753, %v5754
      %v5756 = vsel %vm204, %v5706, 0.0
      %v5757 = vadd.f32 %v5755, %v5756
      %v5758 = vsel %vm204, %v5707, 0.0
      %v5759 = vadd.f32 %v5757, %v5758
      %v5760 = vsel %vm204, %v5708, 0.0
      %v5761 = vadd.f32 %v5759, %v5760
      %v5762 = vsel %vm204, %v5709, 0.0
      %v5763 = vadd.f32 %v5761, %v5762
      %v5764 = vsel %vm204, %v5710, 0.0
      %v5765 = vadd.f32 %v5763, %v5764
      %v5766 = vsel %vm204, %v5711, 0.0
      %v5767 = vadd.f32 %v5765, %v5766
      %v5768 = vsel %vm204, %v5712, 0.0
      %v5769 = vadd.f32 %v5767, %v5768
      %v5770 = vsel %vm204, %v5713, 0.0
      %v5771 = vadd.f32 %v5769, %v5770
      %v5772 = vsel %vm204, %v5714, 0.0
      %v5773 = vadd.f32 %v5771, %v5772
      %v5774 = vsel %vm204, %v5715, 0.0
      %v5775 = vadd.f32 %v5773, %v5774
      %v5776 = vsel %vm204, %v5716, 0.0
      %v5777 = vadd.f32 %v5775, %v5776
      %v5778 = vsel %vm204, %v5717, 0.0
      %v5779 = vadd.f32 %v5777, %v5778
      %v5780 = vsel %vm204, %v5718, 0.0
      %v5781 = vadd.f32 %v5779, %v5780
      %v5782 = vrot.slane %v5781, 4
      %v5783 = vadd.f32 %v5781, %v5782
      %v5784 = vrot.slane %v5783, 2
      %v5785 = vadd.f32 %v5783, %v5784
      %v5786 = vrot.slane %v5785, 1
      %v5787 = vadd.f32 %v5785, %v5786
      %v5788 = vmul.f32 %v5787, %v2829
      %v5789 = vadd.f32 %v5788, 1e-05
      %v5790 = vrsqrt.pop %v5789
      %v5791 = vmul.f32 %v5790, %v5789
      %v5792 = vmul.f32 %v5791, %v5790
      %v5793 = vmul.f32 0.5, %v5792
      %v5794 = vsub.f32 1.5, %v5793
      %v5795 = vmul.f32 %v5790, %v5794
      %vm5796 = vweird.f32 %v5789
      %vm5797 = vweird.f32 %v5790
      %vm5798 = vmor %vm5796, %vm5797
      %v5799 = vsel %vm5798, %v5790, %v5795
      %v5800 = vmul.f32 %v5655, %v5799
      %v5801 = vmul.f32 %v5656, %v5799
      %v5802 = vmul.f32 %v5657, %v5799
      %v5803 = vmul.f32 %v5658, %v5799
      %v5804 = vmul.f32 %v5659, %v5799
      %v5805 = vmul.f32 %v5660, %v5799
      %v5806 = vmul.f32 %v5661, %v5799
      %v5807 = vmul.f32 %v5662, %v5799
      %v5808 = vmul.f32 %v5663, %v5799
      %v5809 = vmul.f32 %v5664, %v5799
      %v5810 = vmul.f32 %v5665, %v5799
      %v5811 = vmul.f32 %v5666, %v5799
      %v5812 = vmul.f32 %v5667, %v5799
      %v5813 = vmul.f32 %v5668, %v5799
      %v5814 = vmul.f32 %v5669, %v5799
      %v5815 = vmul.f32 %v5670, %v5799
      %v5816 = vmul.f32 %v5671, %v5799
      %v5817 = vmul.f32 %v5672, %v5799
      %v5818 = vmul.f32 %v5673, %v5799
      %v5819 = vmul.f32 %v5674, %v5799
      %v5820 = vmul.f32 %v5675, %v5799
      %v5821 = vmul.f32 %v5676, %v5799
      %v5822 = vmul.f32 %v5677, %v5799
      %v5823 = vmul.f32 %v5678, %v5799
      %v5824 = vmul.f32 %v5679, %v5799
      %v5825 = vmul.f32 %v5680, %v5799
      %v5826 = vmul.f32 %v5681, %v5799
      %v5827 = vmul.f32 %v5682, %v5799
      %v5828 = vmul.f32 %v5683, %v5799
      %v5829 = vmul.f32 %v5684, %v5799
      %v5830 = vmul.f32 %v5685, %v5799
      %v5831 = vmul.f32 %v5686, %v5799
      %v5832 = vadd.f32 %v171, %v5800
      %v5833 = vadd.f32 %v172, %v5801
      %v5834 = vadd.f32 %v173, %v5802
      %v5835 = vadd.f32 %v174, %v5803
      %v5836 = vadd.f32 %v175, %v5804
      %v5837 = vadd.f32 %v176, %v5805
      %v5838 = vadd.f32 %v177, %v5806
      %v5839 = vadd.f32 %v178, %v5807
      %v5840 = vadd.f32 %v179, %v5808
      %v5841 = vadd.f32 %v180, %v5809
      %v5842 = vadd.f32 %v181, %v5810
      %v5843 = vadd.f32 %v182, %v5811
      %v5844 = vadd.f32 %v183, %v5812
      %v5845 = vadd.f32 %v184, %v5813
      %v5846 = vadd.f32 %v185, %v5814
      %v5847 = vadd.f32 %v186, %v5815
      %v5848 = vadd.f32 %v187, %v5816
      %v5849 = vadd.f32 %v188, %v5817
      %v5850 = vadd.f32 %v189, %v5818
      %v5851 = vadd.f32 %v190, %v5819
      %v5852 = vadd.f32 %v191, %v5820
      %v5853 = vadd.f32 %v192, %v5821
      %v5854 = vadd.f32 %v193, %v5822
      %v5855 = vadd.f32 %v194, %v5823
      %v5856 = vadd.f32 %v195, %v5824
      %v5857 = vadd.f32 %v196, %v5825
      %v5858 = vadd.f32 %v197, %v5826
      %v5859 = vadd.f32 %v198, %v5827
      %v5860 = vadd.f32 %v199, %v5828
      %v5861 = vadd.f32 %v200, %v5829
      %v5862 = vadd.f32 %v201, %v5830
      %v5863 = vadd.f32 %v202, %v5831
      %5864 = vst.msk [vmem:[%s170] sm:$0xff] %vm204, %v5832
      %5865 = vst.msk [vmem:[%s170 + $0x8] sm:$0xff] %vm204, %v5833
      %5866 = vst.msk [vmem:[%s170 + $0x10] sm:$0xff] %vm204, %v5834
      %5867 = vst.msk [vmem:[%s170 + $0x18] sm:$0xff] %vm204, %v5835
      %5868 = vst.msk [vmem:[%s170 + $0x20] sm:$0xff] %vm204, %v5836
      %5869 = vst.msk [vmem:[%s170 + $0x28] sm:$0xff] %vm204, %v5837
      %5870 = vst.msk [vmem:[%s170 + $0x30] sm:$0xff] %vm204, %v5838
      %5871 = vst.msk [vmem:[%s170 + $0x38] sm:$0xff] %vm204, %v5839
      %5872 = vst.msk [vmem:[%s170 + $0x40] sm:$0xff] %vm204, %v5840
      %5873 = vst.msk [vmem:[%s170 + $0x48] sm:$0xff] %vm204, %v5841
      %5874 = vst.msk [vmem:[%s170 + $0x50] sm:$0xff] %vm204, %v5842
      %5875 = vst.msk [vmem:[%s170 + $0x58] sm:$0xff] %vm204, %v5843
      %5876 = vst.msk [vmem:[%s170 + $0x60] sm:$0xff] %vm204, %v5844
      %5877 = vst.msk [vmem:[%s170 + $0x68] sm:$0xff] %vm204, %v5845
      %5878 = vst.msk [vmem:[%s170 + $0x70] sm:$0xff] %vm204, %v5846
      %5879 = vst.msk [vmem:[%s170 + $0x78] sm:$0xff] %vm204, %v5847
      %5880 = vst.msk [vmem:[%s170 + $0x80] sm:$0xff] %vm204, %v5848
      %5881 = vst.msk [vmem:[%s170 + $0x88] sm:$0xff] %vm204, %v5849
      %5882 = vst.msk [vmem:[%s170 + $0x90] sm:$0xff] %vm204, %v5850
      %5883 = vst.msk [vmem:[%s170 + $0x98] sm:$0xff] %vm204, %v5851
      %5884 = vst.msk [vmem:[%s170 + $0xa0] sm:$0xff] %vm204, %v5852
      %5885 = vst.msk [vmem:[%s170 + $0xa8] sm:$0xff] %vm204, %v5853
      %5886 = vst.msk [vmem:[%s170 + $0xb0] sm:$0xff] %vm204, %v5854
      %5887 = vst.msk [vmem:[%s170 + $0xb8] sm:$0xff] %vm204, %v5855
      %5888 = vst.msk [vmem:[%s170 + $0xc0] sm:$0xff] %vm204, %v5856
      %5889 = vst.msk [vmem:[%s170 + $0xc8] sm:$0xff] %vm204, %v5857
      %5890 = vst.msk [vmem:[%s170 + $0xd0] sm:$0xff] %vm204, %v5858
      %5891 = vst.msk [vmem:[%s170 + $0xd8] sm:$0xff] %vm204, %v5859
      %5892 = vst.msk [vmem:[%s170 + $0xe0] sm:$0xff] %vm204, %v5860
      %5893 = vst.msk [vmem:[%s170 + $0xe8] sm:$0xff] %vm204, %v5861
      %5894 = vst.msk [vmem:[%s170 + $0xf0] sm:$0xff] %vm204, %v5862
      %5895 = vst.msk [vmem:[%s170 + $0xf8] sm:$0xff] %vm204, %v5863
      %p5896 = scmp.lt.s32.totalorder %s14, 1
      %s5897 = scalar_select %p5896, %s14, 1
      %s5898 = smul.addr %s5897, 32
      %s5899 = smul.addr %s5898, 8
      %s5900 = scalar_lea.vmem %s3, %s5899
      // Predicated region
      $region33: #{tpu_custom_call.1} parent=31 // pred_check
        %p5901 = pneg %p100
      $region34: #{tpu_custom_call.1} parent=31 // pred_check_branch
        %5903 = sbr.rel (%p5901) target = $region36
      $region35: #{tpu_custom_call.1} parent=31 // pred_region
        _
      $region36: #{tpu_custom_call.1} parent=31 // pred_fallthru
        _
    $region32: #{tpu_custom_call.1} parent=5 // pred_fallthru
      _
    %p5904 = scmp.le.s32.totalorder 2, %s9
    // Predicated region
    $region37: #{tpu_custom_call.1} parent=5 // pred_check
      %p5905 = pneg %p5904
    $region38: #{tpu_custom_call.1} parent=5 // pred_check_branch
      %5907 = sbr.rel (%p5905) target = $region40
    $region39: #{tpu_custom_call.1} parent=5 // pred_region
      %s5908 = ssub.s32 %s9, 2
      // Predicated region
      $region41: #{tpu_custom_call.1} parent=39 // pred_check
        %p5909 = pneg %p106
      $region42: #{tpu_custom_call.1} parent=39 // pred_check_branch
        %5911 = sbr.rel (%p5909) target = $region44
      $region43: #{tpu_custom_call.1} parent=39 // pred_region
        %p5912 = scmp.lt.s32.totalorder %s15, 1
        %s5913 = scalar_select %p5912, %s15, 1
        %s5914 = smul.addr %s5913, 32
        %s5915 = smul.addr %s5914, 8
        %s5916 = scalar_lea.vmem %s3, %s5915
      $region44: #{tpu_custom_call.1} parent=39 // pred_fallthru
        _
    $region40: #{tpu_custom_call.1} parent=5 // pred_fallthru
      _
  $region6: #{tpu_custom_call.1} parent=0 // loop_footer
    %s13 = sadd.s32 1, %s9
  $region7: #{tpu_custom_call.1} parent=0 // loop_footer_branch
    %8 = sbr.rel target = $region3
  $region8: #{tpu_custom_call.1} parent=0 // loop_exit
    _

</llo_original>
